<compile_context>
chip_gen: v6e
topology: v6e:2x2x1
jax: 0.10.0
libtpu: 0.0.40
codegen_flags: <defaults>
</compile_context>

<pallas_src>
import math

import jax
import jax.numpy as jnp
from jax.experimental import pallas as pl
from jax.experimental.pallas import tpu as pltpu


def _round_up(x, m):
    return ((x + m - 1) // m) * m


def _num_tensorcores():
    """Best-effort TensorCores-per-chip (2 on v7x, 1 on v5e/v6e)."""
    try:
        kind = (getattr(jax.devices()[0], "device_kind", "") or "").lower()
        if "v7" in kind or "7x" in kind:
            return 2
    except Exception:
        pass
    return 1


def _vmem_estimate_bytes(t_chunk, b_blk, d_pad, h_pad, c_pad, weight_bufs):
    """Rough per-core VMEM footprint of one kernel instance."""
    h3 = 3 * h_pad
    x_blk = 2 * t_chunk * b_blk * d_pad * 2              # bf16 x, double buffered
    xp = t_chunk * b_blk * h3 * 4                         # f32 xp scratch
    h_sc = b_blk * h_pad * 4                              # f32 hidden-state carry
    w = (d_pad * h3 + h_pad * h3 + h_pad * c_pad) * 2 * weight_bufs   # bf16
    bias = (h3 + h_pad + c_pad) * 4 * weight_bufs
    outs = 2 * (2 * b_blk * c_pad + b_blk * h_pad) * 4    # sf/fc/feat, dbl-buf
    return x_blk + xp + h_sc + w + bias + outs


def make_gru_kernel(T_total, T_chunk, B_blk, H_pad, num_classes, unroll):
    """Kernel for one (batch block, time chunk) grid point.

    Ref layout (all padded, all VMEM):
      x_ref    : (T_chunk, B_blk, D_pad)   bf16 time-major input chunk
      w_i_ref  : (D_pad, 3*H_pad)  bf16    fused input-path weights  [r | z | n]
      w_h_ref  : (H_pad, 3*H_pad)  bf16    fused hidden-path weights [r | z | n]
      b_i_ref  : (1, 3*H_pad)      f32     fused input-path biases (b_r|b_z|b_in)
      b_hn_ref : (1, H_pad)        f32     hidden-path bias of the n gate
      w_fc_ref : (H_pad, C_pad) bf16, b_fc_ref : (1, C_pad) f32
      outputs  : sf (B_blk, C_pad), fc (B_blk, C_pad), feat (B_blk, H_pad) f32
      scratch  : xp_scratch (T_chunk, B_blk, 3*H_pad) f32, h_scratch (B_blk, H_pad) f32
    """
    H3 = 3 * H_pad
    need_time_mask = (T_total % T_chunk) != 0

    def kernel(x_ref, w_i_ref, w_h_ref, b_i_ref, b_hn_ref, w_fc_ref, b_fc_ref,
               sf_ref, fc_ref, feat_ref, xp_scratch, h_scratch):
        t_blk = pl.program_id(1)

        # Reset the carried hidden state at the first time chunk of each batch
        # block (h_scratch persists across the whole grid).
        @pl.when(t_blk == 0)
        def _():
            h_scratch[...] = jnp.zeros_like(h_scratch)

        D_pad = x_ref.shape[2]

        # ---- Phase 1: input projection for this time chunk (one bf16 MXU
        # matmul).  Go through an f32 view for the (T_chunk, B_blk, D) ->
        # (T_chunk*B_blk, D) collapse so the reshape stays on native
        # (8,128)-tiled layout, then cast back to bf16 for the MXU.
        x3 = x_ref[...].astype(jnp.float32)
        x2d = x3.reshape(T_chunk * B_blk, D_pad).astype(w_i_ref.dtype)
        xp = jnp.dot(x2d, w_i_ref[...],
                     preferred_element_type=jnp.float32) + b_i_ref[...]
        xp_scratch[...] = xp.reshape(T_chunk, B_blk, H3)

        # ---- Hoisted loop invariants (no per-step reload / re-broadcast).
        w_h = w_h_ref[...]                                   # bf16, resident
        b_hn = jnp.broadcast_to(b_hn_ref[...], (B_blk, H_pad))

        def _sigmoid(v):
            # One EUP push (tanh) instead of exp + divide on the serial path.
            return 0.5 * (jnp.tanh(0.5 * v) + 1.0)

        # ---- Phase 2: recurrence.  Only h @ W_h_fused on the critical path.
        def step(t, h):
            # NOTE: at large B_blk/H_pad check the bundle dump for spills of
            # the live set (h + 3 hp slabs + 3 xp slabs + gates); sub-tile
            # B_blk inside the step if the 64-vreg file is exceeded.
            xp_t = xp_scratch[t]                              # (B_blk, 3H) f32
            hp = jnp.dot(h.astype(w_h.dtype), w_h,
                         preferred_element_type=jnp.float32)
            r = _sigmoid(xp_t[:, :H_pad] + hp[:, :H_pad])
            z = _sigmoid(xp_t[:, H_pad:2 * H_pad] + hp[:, H_pad:2 * H_pad])
            n = jnp.tanh(xp_t[:, 2 * H_pad:]
                         + r * (hp[:, 2 * H_pad:] + b_hn))
            h_new = (1.0 - z) * n + z * h
            if need_time_mask:
                # Padded tail timesteps must not update h.
                t_global = t_blk * T_chunk + t
                h_new = jnp.where(t_global < T_total, h_new, h)
            return h_new

        h_final = jax.lax.fori_loop(0, T_chunk, step, h_scratch[...],
                                    unroll=unroll)
        h_scratch[...] = h_final

        # ---- Phase 3: classifier head + softmax, only on the last time chunk.
        @pl.when(t_blk == pl.num_programs(1) - 1)
        def _():
            feat_ref[...] = h_final.astype(feat_ref.dtype)
            logits = jnp.dot(h_final.astype(w_fc_ref.dtype), w_fc_ref[...],
                             preferred_element_type=jnp.float32) + b_fc_ref[...]
            fc_ref[...] = logits.astype(fc_ref.dtype)
            # Mask padded class lanes so they do not pollute the softmax.
            lane = jax.lax.broadcasted_iota(jnp.int32, logits.shape, 1)
            masked = jnp.where(lane < num_classes, logits,
                               jnp.full_like(logits, -1e30))
            m = jnp.max(masked, axis=-1, keepdims=True)
            e = jnp.exp(masked - m)
            denom = jnp.sum(e, axis=-1, keepdims=True)
            sf_ref[...] = (e * pl.reciprocal(denom, approx=True)
                           ).astype(sf_ref.dtype)

    return kernel


def classifier_w_gru_forward(x, params, *, b_block=None, time_chunk=None):
    """x: (B, T, D) float32. Returns (sf, fc, feat) with original shapes."""
    B, T, D = x.shape
    H = params["w_hr"].shape[0]
    C = params["w_fc"].shape[1]

    H_pad = _round_up(H, 128)
    D_pad = _round_up(D, 128)
    C_pad = _round_up(C, 128)
    H3 = 3 * H_pad
    B_pad = _round_up(B, 8)

    if time_chunk is None:
        time_chunk = min(T, 32)
    T_pad = _round_up(T, time_chunk)
    n_t = T_pad // time_chunk

    # Generation-aware batch blocking: split across the 2 TensorCores on v7x,
    # one fat block (bounded by a VMEM budget) on single-TC chips.
    if b_block is None:
        n_tc = _num_tensorcores()
        if n_tc > 1 and B_pad > 8:
            b_block = _round_up(-(-B_pad // n_tc), 8)
        else:
            b_block = B_pad
        budget = 48 * 1024 * 1024
        while b_block > 8 and _vmem_estimate_bytes(
                time_chunk, b_block, D_pad, H_pad, C_pad, 2) > budget:
            b_block = _round_up(b_block // 2, 8)
    B_pad = _round_up(B_pad, b_block)
    n_b = B_pad // b_block

    f32 = jnp.float32
    bf16 = jnp.bfloat16

    def pad2(a, rows, cols, dtype):
        a = a.astype(f32)
        a = jnp.pad(a, ((0, rows - a.shape[0]), (0, cols - a.shape[1])))
        return a.astype(dtype)

    # Fused, gate-padded weights (bf16 for the MXU): each gate gets its own
    # H_pad-wide lane slab so zero padding never mixes gates.
    w_i = jnp.concatenate([pad2(params["w_ir"], D_pad, H_pad, bf16),
                           pad2(params["w_iz"], D_pad, H_pad, bf16),
                           pad2(params["w_in"], D_pad, H_pad, bf16)], axis=1)
    w_h = jnp.concatenate([pad2(params["w_hr"], H_pad, H_pad, bf16),
                           pad2(params["w_hz"], H_pad, H_pad, bf16),
                           pad2(params["w_hn"], H_pad, H_pad, bf16)], axis=1)
    b_i = jnp.concatenate([pad2(params["b_r"], 1, H_pad, f32),
                           pad2(params["b_z"], 1, H_pad, f32),
                           pad2(params["b_in"], 1, H_pad, f32)], axis=1)
    b_hn = pad2(params["b_hn"], 1, H_pad, f32)
    w_fc = pad2(params["w_fc"], H_pad, C_pad, bf16)
    b_fc = pad2(params["b_fc"], 1, C_pad, f32)

    # Time-major, padded, bf16 input: (T_pad, B_pad, D_pad).
    # TODO(synk): producing x time-major upstream would save the extra
    # 2*T*B*D HBM read+write of this transpose (matters most on v5e).
    x_tm = jnp.transpose(x.astype(f32), (1, 0, 2))
    x_tm = jnp.pad(x_tm, ((0, T_pad - T), (0, B_pad - B), (0, D_pad - D)))
    x_tm = x_tm.astype(bf16)

    unroll = max(1, min(time_chunk, 8))
    kernel = make_gru_kernel(T, time_chunk, b_block, H_pad, C, unroll)

    est = _vmem_estimate_bytes(time_chunk, b_block, D_pad, H_pad, C_pad, 2)
    vmem_limit = int(max(32 * 2**20, min(int(est * 1.5) + (2 << 20), 64 * 2**20)))

    cost = pl.CostEstimate(
        flops=int(2 * B_pad * T_pad * D_pad * H3
                  + 2 * B_pad * T_pad * H_pad * H3
                  + 2 * B_pad * H_pad * C_pad),
        transcendentals=int(B_pad * T_pad * H3 + B_pad * C_pad),
        bytes_accessed=int(x_tm.size * 2
                           + (w_i.size + w_h.size + w_fc.size) * 2
                           + (b_i.size + b_hn.size + b_fc.size) * 4
                           + (2 * B_pad * C_pad + B_pad * H_pad) * 4),
    )

    out_shape = (
        jax.ShapeDtypeStruct((B_pad, C_pad), f32),   # sf
        jax.ShapeDtypeStruct((B_pad, C_pad), f32),   # fc (logits)
        jax.ShapeDtypeStruct((B_pad, H_pad), f32),   # feat
    )

    def _build(single_buffer_weights):
        wkw = ({"pipeline_mode": pl.Buffered(1)}
               if single_buffer_weights else {})
        grid_spec = pltpu.PrefetchScalarGridSpec(
            num_scalar_prefetch=0,
            grid=(n_b, n_t),
            in_specs=[
                # x: streamed per (batch block, time chunk).
                pl.BlockSpec((time_chunk, b_block, D_pad),
                             lambda b, t: (t, b, 0)),
                # Weights/biases: constant index maps -> VMEM-resident;
                # single-buffered when supported (no prefetch buffer needed).
                pl.BlockSpec((D_pad, H3), lambda b, t: (0, 0), **wkw),
                pl.BlockSpec((H_pad, H3), lambda b, t: (0, 0), **wkw),
                pl.BlockSpec((1, H3), lambda b, t: (0, 0), **wkw),
                pl.BlockSpec((1, H_pad), lambda b, t: (0, 0), **wkw),
                pl.BlockSpec((H_pad, C_pad), lambda b, t: (0, 0), **wkw),
                pl.BlockSpec((1, C_pad), lambda b, t: (0, 0), **wkw),
            ],
            out_specs=[
                # Constant across the time axis -> resident, written at last t.
                pl.BlockSpec((b_block, C_pad), lambda b, t: (b, 0)),
                pl.BlockSpec((b_block, C_pad), lambda b, t: (b, 0)),
                pl.BlockSpec((b_block, H_pad), lambda b, t: (b, 0)),
            ],
            scratch_shapes=[
                pltpu.VMEM((time_chunk, b_block, H3), f32),   # xp chunk
                pltpu.VMEM((b_block, H_pad), f32),            # carried h
            ],
        )
        return pl.pallas_call(
            kernel,
            out_shape=out_shape,
            grid_spec=grid_spec,
            compiler_params=pltpu.CompilerParams(
                dimension_semantics=("parallel", "arbitrary"),
                vmem_limit_bytes=vmem_limit),
            cost_estimate=cost,
        )

    args = (x_tm, w_i, w_h, b_i, b_hn, w_fc, b_fc)
    try:
        sf_p, fc_p, feat_p = _build(True)(*args)
    except Exception:
        # pipeline_mode=pl.Buffered(1) not supported on this JAX version:
        # fall back to default double-buffered weight blocks.
        sf_p, fc_p, feat_p = _build(False)(*args)

    return sf_p[:B, :C], fc_p[:B, :C], feat_p[:B, :H]


def make_params(key, input_dim, hidden, num_classes):
    """Deterministic synthetic parameters (shapes follow a 1-layer PyTorch GRU
    with batch_first + a Linear classifier head)."""
    ks = jax.random.split(key, 12)
    std_i = 1.0 / math.sqrt(hidden)
    p = {
        "w_ir": jax.random.normal(ks[0], (input_dim, hidden), jnp.float32) * std_i,
        "w_iz": jax.random.normal(ks[1], (input_dim, hidden), jnp.float32) * std_i,
        "w_in": jax.random.normal(ks[2], (input_dim, hidden), jnp.float32) * std_i,
        "w_hr": jax.random.normal(ks[3], (hidden, hidden), jnp.float32) * std_i,
        "w_hz": jax.random.normal(ks[4], (hidden, hidden), jnp.float32) * std_i,
        "w_hn": jax.random.normal(ks[5], (hidden, hidden), jnp.float32) * std_i,
        # combined (b_ih + b_hh) biases for r/z; n keeps them separate because
        # r gates only the hidden-path bias.  Real PyTorch GRU checkpoints ship
        # b_ih/b_hh separately and must be summed for r/z when loading.
        "b_r": jax.random.normal(ks[6], (1, hidden), jnp.float32) * std_i,
        "b_z": jax.random.normal(ks[7], (1, hidden), jnp.float32) * std_i,
        "b_in": jax.random.normal(ks[8], (1, hidden), jnp.float32) * std_i,
        "b_hn": jax.random.normal(ks[9], (1, hidden), jnp.float32) * std_i,
        "w_fc": jax.random.normal(ks[10], (hidden, num_classes), jnp.float32) * std_i,
        "b_fc": jax.random.normal(ks[11], (1, num_classes), jnp.float32) * std_i,
    }
    return p


def reference_forward(x, p):
    """Pure-JAX f32 reference (lax.scan GRU) for validation."""
    B, T, D = x.shape
    H = p["w_hr"].shape[0]

    def step(h, x_t):
        r = jax.nn.sigmoid(x_t @ p["w_ir"] + h @ p["w_hr"] + p["b_r"])
        z = jax.nn.sigmoid(x_t @ p["w_iz"] + h @ p["w_hz"] + p["b_z"])
        n = jnp.tanh(x_t @ p["w_in"] + p["b_in"] + r * (h @ p["w_hn"] + p["b_hn"]))
        h_new = (1.0 - z) * n + z * h
        return h_new, None

    h0 = jnp.zeros((B, H), jnp.float32)
    feat, _ = jax.lax.scan(step, h0, jnp.transpose(x, (1, 0, 2)))
    fc = feat @ p["w_fc"] + p["b_fc"]
    sf = jax.nn.softmax(fc, axis=-1)
    return sf, fc, feat


if __name__ == "__main__":
    # T=9 with time_chunk=4 exercises the multi-chunk hidden-state carry and
    # the padded-tail time mask.
    B, T, D, H, C = 2, 9, 16, 32, 4
    key = jax.random.PRNGKey(0)
    kx, kp = jax.random.split(key)
    x = jax.random.normal(kx, (B, T, D), jnp.float32)
    params = make_params(kp, D, H, C)

    sf, fc, feat = classifier_w_gru_forward(x, params, time_chunk=4)
    jax.block_until_ready((sf, fc, feat))

    sf_r, fc_r, feat_r = reference_forward(x, params)
    # bf16 MXU operands -> loosened tolerances vs. the pure-f32 reference.
    assert jnp.allclose(feat, feat_r, atol=5e-2, rtol=5e-2), "feat mismatch"
    assert jnp.allclose(fc, fc_r, atol=5e-2, rtol=5e-2), "fc mismatch"
    assert jnp.allclose(sf, sf_r, atol=5e-2, rtol=5e-2), "sf mismatch"

    print("KERNEL_OK")
</pallas_src>

<mosaic_0001>
module attributes {stable_mosaic.version = 11 : i64} {
  func.func @kernel(%arg0: i32, %arg1: i32, %arg2: memref<4x8x128xbf16, #tpu.memory_space<vmem>>, %arg3: memref<128x384xbf16, #tpu.memory_space<vmem>>, %arg4: memref<128x384xbf16, #tpu.memory_space<vmem>>, %arg5: memref<1x384xf32, #tpu.memory_space<vmem>>, %arg6: memref<1x128xf32, #tpu.memory_space<vmem>>, %arg7: memref<128x128xbf16, #tpu.memory_space<vmem>>, %arg8: memref<1x128xf32, #tpu.memory_space<vmem>>, %arg9: memref<8x128xf32, #tpu.memory_space<vmem>>, %arg10: memref<8x128xf32, #tpu.memory_space<vmem>>, %arg11: memref<8x128xf32, #tpu.memory_space<vmem>>, %arg12: memref<4x8x384xf32, #tpu.memory_space<vmem>>, %arg13: memref<8x128xf32, #tpu.memory_space<vmem>>) attributes {dimension_semantics = [#tpu.dimension_semantics<parallel>, #tpu.dimension_semantics<arbitrary>], iteration_bounds = array<i64: 1, 3>, scalar_prefetch = 0 : i64, scratch_operands = 2 : i64, tpu.core_type = #tpu.core_type<tc>, window_params = [{transform_indices = @transform_0, window_bounds = array<i64: 4, 8, 128>}, {pipeline_mode = #tpu.pipeline_mode<synchronous>, transform_indices = @transform_1, window_bounds = array<i64: 128, 384>}, {pipeline_mode = #tpu.pipeline_mode<synchronous>, transform_indices = @transform_2, window_bounds = array<i64: 128, 384>}, {pipeline_mode = #tpu.pipeline_mode<synchronous>, transform_indices = @transform_3, window_bounds = array<i64: 1, 384>}, {pipeline_mode = #tpu.pipeline_mode<synchronous>, transform_indices = @transform_4, window_bounds = array<i64: 1, 128>}, {pipeline_mode = #tpu.pipeline_mode<synchronous>, transform_indices = @transform_5, window_bounds = array<i64: 128, 128>}, {pipeline_mode = #tpu.pipeline_mode<synchronous>, transform_indices = @transform_6, window_bounds = array<i64: 1, 128>}, {transform_indices = @transform_7, window_bounds = array<i64: 8, 128>}, {transform_indices = @transform_8, window_bounds = array<i64: 8, 128>}, {transform_indices = @transform_9, window_bounds = array<i64: 8, 128>}]} {
    %c0_i32 = arith.constant 0 : i32
    %0 = arith.cmpi eq, %arg1, %c0_i32 : i32
    %1 = arith.extui %0 : i1 to i32
    %c0_i32_0 = arith.constant 0 : i32
    %2 = arith.cmpi ne, %1, %c0_i32_0 : i32
    scf.if %2 {
      %cst_68 = arith.constant 0.000000e+00 : f32
      %183 = vector.broadcast %cst_68 : f32 to vector<8x128xf32>
      %c0_69 = arith.constant 0 : index
      %c0_70 = arith.constant 0 : index
      %184 = vector.load %arg13[%c0_69, %c0_70] : memref<8x128xf32, #tpu.memory_space<vmem>>, vector<8x128xf32>
      tpu.vector_store %arg13[%c0_69, %c0_70], %183 {strides = array<i32>} : memref<8x128xf32, #tpu.memory_space<vmem>>, vector<8x128xf32>,
    } else {
    }
    %c0 = arith.constant 0 : index
    %c0_1 = arith.constant 0 : index
    %c0_2 = arith.constant 0 : index
    %3 = vector.load %arg2[%c0, %c0_1, %c0_2] : memref<4x8x128xbf16, #tpu.memory_space<vmem>>, vector<4x8x128xbf16>
    %4 = arith.extf %3 : vector<4x8x128xbf16> to vector<4x8x128xf32>
    %5 = vector.shape_cast %4 : vector<4x8x128xf32> to vector<32x128xf32>
    %6 = arith.truncf %5 : vector<32x128xf32> to vector<32x128xbf16>
    %c0_3 = arith.constant 0 : index
    %c0_4 = arith.constant 0 : index
    %7 = vector.load %arg3[%c0_3, %c0_4] : memref<128x384xbf16, #tpu.memory_space<vmem>>, vector<128x384xbf16>
    %cst = arith.constant dense<0.000000e+00> : vector<32x384xf32>
    %8 = tpu.matmul %6, %7, %cst {dimension_numbers = #tpu.dot_dimension_numbers<[1], [0], [0], [1], [0, 0, 1, 1], [], []>} : vector<32x128xbf16>, vector<128x384xbf16>, vector<32x384xf32> -> vector<32x384xf32>
    %c0_5 = arith.constant 0 : index
    %c0_6 = arith.constant 0 : index
    %9 = vector.load %arg5[%c0_5, %c0_6] : memref<1x384xf32, #tpu.memory_space<vmem>>, vector<1x384xf32>
    %10 = vector.broadcast %9 : vector<1x384xf32> to vector<32x384xf32>
    %11 = arith.addf %8, %10 : vector<32x384xf32>
    %12 = vector.shape_cast %11 : vector<32x384xf32> to vector<4x8x384xf32>
    %c0_7 = arith.constant 0 : index
    %c0_8 = arith.constant 0 : index
    %c0_9 = arith.constant 0 : index
    %13 = vector.load %arg12[%c0_7, %c0_8, %c0_9] : memref<4x8x384xf32, #tpu.memory_space<vmem>>, vector<4x8x384xf32>
    tpu.vector_store %arg12[%c0_7, %c0_8, %c0_9], %12 {strides = array<i32>} : memref<4x8x384xf32, #tpu.memory_space<vmem>>, vector<4x8x384xf32>,
    %c0_10 = arith.constant 0 : index
    %c0_11 = arith.constant 0 : index
    %14 = vector.load %arg4[%c0_10, %c0_11] : memref<128x384xbf16, #tpu.memory_space<vmem>>, vector<128x384xbf16>
    %c0_12 = arith.constant 0 : index
    %c0_13 = arith.constant 0 : index
    %15 = vector.load %arg6[%c0_12, %c0_13] : memref<1x128xf32, #tpu.memory_space<vmem>>, vector<1x128xf32>
    %16 = vector.shape_cast %15 : vector<1x128xf32> to vector<1x128xf32>
    %17 = vector.broadcast %16 : vector<1x128xf32> to vector<8x128xf32>
    %c0_14 = arith.constant 0 : index
    %c0_15 = arith.constant 0 : index
    %18 = vector.load %arg13[%c0_14, %c0_15] : memref<8x128xf32, #tpu.memory_space<vmem>>, vector<8x128xf32>
    %c0_i32_16 = arith.constant 0 : i32
    %19 = arith.index_cast %c0_i32_16 : i32 to index
    %c0_17 = arith.constant 0 : index
    %c0_18 = arith.constant 0 : index
    %20 = vector.load %arg12[%19, %c0_17, %c0_18] : memref<4x8x384xf32, #tpu.memory_space<vmem>>, vector<1x8x384xf32>
    %21 = vector.shape_cast %20 : vector<1x8x384xf32> to vector<8x384xf32>
    %22 = arith.truncf %18 : vector<8x128xf32> to vector<8x128xbf16>
    %cst_19 = arith.constant dense<0.000000e+00> : vector<8x384xf32>
    %23 = tpu.matmul %22, %14, %cst_19 {dimension_numbers = #tpu.dot_dimension_numbers<[1], [0], [0], [1], [0, 0, 1, 1], [], []>} : vector<8x128xbf16>, vector<128x384xbf16>, vector<8x384xf32> -> vector<8x384xf32>
    %24 = vector.extract_strided_slice %21 {offsets = [0, 0], sizes = [8, 128], strides = [1, 1]} : vector<8x384xf32> to vector<8x128xf32>
    %25 = vector.extract_strided_slice %23 {offsets = [0, 0], sizes = [8, 128], strides = [1, 1]} : vector<8x384xf32> to vector<8x128xf32>
    %26 = arith.addf %24, %25 : vector<8x128xf32>
    %cst_20 = arith.constant 5.000000e-01 : f32
    %27 = vector.broadcast %cst_20 : f32 to vector<8x128xf32>
    %28 = arith.mulf %27, %26 : vector<8x128xf32>
    %29 = math.tanh %28 : vector<8x128xf32>
    %cst_21 = arith.constant 1.000000e+00 : f32
    %30 = vector.broadcast %cst_21 : f32 to vector<8x128xf32>
    %31 = arith.addf %29, %30 : vector<8x128xf32>
    %cst_22 = arith.constant 5.000000e-01 : f32
    %32 = vector.broadcast %cst_22 : f32 to vector<8x128xf32>
    %33 = arith.mulf %32, %31 : vector<8x128xf32>
    %34 = vector.extract_strided_slice %21 {offsets = [0, 128], sizes = [8, 128], strides = [1, 1]} : vector<8x384xf32> to vector<8x128xf32>
    %35 = vector.extract_strided_slice %23 {offsets = [0, 128], sizes = [8, 128], strides = [1, 1]} : vector<8x384xf32> to vector<8x128xf32>
    %36 = arith.addf %34, %35 : vector<8x128xf32>
    %cst_23 = arith.constant 5.000000e-01 : f32
    %37 = vector.broadcast %cst_23 : f32 to vector<8x128xf32>
    %38 = arith.mulf %37, %36 : vector<8x128xf32>
    %39 = math.tanh %38 : vector<8x128xf32>
    %cst_24 = arith.constant 1.000000e+00 : f32
    %40 = vector.broadcast %cst_24 : f32 to vector<8x128xf32>
    %41 = arith.addf %39, %40 : vector<8x128xf32>
    %cst_25 = arith.constant 5.000000e-01 : f32
    %42 = vector.broadcast %cst_25 : f32 to vector<8x128xf32>
    %43 = arith.mulf %42, %41 : vector<8x128xf32>
    %44 = vector.extract_strided_slice %21 {offsets = [0, 256], sizes = [8, 128], strides = [1, 1]} : vector<8x384xf32> to vector<8x128xf32>
    %45 = vector.extract_strided_slice %23 {offsets = [0, 256], sizes = [8, 128], strides = [1, 1]} : vector<8x384xf32> to vector<8x128xf32>
    %46 = arith.addf %45, %17 : vector<8x128xf32>
    %47 = arith.mulf %33, %46 : vector<8x128xf32>
    %48 = arith.addf %44, %47 : vector<8x128xf32>
    %49 = math.tanh %48 : vector<8x128xf32>
    %cst_26 = arith.constant 1.000000e+00 : f32
    %50 = vector.broadcast %cst_26 : f32 to vector<8x128xf32>
    %51 = arith.subf %50, %43 : vector<8x128xf32>
    %52 = arith.mulf %51, %49 : vector<8x128xf32>
    %53 = arith.mulf %43, %18 : vector<8x128xf32>
    %54 = arith.addf %52, %53 : vector<8x128xf32>
    %c4_i32 = arith.constant 4 : i32
    %55 = arith.muli %arg1, %c4_i32 : i32
    %56 = arith.addi %55, %c0_i32_16 : i32
    %c9_i32 = arith.constant 9 : i32
    %57 = arith.cmpi slt, %56, %c9_i32 : i32
    %58 = arith.select %57, %54, %18 : vector<8x128xf32>
    %c1_i32 = arith.constant 1 : i32
    %59 = arith.index_cast %c1_i32 : i32 to index
    %c0_27 = arith.constant 0 : index
    %c0_28 = arith.constant 0 : index
    %60 = vector.load %arg12[%59, %c0_27, %c0_28] : memref<4x8x384xf32, #tpu.memory_space<vmem>>, vector<1x8x384xf32>
    %61 = vector.shape_cast %60 : vector<1x8x384xf32> to vector<8x384xf32>
    %62 = arith.truncf %58 : vector<8x128xf32> to vector<8x128xbf16>
    %cst_29 = arith.constant dense<0.000000e+00> : vector<8x384xf32>
    %63 = tpu.matmul %62, %14, %cst_29 {dimension_numbers = #tpu.dot_dimension_numbers<[1], [0], [0], [1], [0, 0, 1, 1], [], []>} : vector<8x128xbf16>, vector<128x384xbf16>, vector<8x384xf32> -> vector<8x384xf32>
    %64 = vector.extract_strided_slice %61 {offsets = [0, 0], sizes = [8, 128], strides = [1, 1]} : vector<8x384xf32> to vector<8x128xf32>
    %65 = vector.extract_strided_slice %63 {offsets = [0, 0], sizes = [8, 128], strides = [1, 1]} : vector<8x384xf32> to vector<8x128xf32>
    %66 = arith.addf %64, %65 : vector<8x128xf32>
    %cst_30 = arith.constant 5.000000e-01 : f32
    %67 = vector.broadcast %cst_30 : f32 to vector<8x128xf32>
    %68 = arith.mulf %67, %66 : vector<8x128xf32>
    %69 = math.tanh %68 : vector<8x128xf32>
    %cst_31 = arith.constant 1.000000e+00 : f32
    %70 = vector.broadcast %cst_31 : f32 to vector<8x128xf32>
    %71 = arith.addf %69, %70 : vector<8x128xf32>
    %cst_32 = arith.constant 5.000000e-01 : f32
    %72 = vector.broadcast %cst_32 : f32 to vector<8x128xf32>
    %73 = arith.mulf %72, %71 : vector<8x128xf32>
    %74 = vector.extract_strided_slice %61 {offsets = [0, 128], sizes = [8, 128], strides = [1, 1]} : vector<8x384xf32> to vector<8x128xf32>
    %75 = vector.extract_strided_slice %63 {offsets = [0, 128], sizes = [8, 128], strides = [1, 1]} : vector<8x384xf32> to vector<8x128xf32>
    %76 = arith.addf %74, %75 : vector<8x128xf32>
    %cst_33 = arith.constant 5.000000e-01 : f32
    %77 = vector.broadcast %cst_33 : f32 to vector<8x128xf32>
    %78 = arith.mulf %77, %76 : vector<8x128xf32>
    %79 = math.tanh %78 : vector<8x128xf32>
    %cst_34 = arith.constant 1.000000e+00 : f32
    %80 = vector.broadcast %cst_34 : f32 to vector<8x128xf32>
    %81 = arith.addf %79, %80 : vector<8x128xf32>
    %cst_35 = arith.constant 5.000000e-01 : f32
    %82 = vector.broadcast %cst_35 : f32 to vector<8x128xf32>
    %83 = arith.mulf %82, %81 : vector<8x128xf32>
    %84 = vector.extract_strided_slice %61 {offsets = [0, 256], sizes = [8, 128], strides = [1, 1]} : vector<8x384xf32> to vector<8x128xf32>
    %85 = vector.extract_strided_slice %63 {offsets = [0, 256], sizes = [8, 128], strides = [1, 1]} : vector<8x384xf32> to vector<8x128xf32>
    %86 = arith.addf %85, %17 : vector<8x128xf32>
    %87 = arith.mulf %73, %86 : vector<8x128xf32>
    %88 = arith.addf %84, %87 : vector<8x128xf32>
    %89 = math.tanh %88 : vector<8x128xf32>
    %cst_36 = arith.constant 1.000000e+00 : f32
    %90 = vector.broadcast %cst_36 : f32 to vector<8x128xf32>
    %91 = arith.subf %90, %83 : vector<8x128xf32>
    %92 = arith.mulf %91, %89 : vector<8x128xf32>
    %93 = arith.mulf %83, %58 : vector<8x128xf32>
    %94 = arith.addf %92, %93 : vector<8x128xf32>
    %c4_i32_37 = arith.constant 4 : i32
    %95 = arith.muli %arg1, %c4_i32_37 : i32
    %96 = arith.addi %95, %c1_i32 : i32
    %c9_i32_38 = arith.constant 9 : i32
    %97 = arith.cmpi slt, %96, %c9_i32_38 : i32
    %98 = arith.select %97, %94, %58 : vector<8x128xf32>
    %c2_i32 = arith.constant 2 : i32
    %99 = arith.index_cast %c2_i32 : i32 to index
    %c0_39 = arith.constant 0 : index
    %c0_40 = arith.constant 0 : index
    %100 = vector.load %arg12[%99, %c0_39, %c0_40] : memref<4x8x384xf32, #tpu.memory_space<vmem>>, vector<1x8x384xf32>
    %101 = vector.shape_cast %100 : vector<1x8x384xf32> to vector<8x384xf32>
    %102 = arith.truncf %98 : vector<8x128xf32> to vector<8x128xbf16>
    %cst_41 = arith.constant dense<0.000000e+00> : vector<8x384xf32>
    %103 = tpu.matmul %102, %14, %cst_41 {dimension_numbers = #tpu.dot_dimension_numbers<[1], [0], [0], [1], [0, 0, 1, 1], [], []>} : vector<8x128xbf16>, vector<128x384xbf16>, vector<8x384xf32> -> vector<8x384xf32>
    %104 = vector.extract_strided_slice %101 {offsets = [0, 0], sizes = [8, 128], strides = [1, 1]} : vector<8x384xf32> to vector<8x128xf32>
    %105 = vector.extract_strided_slice %103 {offsets = [0, 0], sizes = [8, 128], strides = [1, 1]} : vector<8x384xf32> to vector<8x128xf32>
    %106 = arith.addf %104, %105 : vector<8x128xf32>
    %cst_42 = arith.constant 5.000000e-01 : f32
    %107 = vector.broadcast %cst_42 : f32 to vector<8x128xf32>
    %108 = arith.mulf %107, %106 : vector<8x128xf32>
    %109 = math.tanh %108 : vector<8x128xf32>
    %cst_43 = arith.constant 1.000000e+00 : f32
    %110 = vector.broadcast %cst_43 : f32 to vector<8x128xf32>
    %111 = arith.addf %109, %110 : vector<8x128xf32>
    %cst_44 = arith.constant 5.000000e-01 : f32
    %112 = vector.broadcast %cst_44 : f32 to vector<8x128xf32>
    %113 = arith.mulf %112, %111 : vector<8x128xf32>
    %114 = vector.extract_strided_slice %101 {offsets = [0, 128], sizes = [8, 128], strides = [1, 1]} : vector<8x384xf32> to vector<8x128xf32>
    %115 = vector.extract_strided_slice %103 {offsets = [0, 128], sizes = [8, 128], strides = [1, 1]} : vector<8x384xf32> to vector<8x128xf32>
    %116 = arith.addf %114, %115 : vector<8x128xf32>
    %cst_45 = arith.constant 5.000000e-01 : f32
    %117 = vector.broadcast %cst_45 : f32 to vector<8x128xf32>
    %118 = arith.mulf %117, %116 : vector<8x128xf32>
    %119 = math.tanh %118 : vector<8x128xf32>
    %cst_46 = arith.constant 1.000000e+00 : f32
    %120 = vector.broadcast %cst_46 : f32 to vector<8x128xf32>
    %121 = arith.addf %119, %120 : vector<8x128xf32>
    %cst_47 = arith.constant 5.000000e-01 : f32
    %122 = vector.broadcast %cst_47 : f32 to vector<8x128xf32>
    %123 = arith.mulf %122, %121 : vector<8x128xf32>
    %124 = vector.extract_strided_slice %101 {offsets = [0, 256], sizes = [8, 128], strides = [1, 1]} : vector<8x384xf32> to vector<8x128xf32>
    %125 = vector.extract_strided_slice %103 {offsets = [0, 256], sizes = [8, 128], strides = [1, 1]} : vector<8x384xf32> to vector<8x128xf32>
    %126 = arith.addf %125, %17 : vector<8x128xf32>
    %127 = arith.mulf %113, %126 : vector<8x128xf32>
    %128 = arith.addf %124, %127 : vector<8x128xf32>
    %129 = math.tanh %128 : vector<8x128xf32>
    %cst_48 = arith.constant 1.000000e+00 : f32
    %130 = vector.broadcast %cst_48 : f32 to vector<8x128xf32>
    %131 = arith.subf %130, %123 : vector<8x128xf32>
    %132 = arith.mulf %131, %129 : vector<8x128xf32>
    %133 = arith.mulf %123, %98 : vector<8x128xf32>
    %134 = arith.addf %132, %133 : vector<8x128xf32>
    %c4_i32_49 = arith.constant 4 : i32
    %135 = arith.muli %arg1, %c4_i32_49 : i32
    %136 = arith.addi %135, %c2_i32 : i32
    %c9_i32_50 = arith.constant 9 : i32
    %137 = arith.cmpi slt, %136, %c9_i32_50 : i32
    %138 = arith.select %137, %134, %98 : vector<8x128xf32>
    %c3_i32 = arith.constant 3 : i32
    %139 = arith.index_cast %c3_i32 : i32 to index
    %c0_51 = arith.constant 0 : index
    %c0_52 = arith.constant 0 : index
    %140 = vector.load %arg12[%139, %c0_51, %c0_52] : memref<4x8x384xf32, #tpu.memory_space<vmem>>, vector<1x8x384xf32>
    %141 = vector.shape_cast %140 : vector<1x8x384xf32> to vector<8x384xf32>
    %142 = arith.truncf %138 : vector<8x128xf32> to vector<8x128xbf16>
    %cst_53 = arith.constant dense<0.000000e+00> : vector<8x384xf32>
    %143 = tpu.matmul %142, %14, %cst_53 {dimension_numbers = #tpu.dot_dimension_numbers<[1], [0], [0], [1], [0, 0, 1, 1], [], []>} : vector<8x128xbf16>, vector<128x384xbf16>, vector<8x384xf32> -> vector<8x384xf32>
    %144 = vector.extract_strided_slice %141 {offsets = [0, 0], sizes = [8, 128], strides = [1, 1]} : vector<8x384xf32> to vector<8x128xf32>
    %145 = vector.extract_strided_slice %143 {offsets = [0, 0], sizes = [8, 128], strides = [1, 1]} : vector<8x384xf32> to vector<8x128xf32>
    %146 = arith.addf %144, %145 : vector<8x128xf32>
    %cst_54 = arith.constant 5.000000e-01 : f32
    %147 = vector.broadcast %cst_54 : f32 to vector<8x128xf32>
    %148 = arith.mulf %147, %146 : vector<8x128xf32>
    %149 = math.tanh %148 : vector<8x128xf32>
    %cst_55 = arith.constant 1.000000e+00 : f32
    %150 = vector.broadcast %cst_55 : f32 to vector<8x128xf32>
    %151 = arith.addf %149, %150 : vector<8x128xf32>
    %cst_56 = arith.constant 5.000000e-01 : f32
    %152 = vector.broadcast %cst_56 : f32 to vector<8x128xf32>
    %153 = arith.mulf %152, %151 : vector<8x128xf32>
    %154 = vector.extract_strided_slice %141 {offsets = [0, 128], sizes = [8, 128], strides = [1, 1]} : vector<8x384xf32> to vector<8x128xf32>
    %155 = vector.extract_strided_slice %143 {offsets = [0, 128], sizes = [8, 128], strides = [1, 1]} : vector<8x384xf32> to vector<8x128xf32>
    %156 = arith.addf %154, %155 : vector<8x128xf32>
    %cst_57 = arith.constant 5.000000e-01 : f32
    %157 = vector.broadcast %cst_57 : f32 to vector<8x128xf32>
    %158 = arith.mulf %157, %156 : vector<8x128xf32>
    %159 = math.tanh %158 : vector<8x128xf32>
    %cst_58 = arith.constant 1.000000e+00 : f32
    %160 = vector.broadcast %cst_58 : f32 to vector<8x128xf32>
    %161 = arith.addf %159, %160 : vector<8x128xf32>
    %cst_59 = arith.constant 5.000000e-01 : f32
    %162 = vector.broadcast %cst_59 : f32 to vector<8x128xf32>
    %163 = arith.mulf %162, %161 : vector<8x128xf32>
    %164 = vector.extract_strided_slice %141 {offsets = [0, 256], sizes = [8, 128], strides = [1, 1]} : vector<8x384xf32> to vector<8x128xf32>
    %165 = vector.extract_strided_slice %143 {offsets = [0, 256], sizes = [8, 128], strides = [1, 1]} : vector<8x384xf32> to vector<8x128xf32>
    %166 = arith.addf %165, %17 : vector<8x128xf32>
    %167 = arith.mulf %153, %166 : vector<8x128xf32>
    %168 = arith.addf %164, %167 : vector<8x128xf32>
    %169 = math.tanh %168 : vector<8x128xf32>
    %cst_60 = arith.constant 1.000000e+00 : f32
    %170 = vector.broadcast %cst_60 : f32 to vector<8x128xf32>
    %171 = arith.subf %170, %163 : vector<8x128xf32>
    %172 = arith.mulf %171, %169 : vector<8x128xf32>
    %173 = arith.mulf %163, %138 : vector<8x128xf32>
    %174 = arith.addf %172, %173 : vector<8x128xf32>
    %c4_i32_61 = arith.constant 4 : i32
    %175 = arith.muli %arg1, %c4_i32_61 : i32
    %176 = arith.addi %175, %c3_i32 : i32
    %c9_i32_62 = arith.constant 9 : i32
    %177 = arith.cmpi slt, %176, %c9_i32_62 : i32
    %178 = arith.select %177, %174, %138 : vector<8x128xf32>
    %c4_i32_63 = arith.constant 4 : i32
    %c0_64 = arith.constant 0 : index
    %c0_65 = arith.constant 0 : index
    %179 = vector.load %arg13[%c0_64, %c0_65] : memref<8x128xf32, #tpu.memory_space<vmem>>, vector<8x128xf32>
    tpu.vector_store %arg13[%c0_64, %c0_65], %178 {strides = array<i32>} : memref<8x128xf32, #tpu.memory_space<vmem>>, vector<8x128xf32>,
    %c2_i32_66 = arith.constant 2 : i32
    %180 = arith.cmpi eq, %arg1, %c2_i32_66 : i32
    %181 = arith.extui %180 : i1 to i32
    %c0_i32_67 = arith.constant 0 : i32
    %182 = arith.cmpi ne, %181, %c0_i32_67 : i32
    scf.if %182 {
      %c0_68 = arith.constant 0 : index
      %c0_69 = arith.constant 0 : index
      %183 = vector.load %arg11[%c0_68, %c0_69] : memref<8x128xf32, #tpu.memory_space<vmem>>, vector<8x128xf32>
      tpu.vector_store %arg11[%c0_68, %c0_69], %178 {strides = array<i32>} : memref<8x128xf32, #tpu.memory_space<vmem>>, vector<8x128xf32>,
      %184 = arith.truncf %178 : vector<8x128xf32> to vector<8x128xbf16>
      %c0_70 = arith.constant 0 : index
      %c0_71 = arith.constant 0 : index
      %185 = vector.load %arg7[%c0_70, %c0_71] : memref<128x128xbf16, #tpu.memory_space<vmem>>, vector<128x128xbf16>
      %cst_72 = arith.constant dense<0.000000e+00> : vector<8x128xf32>
      %186 = tpu.matmul %184, %185, %cst_72 {dimension_numbers = #tpu.dot_dimension_numbers<[1], [0], [0], [1], [0, 0, 1, 1], [], []>} : vector<8x128xbf16>, vector<128x128xbf16>, vector<8x128xf32> -> vector<8x128xf32>
      %c0_73 = arith.constant 0 : index
      %c0_74 = arith.constant 0 : index
      %187 = vector.load %arg8[%c0_73, %c0_74] : memref<1x128xf32, #tpu.memory_space<vmem>>, vector<1x128xf32>
      %188 = vector.broadcast %187 : vector<1x128xf32> to vector<8x128xf32>
      %189 = arith.addf %186, %188 : vector<8x128xf32>
      %c0_75 = arith.constant 0 : index
      %c0_76 = arith.constant 0 : index
      %190 = vector.load %arg10[%c0_75, %c0_76] : memref<8x128xf32, #tpu.memory_space<vmem>>, vector<8x128xf32>
      tpu.vector_store %arg10[%c0_75, %c0_76], %189 {strides = array<i32>} : memref<8x128xf32, #tpu.memory_space<vmem>>, vector<8x128xf32>,
      %191 = tpu.iota {dimensions = array<i32: 1>} : vector<8x128xi32>
      %c4_i32_77 = arith.constant 4 : i32
      %192 = vector.broadcast %c4_i32_77 : i32 to vector<8x128xi32>
      %193 = arith.cmpi slt, %191, %192 : vector<8x128xi32>
      %cst_78 = arith.constant -1.000000e+30 : f32
      %194 = vector.broadcast %cst_78 : f32 to vector<8x128xf32>
      %195 = arith.select %193, %189, %194 : vector<8x128xi1>, vector<8x128xf32>
      %cst_79 = arith.constant dense<0xFF800000> : vector<8xf32>
      %196 = vector.multi_reduction <maximumf>, %195, %cst_79 [1] : vector<8x128xf32> to vector<8xf32>
      %197 = vector.shape_cast %196 : vector<8xf32> to vector<8x1xf32>
      %198 = vector.broadcast %197 : vector<8x1xf32> to vector<8x128xf32>
      %199 = arith.subf %195, %198 : vector<8x128xf32>
      %200 = math.exp %199 : vector<8x128xf32>
      %cst_80 = arith.constant dense<0.000000e+00> : vector<8xf32>
      %201 = vector.multi_reduction <add>, %200, %cst_80 [1] : vector<8x128xf32> to vector<8xf32>
      %202 = vector.shape_cast %201 : vector<8xf32> to vector<8x1xf32>
      %203 = tpu.reciprocal %202 {approx = true} : vector<8x1xf32> -> vector<8x1xf32>
      %204 = vector.broadcast %203 : vector<8x1xf32> to vector<8x128xf32>
      %205 = arith.mulf %200, %204 : vector<8x128xf32>
      %c0_81 = arith.constant 0 : index
      %c0_82 = arith.constant 0 : index
      %206 = vector.load %arg9[%c0_81, %c0_82] : memref<8x128xf32, #tpu.memory_space<vmem>>, vector<8x128xf32>
      tpu.vector_store %arg9[%c0_81, %c0_82], %205 {strides = array<i32>} : memref<8x128xf32, #tpu.memory_space<vmem>>, vector<8x128xf32>,
    } else {
    }
    return
  }
  func.func @transform_0(%arg0: i32, %arg1: i32) -> (i32, i32, i32) {
    %c0_i32 = arith.constant 0 : i32
    %c0_i32_0 = arith.constant 0 : i32
    return %arg1, %arg0, %c0_i32 : i32, i32, i32
  }
  func.func @transform_1(%arg0: i32, %arg1: i32) -> (i32, i32) {
    %c0_i32 = arith.constant 0 : i32
    %c0_i32_0 = arith.constant 0 : i32
    %c0_i32_1 = arith.constant 0 : i32
    return %c0_i32, %c0_i32_0 : i32, i32
  }
  func.func @transform_2(%arg0: i32, %arg1: i32) -> (i32, i32) {
    %c0_i32 = arith.constant 0 : i32
    %c0_i32_0 = arith.constant 0 : i32
    %c0_i32_1 = arith.constant 0 : i32
    return %c0_i32, %c0_i32_0 : i32, i32
  }
  func.func @transform_3(%arg0: i32, %arg1: i32) -> (i32, i32) {
    %c0_i32 = arith.constant 0 : i32
    %c0_i32_0 = arith.constant 0 : i32
    %c0_i32_1 = arith.constant 0 : i32
    return %c0_i32, %c0_i32_0 : i32, i32
  }
  func.func @transform_4(%arg0: i32, %arg1: i32) -> (i32, i32) {
    %c0_i32 = arith.constant 0 : i32
    %c0_i32_0 = arith.constant 0 : i32
    %c0_i32_1 = arith.constant 0 : i32
    return %c0_i32, %c0_i32_0 : i32, i32
  }
  func.func @transform_5(%arg0: i32, %arg1: i32) -> (i32, i32) {
    %c0_i32 = arith.constant 0 : i32
    %c0_i32_0 = arith.constant 0 : i32
    %c0_i32_1 = arith.constant 0 : i32
    return %c0_i32, %c0_i32_0 : i32, i32
  }
  func.func @transform_6(%arg0: i32, %arg1: i32) -> (i32, i32) {
    %c0_i32 = arith.constant 0 : i32
    %c0_i32_0 = arith.constant 0 : i32
    %c0_i32_1 = arith.constant 0 : i32
    return %c0_i32, %c0_i32_0 : i32, i32
  }
  func.func @transform_7(%arg0: i32, %arg1: i32) -> (i32, i32) {
    %c0_i32 = arith.constant 0 : i32
    %c0_i32_0 = arith.constant 0 : i32
    return %arg0, %c0_i32 : i32, i32
  }
  func.func @transform_8(%arg0: i32, %arg1: i32) -> (i32, i32) {
    %c0_i32 = arith.constant 0 : i32
    %c0_i32_0 = arith.constant 0 : i32
    return %arg0, %c0_i32 : i32, i32
  }
  func.func @transform_9(%arg0: i32, %arg1: i32) -> (i32, i32) {
    %c0_i32 = arith.constant 0 : i32
    %c0_i32_0 = arith.constant 0 : i32
    return %arg0, %c0_i32 : i32, i32
  }
}

module attributes {stable_mosaic.version = 11 : i64} {
  func.func @kernel(%arg0: i32, %arg1: i32, %arg2: memref<4x8x128xbf16, #tpu.memory_space<vmem>>, %arg3: memref<128x384xbf16, #tpu.memory_space<vmem>>, %arg4: memref<128x384xbf16, #tpu.memory_space<vmem>>, %arg5: memref<1x384xf32, #tpu.memory_space<vmem>>, %arg6: memref<1x128xf32, #tpu.memory_space<vmem>>, %arg7: memref<128x128xbf16, #tpu.memory_space<vmem>>, %arg8: memref<1x128xf32, #tpu.memory_space<vmem>>, %arg9: memref<8x128xf32, #tpu.memory_space<vmem>>, %arg10: memref<8x128xf32, #tpu.memory_space<vmem>>, %arg11: memref<8x128xf32, #tpu.memory_space<vmem>>, %arg12: memref<4x8x384xf32, #tpu.memory_space<vmem>>, %arg13: memref<8x128xf32, #tpu.memory_space<vmem>>) attributes {dimension_semantics = [#tpu.dimension_semantics<parallel>, #tpu.dimension_semantics<arbitrary>], iteration_bounds = array<i64: 1, 3>, scalar_prefetch = 0 : i64, scratch_operands = 2 : i64, tpu.core_type = #tpu.core_type<tc>, window_params = [{transform_indices = @transform_0, window_bounds = array<i64: 4, 8, 128>}, {pipeline_mode = #tpu.pipeline_mode<synchronous>, transform_indices = @transform_1, window_bounds = array<i64: 128, 384>}, {pipeline_mode = #tpu.pipeline_mode<synchronous>, transform_indices = @transform_2, window_bounds = array<i64: 128, 384>}, {pipeline_mode = #tpu.pipeline_mode<synchronous>, transform_indices = @transform_3, window_bounds = array<i64: 1, 384>}, {pipeline_mode = #tpu.pipeline_mode<synchronous>, transform_indices = @transform_4, window_bounds = array<i64: 1, 128>}, {pipeline_mode = #tpu.pipeline_mode<synchronous>, transform_indices = @transform_5, window_bounds = array<i64: 128, 128>}, {pipeline_mode = #tpu.pipeline_mode<synchronous>, transform_indices = @transform_6, window_bounds = array<i64: 1, 128>}, {transform_indices = @transform_7, window_bounds = array<i64: 8, 128>}, {transform_indices = @transform_8, window_bounds = array<i64: 8, 128>}, {transform_indices = @transform_9, window_bounds = array<i64: 8, 128>}]} {
    %c0_i32 = arith.constant 0 : i32
    %0 = arith.cmpi eq, %arg1, %c0_i32 : i32
    %1 = arith.extui %0 : i1 to i32
    %c0_i32_0 = arith.constant 0 : i32
    %2 = arith.cmpi ne, %1, %c0_i32_0 : i32
    scf.if %2 {
      %cst_68 = arith.constant 0.000000e+00 : f32
      %183 = vector.broadcast %cst_68 : f32 to vector<8x128xf32>
      %c0_69 = arith.constant 0 : index
      %c0_70 = arith.constant 0 : index
      %184 = vector.load %arg13[%c0_69, %c0_70] : memref<8x128xf32, #tpu.memory_space<vmem>>, vector<8x128xf32>
      tpu.vector_store %arg13[%c0_69, %c0_70], %183 {strides = array<i32>} : memref<8x128xf32, #tpu.memory_space<vmem>>, vector<8x128xf32>,
    } else {
    }
    %c0 = arith.constant 0 : index
    %c0_1 = arith.constant 0 : index
    %c0_2 = arith.constant 0 : index
    %3 = vector.load %arg2[%c0, %c0_1, %c0_2] : memref<4x8x128xbf16, #tpu.memory_space<vmem>>, vector<4x8x128xbf16>
    %4 = arith.extf %3 : vector<4x8x128xbf16> to vector<4x8x128xf32>
    %5 = vector.shape_cast %4 : vector<4x8x128xf32> to vector<32x128xf32>
    %6 = arith.truncf %5 : vector<32x128xf32> to vector<32x128xbf16>
    %c0_3 = arith.constant 0 : index
    %c0_4 = arith.constant 0 : index
    %7 = vector.load %arg3[%c0_3, %c0_4] : memref<128x384xbf16, #tpu.memory_space<vmem>>, vector<128x384xbf16>
    %cst = arith.constant dense<0.000000e+00> : vector<32x384xf32>
    %8 = tpu.matmul %6, %7, %cst {dimension_numbers = #tpu.dot_dimension_numbers<[1], [0], [0], [1], [0, 0, 1, 1], [], []>} : vector<32x128xbf16>, vector<128x384xbf16>, vector<32x384xf32> -> vector<32x384xf32>
    %c0_5 = arith.constant 0 : index
    %c0_6 = arith.constant 0 : index
    %9 = vector.load %arg5[%c0_5, %c0_6] : memref<1x384xf32, #tpu.memory_space<vmem>>, vector<1x384xf32>
    %10 = vector.broadcast %9 : vector<1x384xf32> to vector<32x384xf32>
    %11 = arith.addf %8, %10 : vector<32x384xf32>
    %12 = vector.shape_cast %11 : vector<32x384xf32> to vector<4x8x384xf32>
    %c0_7 = arith.constant 0 : index
    %c0_8 = arith.constant 0 : index
    %c0_9 = arith.constant 0 : index
    %13 = vector.load %arg12[%c0_7, %c0_8, %c0_9] : memref<4x8x384xf32, #tpu.memory_space<vmem>>, vector<4x8x384xf32>
    tpu.vector_store %arg12[%c0_7, %c0_8, %c0_9], %12 {strides = array<i32>} : memref<4x8x384xf32, #tpu.memory_space<vmem>>, vector<4x8x384xf32>,
    %c0_10 = arith.constant 0 : index
    %c0_11 = arith.constant 0 : index
    %14 = vector.load %arg4[%c0_10, %c0_11] : memref<128x384xbf16, #tpu.memory_space<vmem>>, vector<128x384xbf16>
    %c0_12 = arith.constant 0 : index
    %c0_13 = arith.constant 0 : index
    %15 = vector.load %arg6[%c0_12, %c0_13] : memref<1x128xf32, #tpu.memory_space<vmem>>, vector<1x128xf32>
    %16 = vector.shape_cast %15 : vector<1x128xf32> to vector<1x128xf32>
    %17 = vector.broadcast %16 : vector<1x128xf32> to vector<8x128xf32>
    %c0_14 = arith.constant 0 : index
    %c0_15 = arith.constant 0 : index
    %18 = vector.load %arg13[%c0_14, %c0_15] : memref<8x128xf32, #tpu.memory_space<vmem>>, vector<8x128xf32>
    %c0_i32_16 = arith.constant 0 : i32
    %19 = arith.index_cast %c0_i32_16 : i32 to index
    %c0_17 = arith.constant 0 : index
    %c0_18 = arith.constant 0 : index
    %20 = vector.load %arg12[%19, %c0_17, %c0_18] : memref<4x8x384xf32, #tpu.memory_space<vmem>>, vector<1x8x384xf32>
    %21 = vector.shape_cast %20 : vector<1x8x384xf32> to vector<8x384xf32>
    %22 = arith.truncf %18 : vector<8x128xf32> to vector<8x128xbf16>
    %cst_19 = arith.constant dense<0.000000e+00> : vector<8x384xf32>
    %23 = tpu.matmul %22, %14, %cst_19 {dimension_numbers = #tpu.dot_dimension_numbers<[1], [0], [0], [1], [0, 0, 1, 1], [], []>} : vector<8x128xbf16>, vector<128x384xbf16>, vector<8x384xf32> -> vector<8x384xf32>
    %24 = vector.extract_strided_slice %21 {offsets = [0, 0], sizes = [8, 128], strides = [1, 1]} : vector<8x384xf32> to vector<8x128xf32>
    %25 = vector.extract_strided_slice %23 {offsets = [0, 0], sizes = [8, 128], strides = [1, 1]} : vector<8x384xf32> to vector<8x128xf32>
    %26 = arith.addf %24, %25 : vector<8x128xf32>
    %cst_20 = arith.constant 5.000000e-01 : f32
    %27 = vector.broadcast %cst_20 : f32 to vector<8x128xf32>
    %28 = arith.mulf %27, %26 : vector<8x128xf32>
    %29 = math.tanh %28 : vector<8x128xf32>
    %cst_21 = arith.constant 1.000000e+00 : f32
    %30 = vector.broadcast %cst_21 : f32 to vector<8x128xf32>
    %31 = arith.addf %29, %30 : vector<8x128xf32>
    %cst_22 = arith.constant 5.000000e-01 : f32
    %32 = vector.broadcast %cst_22 : f32 to vector<8x128xf32>
    %33 = arith.mulf %32, %31 : vector<8x128xf32>
    %34 = vector.extract_strided_slice %21 {offsets = [0, 128], sizes = [8, 128], strides = [1, 1]} : vector<8x384xf32> to vector<8x128xf32>
    %35 = vector.extract_strided_slice %23 {offsets = [0, 128], sizes = [8, 128], strides = [1, 1]} : vector<8x384xf32> to vector<8x128xf32>
    %36 = arith.addf %34, %35 : vector<8x128xf32>
    %cst_23 = arith.constant 5.000000e-01 : f32
    %37 = vector.broadcast %cst_23 : f32 to vector<8x128xf32>
    %38 = arith.mulf %37, %36 : vector<8x128xf32>
    %39 = math.tanh %38 : vector<8x128xf32>
    %cst_24 = arith.constant 1.000000e+00 : f32
    %40 = vector.broadcast %cst_24 : f32 to vector<8x128xf32>
    %41 = arith.addf %39, %40 : vector<8x128xf32>
    %cst_25 = arith.constant 5.000000e-01 : f32
    %42 = vector.broadcast %cst_25 : f32 to vector<8x128xf32>
    %43 = arith.mulf %42, %41 : vector<8x128xf32>
    %44 = vector.extract_strided_slice %21 {offsets = [0, 256], sizes = [8, 128], strides = [1, 1]} : vector<8x384xf32> to vector<8x128xf32>
    %45 = vector.extract_strided_slice %23 {offsets = [0, 256], sizes = [8, 128], strides = [1, 1]} : vector<8x384xf32> to vector<8x128xf32>
    %46 = arith.addf %45, %17 : vector<8x128xf32>
    %47 = arith.mulf %33, %46 : vector<8x128xf32>
    %48 = arith.addf %44, %47 : vector<8x128xf32>
    %49 = math.tanh %48 : vector<8x128xf32>
    %cst_26 = arith.constant 1.000000e+00 : f32
    %50 = vector.broadcast %cst_26 : f32 to vector<8x128xf32>
    %51 = arith.subf %50, %43 : vector<8x128xf32>
    %52 = arith.mulf %51, %49 : vector<8x128xf32>
    %53 = arith.mulf %43, %18 : vector<8x128xf32>
    %54 = arith.addf %52, %53 : vector<8x128xf32>
    %c4_i32 = arith.constant 4 : i32
    %55 = arith.muli %arg1, %c4_i32 : i32
    %56 = arith.addi %55, %c0_i32_16 : i32
    %c9_i32 = arith.constant 9 : i32
    %57 = arith.cmpi slt, %56, %c9_i32 : i32
    %58 = arith.select %57, %54, %18 : vector<8x128xf32>
    %c1_i32 = arith.constant 1 : i32
    %59 = arith.index_cast %c1_i32 : i32 to index
    %c0_27 = arith.constant 0 : index
    %c0_28 = arith.constant 0 : index
    %60 = vector.load %arg12[%59, %c0_27, %c0_28] : memref<4x8x384xf32, #tpu.memory_space<vmem>>, vector<1x8x384xf32>
    %61 = vector.shape_cast %60 : vector<1x8x384xf32> to vector<8x384xf32>
    %62 = arith.truncf %58 : vector<8x128xf32> to vector<8x128xbf16>
    %cst_29 = arith.constant dense<0.000000e+00> : vector<8x384xf32>
    %63 = tpu.matmul %62, %14, %cst_29 {dimension_numbers = #tpu.dot_dimension_numbers<[1], [0], [0], [1], [0, 0, 1, 1], [], []>} : vector<8x128xbf16>, vector<128x384xbf16>, vector<8x384xf32> -> vector<8x384xf32>
    %64 = vector.extract_strided_slice %61 {offsets = [0, 0], sizes = [8, 128], strides = [1, 1]} : vector<8x384xf32> to vector<8x128xf32>
    %65 = vector.extract_strided_slice %63 {offsets = [0, 0], sizes = [8, 128], strides = [1, 1]} : vector<8x384xf32> to vector<8x128xf32>
    %66 = arith.addf %64, %65 : vector<8x128xf32>
    %cst_30 = arith.constant 5.000000e-01 : f32
    %67 = vector.broadcast %cst_30 : f32 to vector<8x128xf32>
    %68 = arith.mulf %67, %66 : vector<8x128xf32>
    %69 = math.tanh %68 : vector<8x128xf32>
    %cst_31 = arith.constant 1.000000e+00 : f32
    %70 = vector.broadcast %cst_31 : f32 to vector<8x128xf32>
    %71 = arith.addf %69, %70 : vector<8x128xf32>
    %cst_32 = arith.constant 5.000000e-01 : f32
    %72 = vector.broadcast %cst_32 : f32 to vector<8x128xf32>
    %73 = arith.mulf %72, %71 : vector<8x128xf32>
    %74 = vector.extract_strided_slice %61 {offsets = [0, 128], sizes = [8, 128], strides = [1, 1]} : vector<8x384xf32> to vector<8x128xf32>
    %75 = vector.extract_strided_slice %63 {offsets = [0, 128], sizes = [8, 128], strides = [1, 1]} : vector<8x384xf32> to vector<8x128xf32>
    %76 = arith.addf %74, %75 : vector<8x128xf32>
    %cst_33 = arith.constant 5.000000e-01 : f32
    %77 = vector.broadcast %cst_33 : f32 to vector<8x128xf32>
    %78 = arith.mulf %77, %76 : vector<8x128xf32>
    %79 = math.tanh %78 : vector<8x128xf32>
    %cst_34 = arith.constant 1.000000e+00 : f32
    %80 = vector.broadcast %cst_34 : f32 to vector<8x128xf32>
    %81 = arith.addf %79, %80 : vector<8x128xf32>
    %cst_35 = arith.constant 5.000000e-01 : f32
    %82 = vector.broadcast %cst_35 : f32 to vector<8x128xf32>
    %83 = arith.mulf %82, %81 : vector<8x128xf32>
    %84 = vector.extract_strided_slice %61 {offsets = [0, 256], sizes = [8, 128], strides = [1, 1]} : vector<8x384xf32> to vector<8x128xf32>
    %85 = vector.extract_strided_slice %63 {offsets = [0, 256], sizes = [8, 128], strides = [1, 1]} : vector<8x384xf32> to vector<8x128xf32>
    %86 = arith.addf %85, %17 : vector<8x128xf32>
    %87 = arith.mulf %73, %86 : vector<8x128xf32>
    %88 = arith.addf %84, %87 : vector<8x128xf32>
    %89 = math.tanh %88 : vector<8x128xf32>
    %cst_36 = arith.constant 1.000000e+00 : f32
    %90 = vector.broadcast %cst_36 : f32 to vector<8x128xf32>
    %91 = arith.subf %90, %83 : vector<8x128xf32>
    %92 = arith.mulf %91, %89 : vector<8x128xf32>
    %93 = arith.mulf %83, %58 : vector<8x128xf32>
    %94 = arith.addf %92, %93 : vector<8x128xf32>
    %c4_i32_37 = arith.constant 4 : i32
    %95 = arith.muli %arg1, %c4_i32_37 : i32
    %96 = arith.addi %95, %c1_i32 : i32
    %c9_i32_38 = arith.constant 9 : i32
    %97 = arith.cmpi slt, %96, %c9_i32_38 : i32
    %98 = arith.select %97, %94, %58 : vector<8x128xf32>
    %c2_i32 = arith.constant 2 : i32
    %99 = arith.index_cast %c2_i32 : i32 to index
    %c0_39 = arith.constant 0 : index
    %c0_40 = arith.constant 0 : index
    %100 = vector.load %arg12[%99, %c0_39, %c0_40] : memref<4x8x384xf32, #tpu.memory_space<vmem>>, vector<1x8x384xf32>
    %101 = vector.shape_cast %100 : vector<1x8x384xf32> to vector<8x384xf32>
    %102 = arith.truncf %98 : vector<8x128xf32> to vector<8x128xbf16>
    %cst_41 = arith.constant dense<0.000000e+00> : vector<8x384xf32>
    %103 = tpu.matmul %102, %14, %cst_41 {dimension_numbers = #tpu.dot_dimension_numbers<[1], [0], [0], [1], [0, 0, 1, 1], [], []>} : vector<8x128xbf16>, vector<128x384xbf16>, vector<8x384xf32> -> vector<8x384xf32>
    %104 = vector.extract_strided_slice %101 {offsets = [0, 0], sizes = [8, 128], strides = [1, 1]} : vector<8x384xf32> to vector<8x128xf32>
    %105 = vector.extract_strided_slice %103 {offsets = [0, 0], sizes = [8, 128], strides = [1, 1]} : vector<8x384xf32> to vector<8x128xf32>
    %106 = arith.addf %104, %105 : vector<8x128xf32>
    %cst_42 = arith.constant 5.000000e-01 : f32
    %107 = vector.broadcast %cst_42 : f32 to vector<8x128xf32>
    %108 = arith.mulf %107, %106 : vector<8x128xf32>
    %109 = math.tanh %108 : vector<8x128xf32>
    %cst_43 = arith.constant 1.000000e+00 : f32
    %110 = vector.broadcast %cst_43 : f32 to vector<8x128xf32>
    %111 = arith.addf %109, %110 : vector<8x128xf32>
    %cst_44 = arith.constant 5.000000e-01 : f32
    %112 = vector.broadcast %cst_44 : f32 to vector<8x128xf32>
    %113 = arith.mulf %112, %111 : vector<8x128xf32>
    %114 = vector.extract_strided_slice %101 {offsets = [0, 128], sizes = [8, 128], strides = [1, 1]} : vector<8x384xf32> to vector<8x128xf32>
    %115 = vector.extract_strided_slice %103 {offsets = [0, 128], sizes = [8, 128], strides = [1, 1]} : vector<8x384xf32> to vector<8x128xf32>
    %116 = arith.addf %114, %115 : vector<8x128xf32>
    %cst_45 = arith.constant 5.000000e-01 : f32
    %117 = vector.broadcast %cst_45 : f32 to vector<8x128xf32>
    %118 = arith.mulf %117, %116 : vector<8x128xf32>
    %119 = math.tanh %118 : vector<8x128xf32>
    %cst_46 = arith.constant 1.000000e+00 : f32
    %120 = vector.broadcast %cst_46 : f32 to vector<8x128xf32>
    %121 = arith.addf %119, %120 : vector<8x128xf32>
    %cst_47 = arith.constant 5.000000e-01 : f32
    %122 = vector.broadcast %cst_47 : f32 to vector<8x128xf32>
    %123 = arith.mulf %122, %121 : vector<8x128xf32>
    %124 = vector.extract_strided_slice %101 {offsets = [0, 256], sizes = [8, 128], strides = [1, 1]} : vector<8x384xf32> to vector<8x128xf32>
    %125 = vector.extract_strided_slice %103 {offsets = [0, 256], sizes = [8, 128], strides = [1, 1]} : vector<8x384xf32> to vector<8x128xf32>
    %126 = arith.addf %125, %17 : vector<8x128xf32>
    %127 = arith.mulf %113, %126 : vector<8x128xf32>
    %128 = arith.addf %124, %127 : vector<8x128xf32>
    %129 = math.tanh %128 : vector<8x128xf32>
    %cst_48 = arith.constant 1.000000e+00 : f32
    %130 = vector.broadcast %cst_48 : f32 to vector<8x128xf32>
    %131 = arith.subf %130, %123 : vector<8x128xf32>
    %132 = arith.mulf %131, %129 : vector<8x128xf32>
    %133 = arith.mulf %123, %98 : vector<8x128xf32>
    %134 = arith.addf %132, %133 : vector<8x128xf32>
    %c4_i32_49 = arith.constant 4 : i32
    %135 = arith.muli %arg1, %c4_i32_49 : i32
    %136 = arith.addi %135, %c2_i32 : i32
    %c9_i32_50 = arith.constant 9 : i32
    %137 = arith.cmpi slt, %136, %c9_i32_50 : i32
    %138 = arith.select %137, %134, %98 : vector<8x128xf32>
    %c3_i32 = arith.constant 3 : i32
    %139 = arith.index_cast %c3_i32 : i32 to index
    %c0_51 = arith.constant 0 : index
    %c0_52 = arith.constant 0 : index
    %140 = vector.load %arg12[%139, %c0_51, %c0_52] : memref<4x8x384xf32, #tpu.memory_space<vmem>>, vector<1x8x384xf32>
    %141 = vector.shape_cast %140 : vector<1x8x384xf32> to vector<8x384xf32>
    %142 = arith.truncf %138 : vector<8x128xf32> to vector<8x128xbf16>
    %cst_53 = arith.constant dense<0.000000e+00> : vector<8x384xf32>
    %143 = tpu.matmul %142, %14, %cst_53 {dimension_numbers = #tpu.dot_dimension_numbers<[1], [0], [0], [1], [0, 0, 1, 1], [], []>} : vector<8x128xbf16>, vector<128x384xbf16>, vector<8x384xf32> -> vector<8x384xf32>
    %144 = vector.extract_strided_slice %141 {offsets = [0, 0], sizes = [8, 128], strides = [1, 1]} : vector<8x384xf32> to vector<8x128xf32>
    %145 = vector.extract_strided_slice %143 {offsets = [0, 0], sizes = [8, 128], strides = [1, 1]} : vector<8x384xf32> to vector<8x128xf32>
    %146 = arith.addf %144, %145 : vector<8x128xf32>
    %cst_54 = arith.constant 5.000000e-01 : f32
    %147 = vector.broadcast %cst_54 : f32 to vector<8x128xf32>
    %148 = arith.mulf %147, %146 : vector<8x128xf32>
    %149 = math.tanh %148 : vector<8x128xf32>
    %cst_55 = arith.constant 1.000000e+00 : f32
    %150 = vector.broadcast %cst_55 : f32 to vector<8x128xf32>
    %151 = arith.addf %149, %150 : vector<8x128xf32>
    %cst_56 = arith.constant 5.000000e-01 : f32
    %152 = vector.broadcast %cst_56 : f32 to vector<8x128xf32>
    %153 = arith.mulf %152, %151 : vector<8x128xf32>
    %154 = vector.extract_strided_slice %141 {offsets = [0, 128], sizes = [8, 128], strides = [1, 1]} : vector<8x384xf32> to vector<8x128xf32>
    %155 = vector.extract_strided_slice %143 {offsets = [0, 128], sizes = [8, 128], strides = [1, 1]} : vector<8x384xf32> to vector<8x128xf32>
    %156 = arith.addf %154, %155 : vector<8x128xf32>
    %cst_57 = arith.constant 5.000000e-01 : f32
    %157 = vector.broadcast %cst_57 : f32 to vector<8x128xf32>
    %158 = arith.mulf %157, %156 : vector<8x128xf32>
    %159 = math.tanh %158 : vector<8x128xf32>
    %cst_58 = arith.constant 1.000000e+00 : f32
    %160 = vector.broadcast %cst_58 : f32 to vector<8x128xf32>
    %161 = arith.addf %159, %160 : vector<8x128xf32>
    %cst_59 = arith.constant 5.000000e-01 : f32
    %162 = vector.broadcast %cst_59 : f32 to vector<8x128xf32>
    %163 = arith.mulf %162, %161 : vector<8x128xf32>
    %164 = vector.extract_strided_slice %141 {offsets = [0, 256], sizes = [8, 128], strides = [1, 1]} : vector<8x384xf32> to vector<8x128xf32>
    %165 = vector.extract_strided_slice %143 {offsets = [0, 256], sizes = [8, 128], strides = [1, 1]} : vector<8x384xf32> to vector<8x128xf32>
    %166 = arith.addf %165, %17 : vector<8x128xf32>
    %167 = arith.mulf %153, %166 : vector<8x128xf32>
    %168 = arith.addf %164, %167 : vector<8x128xf32>
    %169 = math.tanh %168 : vector<8x128xf32>
    %cst_60 = arith.constant 1.000000e+00 : f32
    %170 = vector.broadcast %cst_60 : f32 to vector<8x128xf32>
    %171 = arith.subf %170, %163 : vector<8x128xf32>
    %172 = arith.mulf %171, %169 : vector<8x128xf32>
    %173 = arith.mulf %163, %138 : vector<8x128xf32>
    %174 = arith.addf %172, %173 : vector<8x128xf32>
    %c4_i32_61 = arith.constant 4 : i32
    %175 = arith.muli %arg1, %c4_i32_61 : i32
    %176 = arith.addi %175, %c3_i32 : i32
    %c9_i32_62 = arith.constant 9 : i32
    %177 = arith.cmpi slt, %176, %c9_i32_62 : i32
    %178 = arith.select %177, %174, %138 : vector<8x128xf32>
    %c4_i32_63 = arith.constant 4 : i32
    %c0_64 = arith.constant 0 : index
    %c0_65 = arith.constant 0 : index
    %179 = vector.load %arg13[%c0_64, %c0_65] : memref<8x128xf32, #tpu.memory_space<vmem>>, vector<8x128xf32>
    tpu.vector_store %arg13[%c0_64, %c0_65], %178 {strides = array<i32>} : memref<8x128xf32, #tpu.memory_space<vmem>>, vector<8x128xf32>,
    %c2_i32_66 = arith.constant 2 : i32
    %180 = arith.cmpi eq, %arg1, %c2_i32_66 : i32
    %181 = arith.extui %180 : i1 to i32
    %c0_i32_67 = arith.constant 0 : i32
    %182 = arith.cmpi ne, %181, %c0_i32_67 : i32
    scf.if %182 {
      %c0_68 = arith.constant 0 : index
      %c0_69 = arith.constant 0 : index
      %183 = vector.load %arg11[%c0_68, %c0_69] : memref<8x128xf32, #tpu.memory_space<vmem>>, vector<8x128xf32>
      tpu.vector_store %arg11[%c0_68, %c0_69], %178 {strides = array<i32>} : memref<8x128xf32, #tpu.memory_space<vmem>>, vector<8x128xf32>,
      %184 = arith.truncf %178 : vector<8x128xf32> to vector<8x128xbf16>
      %c0_70 = arith.constant 0 : index
      %c0_71 = arith.constant 0 : index
      %185 = vector.load %arg7[%c0_70, %c0_71] : memref<128x128xbf16, #tpu.memory_space<vmem>>, vector<128x128xbf16>
      %cst_72 = arith.constant dense<0.000000e+00> : vector<8x128xf32>
      %186 = tpu.matmul %184, %185, %cst_72 {dimension_numbers = #tpu.dot_dimension_numbers<[1], [0], [0], [1], [0, 0, 1, 1], [], []>} : vector<8x128xbf16>, vector<128x128xbf16>, vector<8x128xf32> -> vector<8x128xf32>
      %c0_73 = arith.constant 0 : index
      %c0_74 = arith.constant 0 : index
      %187 = vector.load %arg8[%c0_73, %c0_74] : memref<1x128xf32, #tpu.memory_space<vmem>>, vector<1x128xf32>
      %188 = vector.broadcast %187 : vector<1x128xf32> to vector<8x128xf32>
      %189 = arith.addf %186, %188 : vector<8x128xf32>
      %c0_75 = arith.constant 0 : index
      %c0_76 = arith.constant 0 : index
      %190 = vector.load %arg10[%c0_75, %c0_76] : memref<8x128xf32, #tpu.memory_space<vmem>>, vector<8x128xf32>
      tpu.vector_store %arg10[%c0_75, %c0_76], %189 {strides = array<i32>} : memref<8x128xf32, #tpu.memory_space<vmem>>, vector<8x128xf32>,
      %191 = tpu.iota {dimensions = array<i32: 1>} : vector<8x128xi32>
      %c4_i32_77 = arith.constant 4 : i32
      %192 = vector.broadcast %c4_i32_77 : i32 to vector<8x128xi32>
      %193 = arith.cmpi slt, %191, %192 : vector<8x128xi32>
      %cst_78 = arith.constant -1.000000e+30 : f32
      %194 = vector.broadcast %cst_78 : f32 to vector<8x128xf32>
      %195 = arith.select %193, %189, %194 : vector<8x128xi1>, vector<8x128xf32>
      %cst_79 = arith.constant dense<0xFF800000> : vector<8xf32>
      %196 = vector.multi_reduction <maximumf>, %195, %cst_79 [1] : vector<8x128xf32> to vector<8xf32>
      %197 = vector.shape_cast %196 : vector<8xf32> to vector<8x1xf32>
      %198 = vector.broadcast %197 : vector<8x1xf32> to vector<8x128xf32>
      %199 = arith.subf %195, %198 : vector<8x128xf32>
      %200 = math.exp %199 : vector<8x128xf32>
      %cst_80 = arith.constant dense<0.000000e+00> : vector<8xf32>
      %201 = vector.multi_reduction <add>, %200, %cst_80 [1] : vector<8x128xf32> to vector<8xf32>
      %202 = vector.shape_cast %201 : vector<8xf32> to vector<8x1xf32>
      %203 = tpu.reciprocal %202 {approx = true} : vector<8x1xf32> -> vector<8x1xf32>
      %204 = vector.broadcast %203 : vector<8x1xf32> to vector<8x128xf32>
      %205 = arith.mulf %200, %204 : vector<8x128xf32>
      %c0_81 = arith.constant 0 : index
      %c0_82 = arith.constant 0 : index
      %206 = vector.load %arg9[%c0_81, %c0_82] : memref<8x128xf32, #tpu.memory_space<vmem>>, vector<8x128xf32>
      tpu.vector_store %arg9[%c0_81, %c0_82], %205 {strides = array<i32>} : memref<8x128xf32, #tpu.memory_space<vmem>>, vector<8x128xf32>,
    } else {
    }
    return
  }
  func.func @transform_0(%arg0: i32, %arg1: i32) -> (i32, i32, i32) {
    %c0_i32 = arith.constant 0 : i32
    %c0_i32_0 = arith.constant 0 : i32
    return %arg1, %arg0, %c0_i32 : i32, i32, i32
  }
  func.func @transform_1(%arg0: i32, %arg1: i32) -> (i32, i32) {
    %c0_i32 = arith.constant 0 : i32
    %c0_i32_0 = arith.constant 0 : i32
    %c0_i32_1 = arith.constant 0 : i32
    return %c0_i32, %c0_i32_0 : i32, i32
  }
  func.func @transform_2(%arg0: i32, %arg1: i32) -> (i32, i32) {
    %c0_i32 = arith.constant 0 : i32
    %c0_i32_0 = arith.constant 0 : i32
    %c0_i32_1 = arith.constant 0 : i32
    return %c0_i32, %c0_i32_0 : i32, i32
  }
  func.func @transform_3(%arg0: i32, %arg1: i32) -> (i32, i32) {
    %c0_i32 = arith.constant 0 : i32
    %c0_i32_0 = arith.constant 0 : i32
    %c0_i32_1 = arith.constant 0 : i32
    return %c0_i32, %c0_i32_0 : i32, i32
  }
  func.func @transform_4(%arg0: i32, %arg1: i32) -> (i32, i32) {
    %c0_i32 = arith.constant 0 : i32
    %c0_i32_0 = arith.constant 0 : i32
    %c0_i32_1 = arith.constant 0 : i32
    return %c0_i32, %c0_i32_0 : i32, i32
  }
  func.func @transform_5(%arg0: i32, %arg1: i32) -> (i32, i32) {
    %c0_i32 = arith.constant 0 : i32
    %c0_i32_0 = arith.constant 0 : i32
    %c0_i32_1 = arith.constant 0 : i32
    return %c0_i32, %c0_i32_0 : i32, i32
  }
  func.func @transform_6(%arg0: i32, %arg1: i32) -> (i32, i32) {
    %c0_i32 = arith.constant 0 : i32
    %c0_i32_0 = arith.constant 0 : i32
    %c0_i32_1 = arith.constant 0 : i32
    return %c0_i32, %c0_i32_0 : i32, i32
  }
  func.func @transform_7(%arg0: i32, %arg1: i32) -> (i32, i32) {
    %c0_i32 = arith.constant 0 : i32
    %c0_i32_0 = arith.constant 0 : i32
    return %arg0, %c0_i32 : i32, i32
  }
  func.func @transform_8(%arg0: i32, %arg1: i32) -> (i32, i32) {
    %c0_i32 = arith.constant 0 : i32
    %c0_i32_0 = arith.constant 0 : i32
    return %arg0, %c0_i32 : i32, i32
  }
  func.func @transform_9(%arg0: i32, %arg1: i32) -> (i32, i32) {
    %c0_i32 = arith.constant 0 : i32
    %c0_i32_0 = arith.constant 0 : i32
    return %arg0, %c0_i32 : i32, i32
  }
}

</mosaic_0001>

<llo_original>
// kernel: tpu_custom_call.1
$region0: #{tpu_custom_call.1}
  #allocation0 [shape = 'u32[]', space=smem, size = 0x4, offset = 0x4, fixed_abs, tag = 'smem constant byte address 0x4 - core index']
  #allocation1 [shape = 'u32[144,128]{1,0:T(1,128)}', space=vmem, size = 0x12000, scoped, tag = 'internal scratch']
  #allocation2 [shape = 'f32[4,8,384]{2,1,0:T(8,128)}', space=vmem, size = 0xc000, scoped, tag = 'scratch operand']
  #allocation3 [shape = 'f32[8,128]{1,0:T(8,128)}', space=vmem, size = 0x1000, scoped, tag = 'scratch operand']
  %s0 = inlined_call_operand.hbm [shape: bf16[12,8,128], index: 0, kind: input, shape index: {}]
  %s1 = inlined_call_operand.hbm [shape: bf16[128,384], index: 1, kind: input, shape index: {}]
  %s2 = inlined_call_operand.hbm [shape: bf16[128,384], index: 2, kind: input, shape index: {}]
  %s3 = inlined_call_operand.vmem [shape: f32[1,384], index: 3, kind: input, shape index: {}]
  %s4 = inlined_call_operand.vmem [shape: f32[1,128], index: 4, kind: input, shape index: {}]
  %s5 = inlined_call_operand.hbm [shape: bf16[128,128], index: 5, kind: input, shape index: {}]
  %s6 = inlined_call_operand.vmem [shape: f32[1,128], index: 6, kind: input, shape index: {}]
  %s7 = inlined_call_operand.hbm [shape: f32[8,128], index: 7, kind: output, shape index: {0}]
  %s8 = inlined_call_operand.hbm [shape: f32[8,128], index: 8, kind: output, shape index: {1}]
  %s9 = inlined_call_operand.hbm [shape: f32[8,128], index: 9, kind: output, shape index: {2}]
  %10 = xla_tuple %s7, %s8, %s9
  %s11 = sld [smem:[#allocation0]]
  $region101: #{tpu_custom_call.1} parent=0
    _
  %s13 = ssub.s32 1, %s11
  %s14 = scalar_select 0, %s13, %s11
  $region1: #{tpu_custom_call.1} parent=0
    #allocation4 [shape = 'u8[16384]{0}', space=vmem, size = 0x4000, scoped, tag = 'input window, operand 0']
    #allocation5 [shape = 's32[2]{0}', space=sflag, size = 0x8, scoped, tag = 'scoped memory for tpu_custom_call.1']
    #allocation6 [shape = 's32[2]{0}', space=sflag, size = 0x8, scoped, tag = 'scoped memory for tpu_custom_call.1']
    #allocation7 [shape = 'u8[98304]{0}', space=vmem, size = 0x18000, scoped, tag = 'input window, operand 1, single buffered']
    #allocation8 [shape = 's32[1]{0}', space=sflag, size = 0x4, scoped, tag = 'scoped memory for tpu_custom_call.1']
    #allocation9 [shape = 'u8[98304]{0}', space=vmem, size = 0x18000, scoped, tag = 'input window, operand 2, single buffered']
    #allocation10 [shape = 'u8[32768]{0}', space=vmem, size = 0x8000, scoped, tag = 'input window, operand 5, single buffered']
    #allocation11 [shape = 's32[1]{0}', space=sflag, size = 0x4, scoped, tag = 'scoped memory for tpu_custom_call.1']
    #allocation12 [shape = 'u8[4096]{0}', space=vmem, size = 0x1000, scoped, tag = 'output window, operand 0, single buffered']
    #allocation13 [shape = 'u8[4096]{0}', space=vmem, size = 0x1000, scoped, tag = 'output window, operand 1, single buffered']
    #allocation14 [shape = 's32[1]{0}', space=sflag, size = 0x4, scoped, tag = 'scoped memory for tpu_custom_call.1']
    #allocation15 [shape = 'u8[4096]{0}', space=vmem, size = 0x1000, scoped, tag = 'output window, operand 2, single buffered']
    %15 = vsyncpa [#allocation5], 0
    %s16 = scalar_lea.sflag [#allocation5], 1
    %17 = vsyncpa %s16, 0
    %18 = vsyncpa [#allocation8], 0
    %19 = vsyncpa [#allocation11], 0
    %20 = vsyncpa [#allocation6], 0
    %21 = vsyncpa [#allocation14], 0
    loop: start=0, step=1, limit=5
    $region2: #{tpu_custom_call.1} parent=1 // loop_pre_header
      _
    $region3: #{tpu_custom_call.1} parent=1 // loop_header
      %s23 = sphi 0, %s27
      %p24 = scmp.ge.s32.totalorder %s23, 5
      %s30 = sphi 0, %s42
      %s31 = sphi 0, %s38
      %s32 = sphi 0, %s30
      %s33 = sphi 0, %s31
      %s34 = sphi 0, %s32
      %s35 = sphi 0, %s33
      %s47 = sphi 0, %s49
      %s50 = sphi 0, %s47
      %s51 = sphi 0, %s50
      %s67 = sphi 0, %s51
      %s71 = sphi 0, %s71
      %s73 = sphi 0, %s71
      %s74 = sphi 0, %s73
      %s88 = sphi 0, %s74
      %s92 = sphi 0, %s92
      %s94 = sphi 0, %s92
      %s95 = sphi 0, %s94
      %s109 = sphi 0, %s95
      %s113 = sphi 0, %s113
      %s115 = sphi 0, %s113
      %s116 = sphi 0, %s115
      %s130 = sphi 0, %s116
      %s134 = sphi 0, %s134
      %s136 = sphi 0, %s134
      %s137 = sphi 0, %s136
      %s151 = sphi 0, %s137
      %s155 = sphi 0, %s155
      %s157 = sphi 0, %s155
      %s158 = sphi 0, %s157
      %s172 = sphi 0, %s158
      %s176 = sphi 0, %s176
      %s178 = sphi 0, %s176
      %s179 = sphi 0, %s178
      %s193 = sphi 0, %s179
      %s199 = sphi 0, %s201
      %s202 = sphi 0, %s199
      %s203 = sphi 0, %s202
      %s219 = sphi 0, %s203
      %s225 = sphi 0, %s227
      %s228 = sphi 0, %s225
      %s229 = sphi 0, %s228
      %s245 = sphi 0, %s229
      %s251 = sphi 0, %s253
      %s254 = sphi 0, %s251
      %s255 = sphi 0, %s254
      %s271 = sphi 0, %s255
    $region4: #{tpu_custom_call.1} parent=1 // loop_header_branch
      %26 = sbr.rel (%p24) target = $region8
    $region5: #{tpu_custom_call.1} parent=1 // loop_body
      %s28 = ssub.s32 %s23, 1
      %s29 = ssub.s32 %s23, 2
      %s36 = sadd.s32 1, %s31
      %p37 = scmp.ge.s32.totalorder %s36, 3
      %s38 = scalar_select %p37, 0, %s36
      %s39 = sadd.s32 1, %s30
      %s40 = scalar_select %p37, %s39, %s30
      %p41 = scmp.ge.s32.totalorder %s40, 1
      %s42 = scalar_select %p41, 0, %s40
      %s43 = ssub.s32 %s31, %s38
      %s44 = ssub.s32 %s30, %s42
      %s45 = sor.u32 %s43, %s44
      %p46 = scmp.eq.s32.totalorder %s45, 0
      %s48 = sadd.s32 %s47, 1
      %s49 = scalar_select %p46, %s47, %s48
      %p52 = pneg %p46
      %p53 = scmp.eq.s32.totalorder %s23, 2
      %p54 = por %p52, %p53
      %p55 = scmp.ne.s32.totalorder %s47, %s50
      %p56 = scmp.eq.s32.totalorder %s23, 0
      %p57 = por %p55, %p56
      %p58 = scmp.ne.s32.totalorder %s47, %s50
      %p59 = scmp.eq.s32.totalorder %s28, 2
      %p60 = por %p58, %p59
      %p61 = scmp.ne.s32.totalorder %s50, %s51
      %p62 = scmp.eq.s32.totalorder %s28, 0
      %p63 = por %p61, %p62
      %p64 = scmp.ne.s32.totalorder %s50, %s51
      %p65 = scmp.eq.s32.totalorder %s29, 2
      %p66 = por %p64, %p65
      %p68 = scmp.ne.s32.totalorder %s51, %s67
      %p69 = scmp.eq.s32.totalorder %s29, 0
      %p70 = por %p68, %p69
      %s72 = sadd.s32 %s71, 1
      %p75 = scmp.eq.s32.totalorder %s23, 2
      %p76 = scmp.ne.s32.totalorder %s71, %s73
      %p77 = scmp.eq.s32.totalorder %s23, 0
      %p78 = por %p76, %p77
      %p79 = scmp.ne.s32.totalorder %s71, %s73
      %p80 = scmp.eq.s32.totalorder %s28, 2
      %p81 = por %p79, %p80
      %p82 = scmp.ne.s32.totalorder %s73, %s74
      %p83 = scmp.eq.s32.totalorder %s28, 0
      %p84 = por %p82, %p83
      %p85 = scmp.ne.s32.totalorder %s73, %s74
      %p86 = scmp.eq.s32.totalorder %s29, 2
      %p87 = por %p85, %p86
      %p89 = scmp.ne.s32.totalorder %s74, %s88
      %p90 = scmp.eq.s32.totalorder %s29, 0
      %p91 = por %p89, %p90
      %s93 = sadd.s32 %s92, 1
      %p96 = scmp.eq.s32.totalorder %s23, 2
      %p97 = scmp.ne.s32.totalorder %s92, %s94
      %p98 = scmp.eq.s32.totalorder %s23, 0
      %p99 = por %p97, %p98
      %p100 = scmp.ne.s32.totalorder %s92, %s94
      %p101 = scmp.eq.s32.totalorder %s28, 2
      %p102 = por %p100, %p101
      %p103 = scmp.ne.s32.totalorder %s94, %s95
      %p104 = scmp.eq.s32.totalorder %s28, 0
      %p105 = por %p103, %p104
      %p106 = scmp.ne.s32.totalorder %s94, %s95
      %p107 = scmp.eq.s32.totalorder %s29, 2
      %p108 = por %p106, %p107
      %p110 = scmp.ne.s32.totalorder %s95, %s109
      %p111 = scmp.eq.s32.totalorder %s29, 0
      %p112 = por %p110, %p111
      %s114 = sadd.s32 %s113, 1
      %p117 = scmp.eq.s32.totalorder %s23, 2
      %p118 = scmp.ne.s32.totalorder %s113, %s115
      %p119 = scmp.eq.s32.totalorder %s23, 0
      %p120 = por %p118, %p119
      %p121 = scmp.ne.s32.totalorder %s113, %s115
      %p122 = scmp.eq.s32.totalorder %s28, 2
      %p123 = por %p121, %p122
      %p124 = scmp.ne.s32.totalorder %s115, %s116
      %p125 = scmp.eq.s32.totalorder %s28, 0
      %p126 = por %p124, %p125
      %p127 = scmp.ne.s32.totalorder %s115, %s116
      %p128 = scmp.eq.s32.totalorder %s29, 2
      %p129 = por %p127, %p128
      %p131 = scmp.ne.s32.totalorder %s116, %s130
      %p132 = scmp.eq.s32.totalorder %s29, 0
      %p133 = por %p131, %p132
      %s135 = sadd.s32 %s134, 1
      %p138 = scmp.eq.s32.totalorder %s23, 2
      %p139 = scmp.ne.s32.totalorder %s134, %s136
      %p140 = scmp.eq.s32.totalorder %s23, 0
      %p141 = por %p139, %p140
      %p142 = scmp.ne.s32.totalorder %s134, %s136
      %p143 = scmp.eq.s32.totalorder %s28, 2
      %p144 = por %p142, %p143
      %p145 = scmp.ne.s32.totalorder %s136, %s137
      %p146 = scmp.eq.s32.totalorder %s28, 0
      %p147 = por %p145, %p146
      %p148 = scmp.ne.s32.totalorder %s136, %s137
      %p149 = scmp.eq.s32.totalorder %s29, 2
      %p150 = por %p148, %p149
      %p152 = scmp.ne.s32.totalorder %s137, %s151
      %p153 = scmp.eq.s32.totalorder %s29, 0
      %p154 = por %p152, %p153
      %s156 = sadd.s32 %s155, 1
      %p159 = scmp.eq.s32.totalorder %s23, 2
      %p160 = scmp.ne.s32.totalorder %s155, %s157
      %p161 = scmp.eq.s32.totalorder %s23, 0
      %p162 = por %p160, %p161
      %p163 = scmp.ne.s32.totalorder %s155, %s157
      %p164 = scmp.eq.s32.totalorder %s28, 2
      %p165 = por %p163, %p164
      %p166 = scmp.ne.s32.totalorder %s157, %s158
      %p167 = scmp.eq.s32.totalorder %s28, 0
      %p168 = por %p166, %p167
      %p169 = scmp.ne.s32.totalorder %s157, %s158
      %p170 = scmp.eq.s32.totalorder %s29, 2
      %p171 = por %p169, %p170
      %p173 = scmp.ne.s32.totalorder %s158, %s172
      %p174 = scmp.eq.s32.totalorder %s29, 0
      %p175 = por %p173, %p174
      %s177 = sadd.s32 %s176, 1
      %p180 = scmp.eq.s32.totalorder %s23, 2
      %p181 = scmp.ne.s32.totalorder %s176, %s178
      %p182 = scmp.eq.s32.totalorder %s23, 0
      %p183 = por %p181, %p182
      %p184 = scmp.ne.s32.totalorder %s176, %s178
      %p185 = scmp.eq.s32.totalorder %s28, 2
      %p186 = por %p184, %p185
      %p187 = scmp.ne.s32.totalorder %s178, %s179
      %p188 = scmp.eq.s32.totalorder %s28, 0
      %p189 = por %p187, %p188
      %p190 = scmp.ne.s32.totalorder %s178, %s179
      %p191 = scmp.eq.s32.totalorder %s29, 2
      %p192 = por %p190, %p191
      %p194 = scmp.ne.s32.totalorder %s179, %s193
      %p195 = scmp.eq.s32.totalorder %s29, 0
      %p196 = por %p194, %p195
      %s197 = ssub.s32 %s30, %s42
      %p198 = scmp.eq.s32.totalorder %s197, 0
      %s200 = sadd.s32 %s199, 1
      %s201 = scalar_select %p198, %s199, %s200
      %p204 = pneg %p198
      %p205 = scmp.eq.s32.totalorder %s23, 2
      %p206 = por %p204, %p205
      %p207 = scmp.ne.s32.totalorder %s199, %s202
      %p208 = scmp.eq.s32.totalorder %s23, 0
      %p209 = por %p207, %p208
      %p210 = scmp.ne.s32.totalorder %s199, %s202
      %p211 = scmp.eq.s32.totalorder %s28, 2
      %p212 = por %p210, %p211
      %p213 = scmp.ne.s32.totalorder %s202, %s203
      %p214 = scmp.eq.s32.totalorder %s28, 0
      %p215 = por %p213, %p214
      %p216 = scmp.ne.s32.totalorder %s202, %s203
      %p217 = scmp.eq.s32.totalorder %s29, 2
      %p218 = por %p216, %p217
      %p220 = scmp.ne.s32.totalorder %s203, %s219
      %p221 = scmp.eq.s32.totalorder %s29, 0
      %p222 = por %p220, %p221
      %s223 = ssub.s32 %s30, %s42
      %p224 = scmp.eq.s32.totalorder %s223, 0
      %s226 = sadd.s32 %s225, 1
      %s227 = scalar_select %p224, %s225, %s226
      %p230 = pneg %p224
      %p231 = scmp.eq.s32.totalorder %s23, 2
      %p232 = por %p230, %p231
      %p233 = scmp.ne.s32.totalorder %s225, %s228
      %p234 = scmp.eq.s32.totalorder %s23, 0
      %p235 = por %p233, %p234
      %p236 = scmp.ne.s32.totalorder %s225, %s228
      %p237 = scmp.eq.s32.totalorder %s28, 2
      %p238 = por %p236, %p237
      %p239 = scmp.ne.s32.totalorder %s228, %s229
      %p240 = scmp.eq.s32.totalorder %s28, 0
      %p241 = por %p239, %p240
      %p242 = scmp.ne.s32.totalorder %s228, %s229
      %p243 = scmp.eq.s32.totalorder %s29, 2
      %p244 = por %p242, %p243
      %p246 = scmp.ne.s32.totalorder %s229, %s245
      %p247 = scmp.eq.s32.totalorder %s29, 0
      %p248 = por %p246, %p247
      %s249 = ssub.s32 %s30, %s42
      %p250 = scmp.eq.s32.totalorder %s249, 0
      %s252 = sadd.s32 %s251, 1
      %s253 = scalar_select %p250, %s251, %s252
      %p256 = pneg %p250
      %p257 = scmp.eq.s32.totalorder %s23, 2
      %p258 = por %p256, %p257
      %p259 = scmp.ne.s32.totalorder %s251, %s254
      %p260 = scmp.eq.s32.totalorder %s23, 0
      %p261 = por %p259, %p260
      %p262 = scmp.ne.s32.totalorder %s251, %s254
      %p263 = scmp.eq.s32.totalorder %s28, 2
      %p264 = por %p262, %p263
      %p265 = scmp.ne.s32.totalorder %s254, %s255
      %p266 = scmp.eq.s32.totalorder %s28, 0
      %p267 = por %p265, %p266
      %p268 = scmp.ne.s32.totalorder %s254, %s255
      %p269 = scmp.eq.s32.totalorder %s29, 2
      %p270 = por %p268, %p269
      %p272 = scmp.ne.s32.totalorder %s255, %s271
      %p273 = scmp.eq.s32.totalorder %s29, 0
      %p274 = por %p272, %p273
      %p275 = scmp.le.s32.totalorder 1, %s23
      %p276 = scmp.lt.s32.totalorder %s23, 4
      %p277 = pnand %p275, %p276
      %p278 = pneg %p277
      // Predicated region
      $region9: #{tpu_custom_call.1} parent=5 // pred_check
        _
      $region10: #{tpu_custom_call.1} parent=5 // pred_check_branch
        %280 = sbr.rel (%p277) target = $region12
      $region11: #{tpu_custom_call.1} parent=5 // pred_region
        %s281 = ssub.s32 %s23, 1
        // Predicated region
        $region13: #{tpu_custom_call.1} parent=11 // pred_check
          %p282 = pneg %p84
        $region14: #{tpu_custom_call.1} parent=11 // pred_check_branch
          %284 = sbr.rel (%p282) target = $region16
        $region15: #{tpu_custom_call.1} parent=11 // pred_region
          %s286 = ssub.s32 3072, 3072
          %287 = vsyncadd [#allocation8], %s286
          %s288 = sshll.u32 [#allocation7], 4
          %s289 = int_to_ptr.vmem [resolvable:$true] %s288
          %294 = dma.hbm_to_vmem [thread:$0]  %s1, 3072, %s289, [#allocation8], 192, 192, 12
        $region16: #{tpu_custom_call.1} parent=11 // pred_fallthru
          _
        // Predicated region
        $region17: #{tpu_custom_call.1} parent=11 // pred_check
          %p295 = pneg %p105
        $region18: #{tpu_custom_call.1} parent=11 // pred_check_branch
          %297 = sbr.rel (%p295) target = $region20
        $region19: #{tpu_custom_call.1} parent=11 // pred_region
          %s299 = ssub.s32 3072, 3072
          %300 = vsyncadd [#allocation8], %s299
          %s301 = sshll.u32 [#allocation9], 4
          %s302 = int_to_ptr.vmem [resolvable:$true] %s301
          %307 = dma.hbm_to_vmem [thread:$0]  %s2, 3072, %s302, [#allocation8], 192, 192, 12
        $region20: #{tpu_custom_call.1} parent=11 // pred_fallthru
          _
        // Predicated region
        $region21: #{tpu_custom_call.1} parent=11 // pred_check
          %p308 = pneg %p126
        $region22: #{tpu_custom_call.1} parent=11 // pred_check_branch
          %310 = sbr.rel (%p308) target = $region24
        $region23: #{tpu_custom_call.1} parent=11 // pred_region
          _
        $region24: #{tpu_custom_call.1} parent=11 // pred_fallthru
          _
        // Predicated region
        $region25: #{tpu_custom_call.1} parent=11 // pred_check
          %p311 = pneg %p147
        $region26: #{tpu_custom_call.1} parent=11 // pred_check_branch
          %313 = sbr.rel (%p311) target = $region28
        $region27: #{tpu_custom_call.1} parent=11 // pred_region
          _
        $region28: #{tpu_custom_call.1} parent=11 // pred_fallthru
          _
        // Predicated region
        $region29: #{tpu_custom_call.1} parent=11 // pred_check
          %p314 = pneg %p168
        $region30: #{tpu_custom_call.1} parent=11 // pred_check_branch
          %316 = sbr.rel (%p314) target = $region32
        $region31: #{tpu_custom_call.1} parent=11 // pred_region
          %s318 = ssub.s32 1024, 1024
          %319 = vsyncadd [#allocation11], %s318
          %s320 = sshll.u32 [#allocation10], 4
          %s321 = int_to_ptr.vmem [resolvable:$true] %s320
          %326 = dma.hbm_to_vmem [thread:$0]  %s5, 1024, %s321, [#allocation11], 64, 64, 4
        $region32: #{tpu_custom_call.1} parent=11 // pred_fallthru
          _
        // Predicated region
        $region33: #{tpu_custom_call.1} parent=11 // pred_check
          %p327 = pneg %p189
        $region34: #{tpu_custom_call.1} parent=11 // pred_check_branch
          %329 = sbr.rel (%p327) target = $region36
        $region35: #{tpu_custom_call.1} parent=11 // pred_region
          _
        $region36: #{tpu_custom_call.1} parent=11 // pred_fallthru
          _
      $region12: #{tpu_custom_call.1} parent=5 // pred_fallthru
        _
      %p330 = scmp.lt.s32.totalorder %s23, 3
      // Predicated region
      $region37: #{tpu_custom_call.1} parent=5 // pred_check
        %p331 = pneg %p330
      $region38: #{tpu_custom_call.1} parent=5 // pred_check_branch
        %333 = sbr.rel (%p331) target = $region40
      $region39: #{tpu_custom_call.1} parent=5 // pred_region
        // Predicated region
        $region41: #{tpu_custom_call.1} parent=39 // pred_check
          %p334 = pneg %p57
        $region42: #{tpu_custom_call.1} parent=39 // pred_check_branch
          %336 = sbr.rel (%p334) target = $region44
        $region43: #{tpu_custom_call.1} parent=39 // pred_region
          %s337 = sand.u32 %s47, 1
          %s338 = scalar_lea.sflag [#allocation5], %s337
          %s339 = sand.u32 %s47, 1
          %s340 = smul.addr %s339, 16
          %s341 = scalar_lea.vmem [#allocation4], %s340
          %s342 = smul.u32 4, %s31
          %s344 = ssub.s32 256, 256
          %345 = vsyncadd %s338, %s344
          %s346 = sadd.s32 %s30, %s342
          %s347 = smul.addr %s346, 64
          %s348 = scalar_lea.hbm %s0, %s347
          %s349 = sshll.u32 %s341, 4
          %s350 = int_to_ptr.vmem [resolvable:$true] %s349
          %355 = dma.hbm_to_vmem [thread:$0]  %s348, 256, %s350, %s338, 64, 64, 4
        $region44: #{tpu_custom_call.1} parent=39 // pred_fallthru
          _
      $region40: #{tpu_custom_call.1} parent=5 // pred_fallthru
        _
      %p356 = scmp.le.s32.totalorder 1, %s23
      %p357 = scmp.lt.s32.totalorder %s23, 4
      %p358 = pnand %p356, %p357
      %p359 = pneg %p358
      // Predicated region
      $region45: #{tpu_custom_call.1} parent=5 // pred_check
        _
      $region46: #{tpu_custom_call.1} parent=5 // pred_check_branch
        %361 = sbr.rel (%p358) target = $region48
      $region47: #{tpu_custom_call.1} parent=5 // pred_region
        %s362 = ssub.s32 %s23, 1
        %s363 = sand.u32 %s50, 1
        %s364 = scalar_lea.sflag [#allocation5], %s363
        %s365 = sand.u32 %s50, 1
        %s366 = smul.addr %s365, 16
        %s367 = scalar_lea.vmem [#allocation4], %s366
        // Predicated region
        $region49: #{tpu_custom_call.1} parent=47 // pred_check
          %p368 = pneg %p63
        $region50: #{tpu_custom_call.1} parent=47 // pred_check_branch
          %370 = sbr.rel (%p368) target = $region52
        $region51: #{tpu_custom_call.1} parent=47 // pred_region
          %371 = dma.done %s364, 256
        $region52: #{tpu_custom_call.1} parent=47 // pred_fallthru
          _
        // Predicated region
        $region53: #{tpu_custom_call.1} parent=47 // pred_check
          %p372 = pneg %p84
        $region54: #{tpu_custom_call.1} parent=47 // pred_check_branch
          %374 = sbr.rel (%p372) target = $region56
        $region55: #{tpu_custom_call.1} parent=47 // pred_region
          %375 = dma.done [#allocation8], 3072
        $region56: #{tpu_custom_call.1} parent=47 // pred_fallthru
          _
        // Predicated region
        $region57: #{tpu_custom_call.1} parent=47 // pred_check
          %p376 = pneg %p105
        $region58: #{tpu_custom_call.1} parent=47 // pred_check_branch
          %378 = sbr.rel (%p376) target = $region60
        $region59: #{tpu_custom_call.1} parent=47 // pred_region
          %379 = dma.done [#allocation8], 3072
        $region60: #{tpu_custom_call.1} parent=47 // pred_fallthru
          _
        // Predicated region
        $region61: #{tpu_custom_call.1} parent=47 // pred_check
          %p380 = pneg %p168
        $region62: #{tpu_custom_call.1} parent=47 // pred_check_branch
          %382 = sbr.rel (%p380) target = $region64
        $region63: #{tpu_custom_call.1} parent=47 // pred_region
          %383 = dma.done [#allocation11], 1024
        $region64: #{tpu_custom_call.1} parent=47 // pred_fallthru
          _
        %s384 = sand.u32 %s50, 1
        %s385 = scalar_lea.sflag [#allocation5], %s384
        %s386 = sand.u32 %s50, 1
        %s387 = smul.addr %s386, 16
        %s388 = scalar_lea.vmem [#allocation4], %s387
        %p389 = pneg %p63
        %p390 = pneg %p60
        %p391 = pneg %p84
        %p392 = pneg %p81
        %p393 = pneg %p105
        %p394 = pneg %p102
        %p395 = pneg %p126
        %p396 = pneg %p123
        %p397 = pneg %p147
        %p398 = pneg %p144
        %p399 = pneg %p168
        %p400 = pneg %p165
        %p401 = pneg %p189
        %p402 = pneg %p186
        %p403 = pneg %p215
        %p404 = pneg %p212
        %p405 = pneg %p241
        %p406 = pneg %p238
        %p407 = pneg %p267
        %p408 = pneg %p264
        %s409 = smul.u32 4, %s33
        %p411 = scmp.eq.s32.totalorder %s33, 0
        // Predicated region
        $region65: #{tpu_custom_call.1} parent=47 // pred_check
          %p412 = pneg %p411
        $region66: #{tpu_custom_call.1} parent=47 // pred_check_branch
          %414 = sbr.rel (%p412) target = $region68
        $region67: #{tpu_custom_call.1} parent=47 // pred_region
          %415 = vst [vmem:[#allocation3] sm:$0xff] 0.0
        $region68: #{tpu_custom_call.1} parent=47 // pred_fallthru
          _
        %v416 = vld [vmem:[%s367] sm:$0xf]
        %v417 = vld [vmem:[%s367 + $0x4] sm:$0xf]
        %v418 = vld [vmem:[%s367 + $0x8] sm:$0xf]
        %v419 = vld [vmem:[%s367 + $0xc] sm:$0xf]
        %v420 = vunpack.c.l.bf16 %v416
        %v421 = vunpack.c.l.bf16 %v417
        %v422 = vunpack.c.l.bf16 %v418
        %v423 = vunpack.c.l.bf16 %v419
        %v424 = vpack.c.bf16 %v421, %v420
        %v425 = vpack.c.bf16 %v423, %v422
        %v426 = vld [vmem:[#allocation7] sm:$0xff]
        %v427 = vld [vmem:[#allocation7 + $0x8] sm:$0xf]
        %v428 = vld [vmem:[#allocation7 + $0xc] sm:$0xff]
        %v429 = vld [vmem:[#allocation7 + $0x14] sm:$0xf]
        %v430 = vld [vmem:[#allocation7 + $0x18] sm:$0xff]
        %v431 = vld [vmem:[#allocation7 + $0x20] sm:$0xf]
        %v432 = vld [vmem:[#allocation7 + $0x24] sm:$0xff]
        %v433 = vld [vmem:[#allocation7 + $0x2c] sm:$0xf]
        %v434 = vld [vmem:[#allocation7 + $0x30] sm:$0xff]
        %v435 = vld [vmem:[#allocation7 + $0x38] sm:$0xf]
        %v436 = vld [vmem:[#allocation7 + $0x3c] sm:$0xff]
        %v437 = vld [vmem:[#allocation7 + $0x44] sm:$0xf]
        %v438 = vld [vmem:[#allocation7 + $0x48] sm:$0xff]
        %v439 = vld [vmem:[#allocation7 + $0x50] sm:$0xf]
        %v440 = vld [vmem:[#allocation7 + $0x54] sm:$0xff]
        %v441 = vld [vmem:[#allocation7 + $0x5c] sm:$0xf]
        %v442 = vld [vmem:[#allocation7 + $0x60] sm:$0xff]
        %v443 = vld [vmem:[#allocation7 + $0x68] sm:$0xf]
        %v444 = vld [vmem:[#allocation7 + $0x6c] sm:$0xff]
        %v445 = vld [vmem:[#allocation7 + $0x74] sm:$0xf]
        %v446 = vld [vmem:[#allocation7 + $0x78] sm:$0xff]
        %v447 = vld [vmem:[#allocation7 + $0x80] sm:$0xf]
        %v448 = vld [vmem:[#allocation7 + $0x84] sm:$0xff]
        %v449 = vld [vmem:[#allocation7 + $0x8c] sm:$0xf]
        %v450 = vld [vmem:[#allocation7 + $0x90] sm:$0xff]
        %v451 = vld [vmem:[#allocation7 + $0x98] sm:$0xf]
        %v452 = vld [vmem:[#allocation7 + $0x9c] sm:$0xff]
        %v453 = vld [vmem:[#allocation7 + $0xa4] sm:$0xf]
        %v454 = vld [vmem:[#allocation7 + $0xa8] sm:$0xff]
        %v455 = vld [vmem:[#allocation7 + $0xb0] sm:$0xf]
        %v456 = vld [vmem:[#allocation7 + $0xb4] sm:$0xff]
        %v457 = vld [vmem:[#allocation7 + $0xbc] sm:$0xf]
        %v458 = vld [vmem:[%s3] sm:$0x7]
        %v460 = vlaneseq
        %v461 = vshrl.u32 %v460, 7
        %v462 = vsub.s32 0, %v461
        %v463 = vrot.slane %v458, %v462
        %v464 = vlaneseq
        %v465 = vshrl.u32 %v464, 7
        %v466 = vsub.s32 1, %v465
        %v467 = vrot.slane %v458, %v466
        %v468 = vlaneseq
        %v469 = vshrl.u32 %v468, 7
        %v470 = vsub.s32 2, %v469
        %v471 = vrot.slane %v458, %v470
        %v507 = vunpack.c.l.b16 %v426
        %v508 = vunpack.c.h.b16 %v426
        %v509 = vunpack.c.l.b16 %v427
        %v510 = vunpack.c.l.b16 %v428
        %v511 = vunpack.c.h.b16 %v428
        %v512 = vunpack.c.l.b16 %v429
        %v513 = vunpack.c.l.b16 %v430
        %v514 = vunpack.c.h.b16 %v430
        %v515 = vunpack.c.l.b16 %v431
        %v516 = vunpack.c.l.b16 %v432
        %v517 = vunpack.c.h.b16 %v432
        %v518 = vunpack.c.l.b16 %v433
        %v519 = vunpack.c.l.b16 %v434
        %v520 = vunpack.c.h.b16 %v434
        %v521 = vunpack.c.l.b16 %v435
        %v522 = vunpack.c.l.b16 %v436
        %v523 = vunpack.c.h.b16 %v436
        %v524 = vunpack.c.l.b16 %v437
        %v525 = vunpack.c.l.b16 %v438
        %v526 = vunpack.c.h.b16 %v438
        %v527 = vunpack.c.l.b16 %v439
        %v528 = vunpack.c.l.b16 %v440
        %v529 = vunpack.c.h.b16 %v440
        %v530 = vunpack.c.l.b16 %v441
        %v531 = vunpack.c.l.b16 %v442
        %v532 = vunpack.c.h.b16 %v442
        %v533 = vunpack.c.l.b16 %v443
        %v534 = vunpack.c.l.b16 %v444
        %v535 = vunpack.c.h.b16 %v444
        %v536 = vunpack.c.l.b16 %v445
        %v537 = vunpack.c.l.b16 %v446
        %v538 = vunpack.c.h.b16 %v446
        %v539 = vunpack.c.l.b16 %v447
        %v540 = vunpack.c.l.b16 %v448
        %v541 = vunpack.c.h.b16 %v448
        %v542 = vunpack.c.l.b16 %v449
        %v543 = vunpack.c.l.b16 %v450
        %v544 = vunpack.c.h.b16 %v450
        %v545 = vunpack.c.l.b16 %v451
        %v546 = vunpack.c.l.b16 %v452
        %v547 = vunpack.c.h.b16 %v452
        %v548 = vunpack.c.l.b16 %v453
        %v549 = vunpack.c.l.b16 %v454
        %v550 = vunpack.c.h.b16 %v454
        %v551 = vunpack.c.l.b16 %v455
        %v552 = vunpack.c.l.b16 %v456
        %v553 = vunpack.c.h.b16 %v456
        %v554 = vunpack.c.l.b16 %v457
        %v555 = vpack.c.b16 %v510, %v507
        %v556 = vpack.c.b16 %v511, %v508
        %v557 = vpack.c.b16 %v512, %v509
        %v558 = vpack.c.b16 %v516, %v513
        %v559 = vpack.c.b16 %v517, %v514
        %v560 = vpack.c.b16 %v518, %v515
        %v561 = vpack.c.b16 %v522, %v519
        %v562 = vpack.c.b16 %v523, %v520
        %v563 = vpack.c.b16 %v524, %v521
        %v564 = vpack.c.b16 %v528, %v525
        %v565 = vpack.c.b16 %v529, %v526
        %v566 = vpack.c.b16 %v530, %v527
        %v567 = vpack.c.b16 %v534, %v531
        %v568 = vpack.c.b16 %v535, %v532
        %v569 = vpack.c.b16 %v536, %v533
        %v570 = vpack.c.b16 %v540, %v537
        %v571 = vpack.c.b16 %v541, %v538
        %v572 = vpack.c.b16 %v542, %v539
        %v573 = vpack.c.b16 %v546, %v543
        %v574 = vpack.c.b16 %v547, %v544
        %v575 = vpack.c.b16 %v548, %v545
        %v576 = vpack.c.b16 %v552, %v549
        %v577 = vpack.c.b16 %v553, %v550
        %v578 = vpack.c.b16 %v554, %v551
        %603 = vmatprep.subr.bf16.mxu0 %v577
        %604 = vmatpush1.bf16.msra.mxu0 %v576
        %605 = vmatprep.subr.bf16.mxu0 %v574
        %606 = vmatpush1.bf16.msra.mxu0 %v573
        %607 = vmatprep.subr.bf16.mxu0 %v571
        %608 = vmatpush1.bf16.msra.mxu0 %v570
        %609 = vmatprep.subr.bf16.mxu0 %v568
        %610 = vmatpush1.bf16.msra.mxu0 %v567
        %611 = vmatprep.subr.bf16.mxu0 %v565
        %612 = vmatpush1.bf16.msra.mxu0 %v564
        %613 = vmatprep.subr.bf16.mxu0 %v562
        %614 = vmatpush1.bf16.msra.mxu0 %v561
        %615 = vmatprep.subr.bf16.mxu0 %v559
        %616 = vmatpush1.bf16.msra.mxu0 %v558
        %617 = vmatprep.subr.bf16.mxu0 %v556
        %618 = vmatpush1.bf16.msra.mxu0 %v555
        %619 = vmatprep.subr.bf16.mxu0 0
        %620 = vmatpush2.bf16.msra.mxu0 0
        %621 = vmatprep.subr.bf16.mxu0 0
        %622 = vmatpush2.bf16.msra.mxu0 0
        %623 = vmatprep.subr.bf16.mxu0 0
        %624 = vmatpush2.bf16.msra.mxu0 0
        %625 = vmatprep.subr.bf16.mxu0 0
        %626 = vmatpush2.bf16.msra.mxu0 0
        %627 = vmatprep.subr.bf16.mxu0 0
        %628 = vmatpush2.bf16.msra.mxu0 0
        %629 = vmatprep.subr.bf16.mxu0 0
        %630 = vmatpush2.bf16.msra.mxu0 0
        %631 = vmatprep.subr.bf16.mxu0 0
        %632 = vmatpush2.bf16.msra.mxu0 0
        %633 = vmatprep.subr.bf16.mxu0 0
        %634 = vmatpush2.bf16.msra.mxu0 0
        %635 = vmatprep.mubr.bf16.mxu0 0
        %636 = vmatmul.mubr.bf16.gmra.mxu0 %v424
        %v637 = vpop.f32.mrf.mxu0
        %v638 = vadd.f32 %v463, %v637
        %v639 = vpop.f32.mrf.mxu0
        %v640 = vadd.f32 %v467, %v639
        %v641 = vpop.f32.mrf.mxu0
        %v642 = vadd.f32 %v463, %v641
        %v643 = vpop.f32.mrf.mxu0
        %v644 = vadd.f32 %v467, %v643
        %645 = vmatprep.mubr.bf16.mxu0 0
        %646 = vmatmul.mubr.bf16.gmra.mxu0 %v425
        %v647 = vpop.f32.mrf.mxu0
        %v648 = vadd.f32 %v463, %v647
        %v649 = vpop.f32.mrf.mxu0
        %v650 = vadd.f32 %v467, %v649
        %v651 = vpop.f32.mrf.mxu0
        %v652 = vadd.f32 %v463, %v651
        %v653 = vpop.f32.mrf.mxu0
        %v654 = vadd.f32 %v467, %v653
        %655 = vdwg.mxu0
        %656 = vmatprep.subr.bf16.mxu0 0
        %657 = vmatpush1.bf16.msra.mxu0 %v578
        %658 = vmatprep.subr.bf16.mxu0 0
        %659 = vmatpush1.bf16.msra.mxu0 %v575
        %660 = vmatprep.subr.bf16.mxu0 0
        %661 = vmatpush1.bf16.msra.mxu0 %v572
        %662 = vmatprep.subr.bf16.mxu0 0
        %663 = vmatpush1.bf16.msra.mxu0 %v569
        %664 = vmatprep.subr.bf16.mxu0 0
        %665 = vmatpush1.bf16.msra.mxu0 %v566
        %666 = vmatprep.subr.bf16.mxu0 0
        %667 = vmatpush1.bf16.msra.mxu0 %v563
        %668 = vmatprep.subr.bf16.mxu0 0
        %669 = vmatpush1.bf16.msra.mxu0 %v560
        %670 = vmatprep.subr.bf16.mxu0 0
        %671 = vmatpush1.bf16.msra.mxu0 %v557
        %672 = vmatprep.subr.bf16.mxu0 0
        %673 = vmatpush2.bf16.msra.mxu0 0
        %674 = vmatprep.subr.bf16.mxu0 0
        %675 = vmatpush2.bf16.msra.mxu0 0
        %676 = vmatprep.subr.bf16.mxu0 0
        %677 = vmatpush2.bf16.msra.mxu0 0
        %678 = vmatprep.subr.bf16.mxu0 0
        %679 = vmatpush2.bf16.msra.mxu0 0
        %680 = vmatprep.subr.bf16.mxu0 0
        %681 = vmatpush2.bf16.msra.mxu0 0
        %682 = vmatprep.subr.bf16.mxu0 0
        %683 = vmatpush2.bf16.msra.mxu0 0
        %684 = vmatprep.subr.bf16.mxu0 0
        %685 = vmatpush2.bf16.msra.mxu0 0
        %686 = vmatprep.subr.bf16.mxu0 0
        %687 = vmatpush2.bf16.msra.mxu0 0
        %688 = vmatprep.mubr.bf16.mxu0 0
        %689 = vmatmul.mubr.bf16.gmra.mxu0 %v424
        %v690 = vpop.f32.mrf.mxu0
        %v691 = vadd.f32 %v471, %v690
        %v692 = vpop.f32.mrf.mxu0
        %v693 = vpop.f32.mrf.mxu0
        %v694 = vadd.f32 %v471, %v693
        %v695 = vpop.f32.mrf.mxu0
        %696 = vmatprep.mubr.bf16.mxu0 0
        %697 = vmatmul.mubr.bf16.gmra.mxu0 %v425
        %v698 = vpop.f32.mrf.mxu0
        %v699 = vadd.f32 %v471, %v698
        %v700 = vpop.f32.mrf.mxu0
        %v701 = vpop.f32.mrf.mxu0
        %v702 = vadd.f32 %v471, %v701
        %v703 = vpop.f32.mrf.mxu0
        %704 = vdwg.mxu0
        %705 = vst [vmem:[#allocation2] sm:$0xff] %v638
        %706 = vst [vmem:[#allocation2 + $0x8] sm:$0xff] %v640
        %707 = vst [vmem:[#allocation2 + $0x10] sm:$0xff] %v691
        %708 = vst [vmem:[#allocation2 + $0x18] sm:$0xff] %v642
        %709 = vst [vmem:[#allocation2 + $0x20] sm:$0xff] %v644
        %710 = vst [vmem:[#allocation2 + $0x28] sm:$0xff] %v694
        %711 = vst [vmem:[#allocation2 + $0x30] sm:$0xff] %v648
        %712 = vst [vmem:[#allocation2 + $0x38] sm:$0xff] %v650
        %713 = vst [vmem:[#allocation2 + $0x40] sm:$0xff] %v699
        %714 = vst [vmem:[#allocation2 + $0x48] sm:$0xff] %v652
        %715 = vst [vmem:[#allocation2 + $0x50] sm:$0xff] %v654
        %716 = vst [vmem:[#allocation2 + $0x58] sm:$0xff] %v702
        %v717 = vld [vmem:[#allocation9] sm:$0xff]
        %v718 = vld [vmem:[#allocation9 + $0x8] sm:$0xf]
        %v719 = vld [vmem:[#allocation9 + $0xc] sm:$0xff]
        %v720 = vld [vmem:[#allocation9 + $0x14] sm:$0xf]
        %v721 = vld [vmem:[#allocation9 + $0x18] sm:$0xff]
        %v722 = vld [vmem:[#allocation9 + $0x20] sm:$0xf]
        %v723 = vld [vmem:[#allocation9 + $0x24] sm:$0xff]
        %v724 = vld [vmem:[#allocation9 + $0x2c] sm:$0xf]
        %v725 = vld [vmem:[#allocation9 + $0x30] sm:$0xff]
        %v726 = vld [vmem:[#allocation9 + $0x38] sm:$0xf]
        %v727 = vld [vmem:[#allocation9 + $0x3c] sm:$0xff]
        %v728 = vld [vmem:[#allocation9 + $0x44] sm:$0xf]
        %v729 = vld [vmem:[#allocation9 + $0x48] sm:$0xff]
        %v730 = vld [vmem:[#allocation9 + $0x50] sm:$0xf]
        %v731 = vld [vmem:[#allocation9 + $0x54] sm:$0xff]
        %v732 = vld [vmem:[#allocation9 + $0x5c] sm:$0xf]
        %v733 = vld [vmem:[#allocation9 + $0x60] sm:$0xff]
        %v734 = vld [vmem:[#allocation9 + $0x68] sm:$0xf]
        %v735 = vld [vmem:[#allocation9 + $0x6c] sm:$0xff]
        %v736 = vld [vmem:[#allocation9 + $0x74] sm:$0xf]
        %v737 = vld [vmem:[#allocation9 + $0x78] sm:$0xff]
        %v738 = vld [vmem:[#allocation9 + $0x80] sm:$0xf]
        %v739 = vld [vmem:[#allocation9 + $0x84] sm:$0xff]
        %v740 = vld [vmem:[#allocation9 + $0x8c] sm:$0xf]
        %v741 = vld [vmem:[#allocation9 + $0x90] sm:$0xff]
        %v742 = vld [vmem:[#allocation9 + $0x98] sm:$0xf]
        %v743 = vld [vmem:[#allocation9 + $0x9c] sm:$0xff]
        %v744 = vld [vmem:[#allocation9 + $0xa4] sm:$0xf]
        %v745 = vld [vmem:[#allocation9 + $0xa8] sm:$0xff]
        %v746 = vld [vmem:[#allocation9 + $0xb0] sm:$0xf]
        %v747 = vld [vmem:[#allocation9 + $0xb4] sm:$0xff]
        %v748 = vld [vmem:[#allocation9 + $0xbc] sm:$0xf]
        %v749 = vld [vmem:[%s4] sm:$0x1]
        %v751 = vlaneseq
        %v752 = vshrl.u32 %v751, 7
        %v753 = vsub.s32 0, %v752
        %v754 = vrot.slane %v749, %v753
        %v756 = vld [vmem:[#allocation3] sm:$0xff]
        %v757 = vld [vmem:[#allocation2] sm:$0xff]
        %v758 = vld [vmem:[#allocation2 + $0x8] sm:$0xff]
        %v759 = vld [vmem:[#allocation2 + $0x10] sm:$0xff]
        %v760 = vpack.c.bf16 %v756, %v756
        %v793 = vunpack.c.l.b16 %v717
        %v794 = vunpack.c.h.b16 %v717
        %v795 = vunpack.c.l.b16 %v718
        %v796 = vunpack.c.l.b16 %v719
        %v797 = vunpack.c.h.b16 %v719
        %v798 = vunpack.c.l.b16 %v720
        %v799 = vunpack.c.l.b16 %v721
        %v800 = vunpack.c.h.b16 %v721
        %v801 = vunpack.c.l.b16 %v722
        %v802 = vunpack.c.l.b16 %v723
        %v803 = vunpack.c.h.b16 %v723
        %v804 = vunpack.c.l.b16 %v724
        %v805 = vunpack.c.l.b16 %v725
        %v806 = vunpack.c.h.b16 %v725
        %v807 = vunpack.c.l.b16 %v726
        %v808 = vunpack.c.l.b16 %v727
        %v809 = vunpack.c.h.b16 %v727
        %v810 = vunpack.c.l.b16 %v728
        %v811 = vunpack.c.l.b16 %v729
        %v812 = vunpack.c.h.b16 %v729
        %v813 = vunpack.c.l.b16 %v730
        %v814 = vunpack.c.l.b16 %v731
        %v815 = vunpack.c.h.b16 %v731
        %v816 = vunpack.c.l.b16 %v732
        %v817 = vunpack.c.l.b16 %v733
        %v818 = vunpack.c.h.b16 %v733
        %v819 = vunpack.c.l.b16 %v734
        %v820 = vunpack.c.l.b16 %v735
        %v821 = vunpack.c.h.b16 %v735
        %v822 = vunpack.c.l.b16 %v736
        %v823 = vunpack.c.l.b16 %v737
        %v824 = vunpack.c.h.b16 %v737
        %v825 = vunpack.c.l.b16 %v738
        %v826 = vunpack.c.l.b16 %v739
        %v827 = vunpack.c.h.b16 %v739
        %v828 = vunpack.c.l.b16 %v740
        %v829 = vunpack.c.l.b16 %v741
        %v830 = vunpack.c.h.b16 %v741
        %v831 = vunpack.c.l.b16 %v742
        %v832 = vunpack.c.l.b16 %v743
        %v833 = vunpack.c.h.b16 %v743
        %v834 = vunpack.c.l.b16 %v744
        %v835 = vunpack.c.l.b16 %v745
        %v836 = vunpack.c.h.b16 %v745
        %v837 = vunpack.c.l.b16 %v746
        %v838 = vunpack.c.l.b16 %v747
        %v839 = vunpack.c.h.b16 %v747
        %v840 = vunpack.c.l.b16 %v748
        %v841 = vpack.c.b16 %v796, %v793
        %v842 = vpack.c.b16 %v797, %v794
        %v843 = vpack.c.b16 %v798, %v795
        %v844 = vpack.c.b16 %v802, %v799
        %v845 = vpack.c.b16 %v803, %v800
        %v846 = vpack.c.b16 %v804, %v801
        %v847 = vpack.c.b16 %v808, %v805
        %v848 = vpack.c.b16 %v809, %v806
        %v849 = vpack.c.b16 %v810, %v807
        %v850 = vpack.c.b16 %v814, %v811
        %v851 = vpack.c.b16 %v815, %v812
        %v852 = vpack.c.b16 %v816, %v813
        %v853 = vpack.c.b16 %v820, %v817
        %v854 = vpack.c.b16 %v821, %v818
        %v855 = vpack.c.b16 %v822, %v819
        %v856 = vpack.c.b16 %v826, %v823
        %v857 = vpack.c.b16 %v827, %v824
        %v858 = vpack.c.b16 %v828, %v825
        %v859 = vpack.c.b16 %v832, %v829
        %v860 = vpack.c.b16 %v833, %v830
        %v861 = vpack.c.b16 %v834, %v831
        %v862 = vpack.c.b16 %v838, %v835
        %v863 = vpack.c.b16 %v839, %v836
        %v864 = vpack.c.b16 %v840, %v837
        %889 = vmatprep.subr.bf16.mxu0 %v863
        %890 = vmatpush1.bf16.msra.mxu0 %v862
        %891 = vmatprep.subr.bf16.mxu0 %v860
        %892 = vmatpush1.bf16.msra.mxu0 %v859
        %893 = vmatprep.subr.bf16.mxu0 %v857
        %894 = vmatpush1.bf16.msra.mxu0 %v856
        %895 = vmatprep.subr.bf16.mxu0 %v854
        %896 = vmatpush1.bf16.msra.mxu0 %v853
        %897 = vmatprep.subr.bf16.mxu0 %v851
        %898 = vmatpush1.bf16.msra.mxu0 %v850
        %899 = vmatprep.subr.bf16.mxu0 %v848
        %900 = vmatpush1.bf16.msra.mxu0 %v847
        %901 = vmatprep.subr.bf16.mxu0 %v845
        %902 = vmatpush1.bf16.msra.mxu0 %v844
        %903 = vmatprep.subr.bf16.mxu0 %v842
        %904 = vmatpush1.bf16.msra.mxu0 %v841
        %905 = vmatprep.subr.bf16.mxu0 0
        %906 = vmatpush2.bf16.msra.mxu0 0
        %907 = vmatprep.subr.bf16.mxu0 0
        %908 = vmatpush2.bf16.msra.mxu0 0
        %909 = vmatprep.subr.bf16.mxu0 0
        %910 = vmatpush2.bf16.msra.mxu0 0
        %911 = vmatprep.subr.bf16.mxu0 0
        %912 = vmatpush2.bf16.msra.mxu0 0
        %913 = vmatprep.subr.bf16.mxu0 0
        %914 = vmatpush2.bf16.msra.mxu0 0
        %915 = vmatprep.subr.bf16.mxu0 0
        %916 = vmatpush2.bf16.msra.mxu0 0
        %917 = vmatprep.subr.bf16.mxu0 0
        %918 = vmatpush2.bf16.msra.mxu0 0
        %919 = vmatprep.subr.bf16.mxu0 0
        %920 = vmatpush2.bf16.msra.mxu0 0
        %921 = vmatprep.mubr.bf16.mxu0 0
        %922 = vmatmul.mubr.bf16.gmra.mxu0 %v760
        %v923 = vpop.f32.mrf.mxu0
        %v924 = vadd.f32 0.0, %v923
        %v925 = vpop.f32.mrf.mxu0
        %v926 = vadd.f32 0.0, %v925
        %v927 = vpop.f32.mrf.mxu0
        %v928 = vpop.f32.mrf.mxu0
        %929 = vdwg.mxu0
        %930 = vmatprep.subr.bf16.mxu0 0
        %931 = vmatpush1.bf16.msra.mxu0 %v864
        %932 = vmatprep.subr.bf16.mxu0 0
        %933 = vmatpush1.bf16.msra.mxu0 %v861
        %934 = vmatprep.subr.bf16.mxu0 0
        %935 = vmatpush1.bf16.msra.mxu0 %v858
        %936 = vmatprep.subr.bf16.mxu0 0
        %937 = vmatpush1.bf16.msra.mxu0 %v855
        %938 = vmatprep.subr.bf16.mxu0 0
        %939 = vmatpush1.bf16.msra.mxu0 %v852
        %940 = vmatprep.subr.bf16.mxu0 0
        %941 = vmatpush1.bf16.msra.mxu0 %v849
        %942 = vmatprep.subr.bf16.mxu0 0
        %943 = vmatpush1.bf16.msra.mxu0 %v846
        %944 = vmatprep.subr.bf16.mxu0 0
        %945 = vmatpush1.bf16.msra.mxu0 %v843
        %946 = vmatprep.subr.bf16.mxu0 0
        %947 = vmatpush2.bf16.msra.mxu0 0
        %948 = vmatprep.subr.bf16.mxu0 0
        %949 = vmatpush2.bf16.msra.mxu0 0
        %950 = vmatprep.subr.bf16.mxu0 0
        %951 = vmatpush2.bf16.msra.mxu0 0
        %952 = vmatprep.subr.bf16.mxu0 0
        %953 = vmatpush2.bf16.msra.mxu0 0
        %954 = vmatprep.subr.bf16.mxu0 0
        %955 = vmatpush2.bf16.msra.mxu0 0
        %956 = vmatprep.subr.bf16.mxu0 0
        %957 = vmatpush2.bf16.msra.mxu0 0
        %958 = vmatprep.subr.bf16.mxu0 0
        %959 = vmatpush2.bf16.msra.mxu0 0
        %960 = vmatprep.subr.bf16.mxu0 0
        %961 = vmatpush2.bf16.msra.mxu0 0
        %962 = vmatprep.mubr.bf16.mxu0 0
        %963 = vmatmul.mubr.bf16.gmra.mxu0 %v760
        %v964 = vpop.f32.mrf.mxu0
        %v965 = vadd.f32 0.0, %v964
        %v966 = vpop.f32.mrf.mxu0
        %v967 = vpop.f32.mrf.mxu0
        %v968 = vpop.f32.mrf.mxu0
        %969 = vdwg.mxu0
        %v970 = vadd.f32 %v757, %v924
        %v971 = vmul.f32 %v970, 0.5
        %v972 = vtanh.pop %v971
        %v973 = vadd.f32 %v972, 1.0
        %v974 = vmul.f32 %v973, 0.5
        %v975 = vadd.f32 %v758, %v926
        %v976 = vmul.f32 %v975, 0.5
        %v977 = vtanh.pop %v976
        %v978 = vadd.f32 %v977, 1.0
        %v979 = vmul.f32 %v978, 0.5
        %v980 = vadd.f32 %v965, %v754
        %v981 = vmul.f32 %v974, %v980
        %v982 = vadd.f32 %v759, %v981
        %v983 = vtanh.pop %v982
        %v984 = vsub.f32 1.0, %v979
        %v985 = vmul.f32 %v984, %v983
        %v986 = vmul.f32 %v979, %v756
        %v987 = vadd.f32 %v985, %v986
        %s988 = smul.u32 %s33, 4
        %p989 = scmp.lt.s32.totalorder %s988, 9
        %s990 = scalar_select %p989, 1, 0
        %v991 = vstv %s990
        %vm992 = vcmp.eq.s32.totalorder %v991, 1
        %v993 = vsel %vm992, %v987, %v756
        %s994 = scalar_lea.vmem [#allocation2], 24
        %v995 = vld [vmem:[%s994] sm:$0xff]
        %v996 = vld [vmem:[%s994 + $0x8] sm:$0xff]
        %v997 = vld [vmem:[%s994 + $0x10] sm:$0xff]
        %v998 = vpack.c.bf16 %v993, %v993
        %999 = vmatprep.subr.bf16.mxu0 %v863
        %1000 = vmatpush1.bf16.msra.mxu0 %v862
        %1001 = vmatprep.subr.bf16.mxu0 %v860
        %1002 = vmatpush1.bf16.msra.mxu0 %v859
        %1003 = vmatprep.subr.bf16.mxu0 %v857
        %1004 = vmatpush1.bf16.msra.mxu0 %v856
        %1005 = vmatprep.subr.bf16.mxu0 %v854
        %1006 = vmatpush1.bf16.msra.mxu0 %v853
        %1007 = vmatprep.subr.bf16.mxu0 %v851
        %1008 = vmatpush1.bf16.msra.mxu0 %v850
        %1009 = vmatprep.subr.bf16.mxu0 %v848
        %1010 = vmatpush1.bf16.msra.mxu0 %v847
        %1011 = vmatprep.subr.bf16.mxu0 %v845
        %1012 = vmatpush1.bf16.msra.mxu0 %v844
        %1013 = vmatprep.subr.bf16.mxu0 %v842
        %1014 = vmatpush1.bf16.msra.mxu0 %v841
        %1015 = vmatprep.subr.bf16.mxu0 0
        %1016 = vmatpush2.bf16.msra.mxu0 0
        %1017 = vmatprep.subr.bf16.mxu0 0
        %1018 = vmatpush2.bf16.msra.mxu0 0
        %1019 = vmatprep.subr.bf16.mxu0 0
        %1020 = vmatpush2.bf16.msra.mxu0 0
        %1021 = vmatprep.subr.bf16.mxu0 0
        %1022 = vmatpush2.bf16.msra.mxu0 0
        %1023 = vmatprep.subr.bf16.mxu0 0
        %1024 = vmatpush2.bf16.msra.mxu0 0
        %1025 = vmatprep.subr.bf16.mxu0 0
        %1026 = vmatpush2.bf16.msra.mxu0 0
        %1027 = vmatprep.subr.bf16.mxu0 0
        %1028 = vmatpush2.bf16.msra.mxu0 0
        %1029 = vmatprep.subr.bf16.mxu0 0
        %1030 = vmatpush2.bf16.msra.mxu0 0
        %1031 = vmatprep.mubr.bf16.mxu0 0
        %1032 = vmatmul.mubr.bf16.gmra.mxu0 %v998
        %v1033 = vpop.f32.mrf.mxu0
        %v1034 = vadd.f32 0.0, %v1033
        %v1035 = vpop.f32.mrf.mxu0
        %v1036 = vadd.f32 0.0, %v1035
        %v1037 = vpop.f32.mrf.mxu0
        %v1038 = vpop.f32.mrf.mxu0
        %1039 = vdwg.mxu0
        %1040 = vmatprep.subr.bf16.mxu0 0
        %1041 = vmatpush1.bf16.msra.mxu0 %v864
        %1042 = vmatprep.subr.bf16.mxu0 0
        %1043 = vmatpush1.bf16.msra.mxu0 %v861
        %1044 = vmatprep.subr.bf16.mxu0 0
        %1045 = vmatpush1.bf16.msra.mxu0 %v858
        %1046 = vmatprep.subr.bf16.mxu0 0
        %1047 = vmatpush1.bf16.msra.mxu0 %v855
        %1048 = vmatprep.subr.bf16.mxu0 0
        %1049 = vmatpush1.bf16.msra.mxu0 %v852
        %1050 = vmatprep.subr.bf16.mxu0 0
        %1051 = vmatpush1.bf16.msra.mxu0 %v849
        %1052 = vmatprep.subr.bf16.mxu0 0
        %1053 = vmatpush1.bf16.msra.mxu0 %v846
        %1054 = vmatprep.subr.bf16.mxu0 0
        %1055 = vmatpush1.bf16.msra.mxu0 %v843
        %1056 = vmatprep.subr.bf16.mxu0 0
        %1057 = vmatpush2.bf16.msra.mxu0 0
        %1058 = vmatprep.subr.bf16.mxu0 0
        %1059 = vmatpush2.bf16.msra.mxu0 0
        %1060 = vmatprep.subr.bf16.mxu0 0
        %1061 = vmatpush2.bf16.msra.mxu0 0
        %1062 = vmatprep.subr.bf16.mxu0 0
        %1063 = vmatpush2.bf16.msra.mxu0 0
        %1064 = vmatprep.subr.bf16.mxu0 0
        %1065 = vmatpush2.bf16.msra.mxu0 0
        %1066 = vmatprep.subr.bf16.mxu0 0
        %1067 = vmatpush2.bf16.msra.mxu0 0
        %1068 = vmatprep.subr.bf16.mxu0 0
        %1069 = vmatpush2.bf16.msra.mxu0 0
        %1070 = vmatprep.subr.bf16.mxu0 0
        %1071 = vmatpush2.bf16.msra.mxu0 0
        %1072 = vmatprep.mubr.bf16.mxu0 0
        %1073 = vmatmul.mubr.bf16.gmra.mxu0 %v998
        %v1074 = vpop.f32.mrf.mxu0
        %v1075 = vadd.f32 0.0, %v1074
        %v1076 = vpop.f32.mrf.mxu0
        %v1077 = vpop.f32.mrf.mxu0
        %v1078 = vpop.f32.mrf.mxu0
        %1079 = vdwg.mxu0
        %v1080 = vadd.f32 %v995, %v1034
        %v1081 = vmul.f32 %v1080, 0.5
        %v1082 = vtanh.pop %v1081
        %v1083 = vadd.f32 %v1082, 1.0
        %v1084 = vmul.f32 %v1083, 0.5
        %v1085 = vadd.f32 %v996, %v1036
        %v1086 = vmul.f32 %v1085, 0.5
        %v1087 = vtanh.pop %v1086
        %v1088 = vadd.f32 %v1087, 1.0
        %v1089 = vmul.f32 %v1088, 0.5
        %v1090 = vadd.f32 %v1075, %v754
        %v1091 = vmul.f32 %v1084, %v1090
        %v1092 = vadd.f32 %v997, %v1091
        %v1093 = vtanh.pop %v1092
        %v1094 = vsub.f32 1.0, %v1089
        %v1095 = vmul.f32 %v1094, %v1093
        %v1096 = vmul.f32 %v1089, %v993
        %v1097 = vadd.f32 %v1095, %v1096
        %s1098 = sadd.s32 %s988, 1
        %p1099 = scmp.lt.s32.totalorder %s1098, 9
        %s1100 = scalar_select %p1099, 1, 0
        %v1101 = vstv %s1100
        %vm1102 = vcmp.eq.s32.totalorder %v1101, 1
        %v1103 = vsel %vm1102, %v1097, %v993
        %s1104 = scalar_lea.vmem [#allocation2], 48
        %v1105 = vld [vmem:[%s1104] sm:$0xff]
        %v1106 = vld [vmem:[%s1104 + $0x8] sm:$0xff]
        %v1107 = vld [vmem:[%s1104 + $0x10] sm:$0xff]
        %v1108 = vpack.c.bf16 %v1103, %v1103
        %1109 = vmatprep.subr.bf16.mxu0 %v863
        %1110 = vmatpush1.bf16.msra.mxu0 %v862
        %1111 = vmatprep.subr.bf16.mxu0 %v860
        %1112 = vmatpush1.bf16.msra.mxu0 %v859
        %1113 = vmatprep.subr.bf16.mxu0 %v857
        %1114 = vmatpush1.bf16.msra.mxu0 %v856
        %1115 = vmatprep.subr.bf16.mxu0 %v854
        %1116 = vmatpush1.bf16.msra.mxu0 %v853
        %1117 = vmatprep.subr.bf16.mxu0 %v851
        %1118 = vmatpush1.bf16.msra.mxu0 %v850
        %1119 = vmatprep.subr.bf16.mxu0 %v848
        %1120 = vmatpush1.bf16.msra.mxu0 %v847
        %1121 = vmatprep.subr.bf16.mxu0 %v845
        %1122 = vmatpush1.bf16.msra.mxu0 %v844
        %1123 = vmatprep.subr.bf16.mxu0 %v842
        %1124 = vmatpush1.bf16.msra.mxu0 %v841
        %1125 = vmatprep.subr.bf16.mxu0 0
        %1126 = vmatpush2.bf16.msra.mxu0 0
        %1127 = vmatprep.subr.bf16.mxu0 0
        %1128 = vmatpush2.bf16.msra.mxu0 0
        %1129 = vmatprep.subr.bf16.mxu0 0
        %1130 = vmatpush2.bf16.msra.mxu0 0
        %1131 = vmatprep.subr.bf16.mxu0 0
        %1132 = vmatpush2.bf16.msra.mxu0 0
        %1133 = vmatprep.subr.bf16.mxu0 0
        %1134 = vmatpush2.bf16.msra.mxu0 0
        %1135 = vmatprep.subr.bf16.mxu0 0
        %1136 = vmatpush2.bf16.msra.mxu0 0
        %1137 = vmatprep.subr.bf16.mxu0 0
        %1138 = vmatpush2.bf16.msra.mxu0 0
        %1139 = vmatprep.subr.bf16.mxu0 0
        %1140 = vmatpush2.bf16.msra.mxu0 0
        %1141 = vmatprep.mubr.bf16.mxu0 0
        %1142 = vmatmul.mubr.bf16.gmra.mxu0 %v1108
        %v1143 = vpop.f32.mrf.mxu0
        %v1144 = vadd.f32 0.0, %v1143
        %v1145 = vpop.f32.mrf.mxu0
        %v1146 = vadd.f32 0.0, %v1145
        %v1147 = vpop.f32.mrf.mxu0
        %v1148 = vpop.f32.mrf.mxu0
        %1149 = vdwg.mxu0
        %1150 = vmatprep.subr.bf16.mxu0 0
        %1151 = vmatpush1.bf16.msra.mxu0 %v864
        %1152 = vmatprep.subr.bf16.mxu0 0
        %1153 = vmatpush1.bf16.msra.mxu0 %v861
        %1154 = vmatprep.subr.bf16.mxu0 0
        %1155 = vmatpush1.bf16.msra.mxu0 %v858
        %1156 = vmatprep.subr.bf16.mxu0 0
        %1157 = vmatpush1.bf16.msra.mxu0 %v855
        %1158 = vmatprep.subr.bf16.mxu0 0
        %1159 = vmatpush1.bf16.msra.mxu0 %v852
        %1160 = vmatprep.subr.bf16.mxu0 0
        %1161 = vmatpush1.bf16.msra.mxu0 %v849
        %1162 = vmatprep.subr.bf16.mxu0 0
        %1163 = vmatpush1.bf16.msra.mxu0 %v846
        %1164 = vmatprep.subr.bf16.mxu0 0
        %1165 = vmatpush1.bf16.msra.mxu0 %v843
        %1166 = vmatprep.subr.bf16.mxu0 0
        %1167 = vmatpush2.bf16.msra.mxu0 0
        %1168 = vmatprep.subr.bf16.mxu0 0
        %1169 = vmatpush2.bf16.msra.mxu0 0
        %1170 = vmatprep.subr.bf16.mxu0 0
        %1171 = vmatpush2.bf16.msra.mxu0 0
        %1172 = vmatprep.subr.bf16.mxu0 0
        %1173 = vmatpush2.bf16.msra.mxu0 0
        %1174 = vmatprep.subr.bf16.mxu0 0
        %1175 = vmatpush2.bf16.msra.mxu0 0
        %1176 = vmatprep.subr.bf16.mxu0 0
        %1177 = vmatpush2.bf16.msra.mxu0 0
        %1178 = vmatprep.subr.bf16.mxu0 0
        %1179 = vmatpush2.bf16.msra.mxu0 0
        %1180 = vmatprep.subr.bf16.mxu0 0
        %1181 = vmatpush2.bf16.msra.mxu0 0
        %1182 = vmatprep.mubr.bf16.mxu0 0
        %1183 = vmatmul.mubr.bf16.gmra.mxu0 %v1108
        %v1184 = vpop.f32.mrf.mxu0
        %v1185 = vadd.f32 0.0, %v1184
        %v1186 = vpop.f32.mrf.mxu0
        %v1187 = vpop.f32.mrf.mxu0
        %v1188 = vpop.f32.mrf.mxu0
        %1189 = vdwg.mxu0
        %v1190 = vadd.f32 %v1105, %v1144
        %v1191 = vmul.f32 %v1190, 0.5
        %v1192 = vtanh.pop %v1191
        %v1193 = vadd.f32 %v1192, 1.0
        %v1194 = vmul.f32 %v1193, 0.5
        %v1195 = vadd.f32 %v1106, %v1146
        %v1196 = vmul.f32 %v1195, 0.5
        %v1197 = vtanh.pop %v1196
        %v1198 = vadd.f32 %v1197, 1.0
        %v1199 = vmul.f32 %v1198, 0.5
        %v1200 = vadd.f32 %v1185, %v754
        %v1201 = vmul.f32 %v1194, %v1200
        %v1202 = vadd.f32 %v1107, %v1201
        %v1203 = vtanh.pop %v1202
        %v1204 = vsub.f32 1.0, %v1199
        %v1205 = vmul.f32 %v1204, %v1203
        %v1206 = vmul.f32 %v1199, %v1103
        %v1207 = vadd.f32 %v1205, %v1206
        %s1208 = sadd.s32 %s988, 2
        %p1209 = scmp.lt.s32.totalorder %s1208, 9
        %s1210 = scalar_select %p1209, 1, 0
        %v1211 = vstv %s1210
        %vm1212 = vcmp.eq.s32.totalorder %v1211, 1
        %v1213 = vsel %vm1212, %v1207, %v1103
        %s1214 = scalar_lea.vmem [#allocation2], 72
        %v1215 = vld [vmem:[%s1214] sm:$0xff]
        %v1216 = vld [vmem:[%s1214 + $0x8] sm:$0xff]
        %v1217 = vld [vmem:[%s1214 + $0x10] sm:$0xff]
        %v1218 = vpack.c.bf16 %v1213, %v1213
        %1219 = vmatprep.subr.bf16.mxu0 %v863
        %1220 = vmatpush1.bf16.msra.mxu0 %v862
        %1221 = vmatprep.subr.bf16.mxu0 %v860
        %1222 = vmatpush1.bf16.msra.mxu0 %v859
        %1223 = vmatprep.subr.bf16.mxu0 %v857
        %1224 = vmatpush1.bf16.msra.mxu0 %v856
        %1225 = vmatprep.subr.bf16.mxu0 %v854
        %1226 = vmatpush1.bf16.msra.mxu0 %v853
        %1227 = vmatprep.subr.bf16.mxu0 %v851
        %1228 = vmatpush1.bf16.msra.mxu0 %v850
        %1229 = vmatprep.subr.bf16.mxu0 %v848
        %1230 = vmatpush1.bf16.msra.mxu0 %v847
        %1231 = vmatprep.subr.bf16.mxu0 %v845
        %1232 = vmatpush1.bf16.msra.mxu0 %v844
        %1233 = vmatprep.subr.bf16.mxu0 %v842
        %1234 = vmatpush1.bf16.msra.mxu0 %v841
        %1235 = vmatprep.subr.bf16.mxu0 0
        %1236 = vmatpush2.bf16.msra.mxu0 0
        %1237 = vmatprep.subr.bf16.mxu0 0
        %1238 = vmatpush2.bf16.msra.mxu0 0
        %1239 = vmatprep.subr.bf16.mxu0 0
        %1240 = vmatpush2.bf16.msra.mxu0 0
        %1241 = vmatprep.subr.bf16.mxu0 0
        %1242 = vmatpush2.bf16.msra.mxu0 0
        %1243 = vmatprep.subr.bf16.mxu0 0
        %1244 = vmatpush2.bf16.msra.mxu0 0
        %1245 = vmatprep.subr.bf16.mxu0 0
        %1246 = vmatpush2.bf16.msra.mxu0 0
        %1247 = vmatprep.subr.bf16.mxu0 0
        %1248 = vmatpush2.bf16.msra.mxu0 0
        %1249 = vmatprep.subr.bf16.mxu0 0
        %1250 = vmatpush2.bf16.msra.mxu0 0
        %1251 = vmatprep.mubr.bf16.mxu0 0
        %1252 = vmatmul.mubr.bf16.gmra.mxu0 %v1218
        %v1253 = vpop.f32.mrf.mxu0
        %v1254 = vadd.f32 0.0, %v1253
        %v1255 = vpop.f32.mrf.mxu0
        %v1256 = vadd.f32 0.0, %v1255
        %v1257 = vpop.f32.mrf.mxu0
        %v1258 = vpop.f32.mrf.mxu0
        %1259 = vdwg.mxu0
        %1260 = vmatprep.subr.bf16.mxu0 0
        %1261 = vmatpush1.bf16.msra.mxu0 %v864
        %1262 = vmatprep.subr.bf16.mxu0 0
        %1263 = vmatpush1.bf16.msra.mxu0 %v861
        %1264 = vmatprep.subr.bf16.mxu0 0
        %1265 = vmatpush1.bf16.msra.mxu0 %v858
        %1266 = vmatprep.subr.bf16.mxu0 0
        %1267 = vmatpush1.bf16.msra.mxu0 %v855
        %1268 = vmatprep.subr.bf16.mxu0 0
        %1269 = vmatpush1.bf16.msra.mxu0 %v852
        %1270 = vmatprep.subr.bf16.mxu0 0
        %1271 = vmatpush1.bf16.msra.mxu0 %v849
        %1272 = vmatprep.subr.bf16.mxu0 0
        %1273 = vmatpush1.bf16.msra.mxu0 %v846
        %1274 = vmatprep.subr.bf16.mxu0 0
        %1275 = vmatpush1.bf16.msra.mxu0 %v843
        %1276 = vmatprep.subr.bf16.mxu0 0
        %1277 = vmatpush2.bf16.msra.mxu0 0
        %1278 = vmatprep.subr.bf16.mxu0 0
        %1279 = vmatpush2.bf16.msra.mxu0 0
        %1280 = vmatprep.subr.bf16.mxu0 0
        %1281 = vmatpush2.bf16.msra.mxu0 0
        %1282 = vmatprep.subr.bf16.mxu0 0
        %1283 = vmatpush2.bf16.msra.mxu0 0
        %1284 = vmatprep.subr.bf16.mxu0 0
        %1285 = vmatpush2.bf16.msra.mxu0 0
        %1286 = vmatprep.subr.bf16.mxu0 0
        %1287 = vmatpush2.bf16.msra.mxu0 0
        %1288 = vmatprep.subr.bf16.mxu0 0
        %1289 = vmatpush2.bf16.msra.mxu0 0
        %1290 = vmatprep.subr.bf16.mxu0 0
        %1291 = vmatpush2.bf16.msra.mxu0 0
        %1292 = vmatprep.mubr.bf16.mxu0 0
        %1293 = vmatmul.mubr.bf16.gmra.mxu0 %v1218
        %v1294 = vpop.f32.mrf.mxu0
        %v1295 = vadd.f32 0.0, %v1294
        %v1296 = vpop.f32.mrf.mxu0
        %v1297 = vpop.f32.mrf.mxu0
        %v1298 = vpop.f32.mrf.mxu0
        %1299 = vdwg.mxu0
        %v1300 = vadd.f32 %v1215, %v1254
        %v1301 = vmul.f32 %v1300, 0.5
        %v1302 = vtanh.pop %v1301
        %v1303 = vadd.f32 %v1302, 1.0
        %v1304 = vmul.f32 %v1303, 0.5
        %v1305 = vadd.f32 %v1216, %v1256
        %v1306 = vmul.f32 %v1305, 0.5
        %v1307 = vtanh.pop %v1306
        %v1308 = vadd.f32 %v1307, 1.0
        %v1309 = vmul.f32 %v1308, 0.5
        %v1310 = vadd.f32 %v1295, %v754
        %v1311 = vmul.f32 %v1304, %v1310
        %v1312 = vadd.f32 %v1217, %v1311
        %v1313 = vtanh.pop %v1312
        %v1314 = vsub.f32 1.0, %v1309
        %v1315 = vmul.f32 %v1314, %v1313
        %v1316 = vmul.f32 %v1309, %v1213
        %v1317 = vadd.f32 %v1315, %v1316
        %s1318 = sadd.s32 %s988, 3
        %p1319 = scmp.lt.s32.totalorder %s1318, 9
        %s1320 = scalar_select %p1319, 1, 0
        %v1321 = vstv %s1320
        %vm1322 = vcmp.eq.s32.totalorder %v1321, 1
        %v1323 = vsel %vm1322, %v1317, %v1213
        %1324 = vst [vmem:[#allocation3] sm:$0xff] %v1323
        %p1325 = scmp.eq.s32.totalorder %s33, 2
        // Predicated region
        $region69: #{tpu_custom_call.1} parent=47 // pred_check
          %p1326 = pneg %p1325
        $region70: #{tpu_custom_call.1} parent=47 // pred_check_branch
          %1328 = sbr.rel (%p1326) target = $region72
        $region71: #{tpu_custom_call.1} parent=47 // pred_region
          %1329 = vst [vmem:[#allocation15] sm:$0xff] %v1323
          %v1330 = vpack.c.bf16 %v1323, %v1323
          %v1331 = vld [vmem:[#allocation10] sm:$0xf]
          %v1332 = vld [vmem:[#allocation10 + $0x4] sm:$0xf]
          %v1333 = vld [vmem:[#allocation10 + $0x8] sm:$0xf]
          %v1334 = vld [vmem:[#allocation10 + $0xc] sm:$0xf]
          %v1335 = vld [vmem:[#allocation10 + $0x10] sm:$0xf]
          %v1336 = vld [vmem:[#allocation10 + $0x14] sm:$0xf]
          %v1337 = vld [vmem:[#allocation10 + $0x18] sm:$0xf]
          %v1338 = vld [vmem:[#allocation10 + $0x1c] sm:$0xf]
          %v1339 = vld [vmem:[#allocation10 + $0x20] sm:$0xf]
          %v1340 = vld [vmem:[#allocation10 + $0x24] sm:$0xf]
          %v1341 = vld [vmem:[#allocation10 + $0x28] sm:$0xf]
          %v1342 = vld [vmem:[#allocation10 + $0x2c] sm:$0xf]
          %v1343 = vld [vmem:[#allocation10 + $0x30] sm:$0xf]
          %v1344 = vld [vmem:[#allocation10 + $0x34] sm:$0xf]
          %v1345 = vld [vmem:[#allocation10 + $0x38] sm:$0xf]
          %v1346 = vld [vmem:[#allocation10 + $0x3c] sm:$0xf]
          %v1347 = vld [vmem:[%s6] sm:$0x1]
          %v1349 = vlaneseq
          %v1350 = vshrl.u32 %v1349, 7
          %v1351 = vsub.s32 0, %v1350
          %v1352 = vrot.slane %v1347, %v1351
          %v1370 = vunpack.c.l.b16 %v1331
          %v1371 = vunpack.c.l.b16 %v1332
          %v1372 = vunpack.c.l.b16 %v1333
          %v1373 = vunpack.c.l.b16 %v1334
          %v1374 = vunpack.c.l.b16 %v1335
          %v1375 = vunpack.c.l.b16 %v1336
          %v1376 = vunpack.c.l.b16 %v1337
          %v1377 = vunpack.c.l.b16 %v1338
          %v1378 = vunpack.c.l.b16 %v1339
          %v1379 = vunpack.c.l.b16 %v1340
          %v1380 = vunpack.c.l.b16 %v1341
          %v1381 = vunpack.c.l.b16 %v1342
          %v1382 = vunpack.c.l.b16 %v1343
          %v1383 = vunpack.c.l.b16 %v1344
          %v1384 = vunpack.c.l.b16 %v1345
          %v1385 = vunpack.c.l.b16 %v1346
          %v1386 = vpack.c.b16 %v1371, %v1370
          %v1387 = vpack.c.b16 %v1373, %v1372
          %v1388 = vpack.c.b16 %v1375, %v1374
          %v1389 = vpack.c.b16 %v1377, %v1376
          %v1390 = vpack.c.b16 %v1379, %v1378
          %v1391 = vpack.c.b16 %v1381, %v1380
          %v1392 = vpack.c.b16 %v1383, %v1382
          %v1393 = vpack.c.b16 %v1385, %v1384
          %1402 = vmatprep.subr.bf16.mxu0 0
          %1403 = vmatpush1.bf16.msra.mxu0 %v1393
          %1404 = vmatprep.subr.bf16.mxu0 0
          %1405 = vmatpush1.bf16.msra.mxu0 %v1392
          %1406 = vmatprep.subr.bf16.mxu0 0
          %1407 = vmatpush1.bf16.msra.mxu0 %v1391
          %1408 = vmatprep.subr.bf16.mxu0 0
          %1409 = vmatpush1.bf16.msra.mxu0 %v1390
          %1410 = vmatprep.subr.bf16.mxu0 0
          %1411 = vmatpush1.bf16.msra.mxu0 %v1389
          %1412 = vmatprep.subr.bf16.mxu0 0
          %1413 = vmatpush1.bf16.msra.mxu0 %v1388
          %1414 = vmatprep.subr.bf16.mxu0 0
          %1415 = vmatpush1.bf16.msra.mxu0 %v1387
          %1416 = vmatprep.subr.bf16.mxu0 0
          %1417 = vmatpush1.bf16.msra.mxu0 %v1386
          %1418 = vmatprep.subr.bf16.mxu0 0
          %1419 = vmatpush2.bf16.msra.mxu0 0
          %1420 = vmatprep.subr.bf16.mxu0 0
          %1421 = vmatpush2.bf16.msra.mxu0 0
          %1422 = vmatprep.subr.bf16.mxu0 0
          %1423 = vmatpush2.bf16.msra.mxu0 0
          %1424 = vmatprep.subr.bf16.mxu0 0
          %1425 = vmatpush2.bf16.msra.mxu0 0
          %1426 = vmatprep.subr.bf16.mxu0 0
          %1427 = vmatpush2.bf16.msra.mxu0 0
          %1428 = vmatprep.subr.bf16.mxu0 0
          %1429 = vmatpush2.bf16.msra.mxu0 0
          %1430 = vmatprep.subr.bf16.mxu0 0
          %1431 = vmatpush2.bf16.msra.mxu0 0
          %1432 = vmatprep.subr.bf16.mxu0 0
          %1433 = vmatpush2.bf16.msra.mxu0 0
          %1434 = vmatprep.mubr.bf16.mxu0 0
          %1435 = vmatmul.mubr.bf16.gmra.mxu0 %v1330
          %v1436 = vpop.f32.mrf.mxu0
          %v1437 = vadd.f32 %v1352, %v1436
          %v1438 = vpop.f32.mrf.mxu0
          %v1439 = vpop.f32.mrf.mxu0
          %v1440 = vpop.f32.mrf.mxu0
          %1441 = vdwg.mxu0
          %1442 = vst [vmem:[#allocation13] sm:$0xff] %v1437
          %v1443 = vlaneseq
          %v1444 = vand.u32 %v1443, 127
          %vm1445 = vcmp.lt.s32.totalorder %v1444, 4
          %v1446 = vsel %vm1445, %v1437, -1e+30
          %1447 = vmax.xlane.f32.xlu0 %v1446
          %v1448 = vpop.xlane.xlu0 %1447
          %v1449 = vsub.f32 %v1446, %v1448
          %v1450 = vmul.f32 %v1449, 1.442695
          %v1451 = vpow.pop %v1450
          %1452 = vadd.xlane.f32.xlu0 %v1451
          %v1453 = vpop.xlane.xlu0 %1452
          %v1454 = vrcp.pop %v1453
          %v1455 = vmul.f32 %v1451, %v1454
          %1456 = vst [vmem:[#allocation12] sm:$0xff] %v1455
        $region72: #{tpu_custom_call.1} parent=47 // pred_fallthru
          _
        // Predicated region
        $region73: #{tpu_custom_call.1} parent=47 // pred_check
          %p1457 = pneg %p212
        $region74: #{tpu_custom_call.1} parent=47 // pred_check_branch
          %1459 = sbr.rel (%p1457) target = $region76
        $region75: #{tpu_custom_call.1} parent=47 // pred_region
          %s1461 = ssub.s32 128, 128
          %1462 = vsyncadd [#allocation6], %s1461
          %s1463 = smul.addr %s32, 128
          %s1464 = scalar_lea.hbm %s7, %s1463
          %s1466 = sshll.u32 [#allocation12], 4
          %s1467 = int_to_ptr.vmem [resolvable:$true] %s1466
          %1469 = dma.vmem_to_hbm [thread:$0]  %s1467, 128, %s1464, [#allocation6]
        $region76: #{tpu_custom_call.1} parent=47 // pred_fallthru
          _
        // Predicated region
        $region77: #{tpu_custom_call.1} parent=47 // pred_check
          %p1470 = pneg %p238
        $region78: #{tpu_custom_call.1} parent=47 // pred_check_branch
          %1472 = sbr.rel (%p1470) target = $region80
        $region79: #{tpu_custom_call.1} parent=47 // pred_region
          %s1474 = ssub.s32 128, 128
          %1475 = vsyncadd [#allocation14], %s1474
          %s1476 = smul.addr %s32, 128
          %s1477 = scalar_lea.hbm %s8, %s1476
          %s1479 = sshll.u32 [#allocation13], 4
          %s1480 = int_to_ptr.vmem [resolvable:$true] %s1479
          %1482 = dma.vmem_to_hbm [thread:$0]  %s1480, 128, %s1477, [#allocation14]
        $region80: #{tpu_custom_call.1} parent=47 // pred_fallthru
          _
        // Predicated region
        $region81: #{tpu_custom_call.1} parent=47 // pred_check
          %p1483 = pneg %p264
        $region82: #{tpu_custom_call.1} parent=47 // pred_check_branch
          %1485 = sbr.rel (%p1483) target = $region84
        $region83: #{tpu_custom_call.1} parent=47 // pred_region
          %s1487 = ssub.s32 128, 128
          %1488 = vsyncadd [#allocation14], %s1487
          %s1489 = smul.addr %s32, 128
          %s1490 = scalar_lea.hbm %s9, %s1489
          %s1492 = sshll.u32 [#allocation15], 4
          %s1493 = int_to_ptr.vmem [resolvable:$true] %s1492
          %1495 = dma.vmem_to_hbm [thread:$0]  %s1493, 128, %s1490, [#allocation14]
        $region84: #{tpu_custom_call.1} parent=47 // pred_fallthru
          _
        // Predicated region
        $region85: #{tpu_custom_call.1} parent=47 // pred_check
          %p1496 = pneg %p212
        $region86: #{tpu_custom_call.1} parent=47 // pred_check_branch
          %1498 = sbr.rel (%p1496) target = $region88
        $region87: #{tpu_custom_call.1} parent=47 // pred_region
          %1499 = dma.done [#allocation6], 128
        $region88: #{tpu_custom_call.1} parent=47 // pred_fallthru
          _
        // Predicated region
        $region89: #{tpu_custom_call.1} parent=47 // pred_check
          %p1500 = pneg %p238
        $region90: #{tpu_custom_call.1} parent=47 // pred_check_branch
          %1502 = sbr.rel (%p1500) target = $region92
        $region91: #{tpu_custom_call.1} parent=47 // pred_region
          %1503 = dma.done [#allocation14], 128
        $region92: #{tpu_custom_call.1} parent=47 // pred_fallthru
          _
        // Predicated region
        $region93: #{tpu_custom_call.1} parent=47 // pred_check
          %p1504 = pneg %p264
        $region94: #{tpu_custom_call.1} parent=47 // pred_check_branch
          %1506 = sbr.rel (%p1504) target = $region96
        $region95: #{tpu_custom_call.1} parent=47 // pred_region
          %1507 = dma.done [#allocation14], 128
        $region96: #{tpu_custom_call.1} parent=47 // pred_fallthru
          _
      $region48: #{tpu_custom_call.1} parent=5 // pred_fallthru
        _
      %p1508 = scmp.le.s32.totalorder 2, %s23
      // Predicated region
      $region97: #{tpu_custom_call.1} parent=5 // pred_check
        %p1509 = pneg %p1508
      $region98: #{tpu_custom_call.1} parent=5 // pred_check_branch
        %1511 = sbr.rel (%p1509) target = $region100
      $region99: #{tpu_custom_call.1} parent=5 // pred_region
        %s1512 = ssub.s32 %s23, 2
      $region100: #{tpu_custom_call.1} parent=5 // pred_fallthru
        _
    $region6: #{tpu_custom_call.1} parent=1 // loop_footer
      %s27 = sadd.s32 1, %s23
    $region7: #{tpu_custom_call.1} parent=1 // loop_footer_branch
      %22 = sbr.rel target = $region3
    $region8: #{tpu_custom_call.1} parent=1 // loop_exit
      _
    %1513 = vsyncpa [#allocation5], 1
    %s1514 = scalar_lea.sflag [#allocation5], 1
    %1515 = vsyncpa %s1514, 1
    %1516 = vsyncpa [#allocation8], 1
    %1517 = vsyncpa [#allocation11], 1
    %1518 = vsyncpa [#allocation6], 1
    %s1519 = scalar_lea.sflag [#allocation6], 1
    %1520 = vsyncpa %s1519, 1
    %1521 = vsyncpa [#allocation14], 1

// kernel: tpu_custom_call.1
$region0: #{tpu_custom_call.1}
  #allocation0 [shape = 'u32[]', space=smem, size = 0x4, offset = 0x4, fixed_abs, tag = 'smem constant byte address 0x4 - core index']
  #allocation1 [shape = 'u32[144,128]{1,0:T(1,128)}', space=vmem, size = 0x12000, scoped, tag = 'internal scratch']
  #allocation2 [shape = 'f32[4,8,384]{2,1,0:T(8,128)}', space=vmem, size = 0xc000, scoped, tag = 'scratch operand']
  #allocation3 [shape = 'f32[8,128]{1,0:T(8,128)}', space=vmem, size = 0x1000, scoped, tag = 'scratch operand']
  %s0 = inlined_call_operand.hbm [shape: bf16[12,8,128], index: 0, kind: input, shape index: {}]
  %s1 = inlined_call_operand.hbm [shape: bf16[128,384], index: 1, kind: input, shape index: {}]
  %s2 = inlined_call_operand.hbm [shape: bf16[128,384], index: 2, kind: input, shape index: {}]
  %s3 = inlined_call_operand.vmem [shape: f32[1,384], index: 3, kind: input, shape index: {}]
  %s4 = inlined_call_operand.vmem [shape: f32[1,128], index: 4, kind: input, shape index: {}]
  %s5 = inlined_call_operand.hbm [shape: bf16[128,128], index: 5, kind: input, shape index: {}]
  %s6 = inlined_call_operand.vmem [shape: f32[1,128], index: 6, kind: input, shape index: {}]
  %s7 = inlined_call_operand.hbm [shape: f32[8,128], index: 7, kind: output, shape index: {0}]
  %s8 = inlined_call_operand.hbm [shape: f32[8,128], index: 8, kind: output, shape index: {1}]
  %s9 = inlined_call_operand.hbm [shape: f32[8,128], index: 9, kind: output, shape index: {2}]
  %10 = xla_tuple %s7, %s8, %s9
  %s11 = sld [smem:[#allocation0]]
  $region101: #{tpu_custom_call.1} parent=0
    _
  %s13 = ssub.s32 1, %s11
  %s14 = scalar_select 0, %s13, %s11
  $region1: #{tpu_custom_call.1} parent=0
    #allocation4 [shape = 'u8[16384]{0}', space=vmem, size = 0x4000, scoped, tag = 'input window, operand 0']
    #allocation5 [shape = 's32[2]{0}', space=sflag, size = 0x8, scoped, tag = 'scoped memory for tpu_custom_call.1']
    #allocation6 [shape = 's32[2]{0}', space=sflag, size = 0x8, scoped, tag = 'scoped memory for tpu_custom_call.1']
    #allocation7 [shape = 'u8[98304]{0}', space=vmem, size = 0x18000, scoped, tag = 'input window, operand 1, single buffered']
    #allocation8 [shape = 's32[1]{0}', space=sflag, size = 0x4, scoped, tag = 'scoped memory for tpu_custom_call.1']
    #allocation9 [shape = 'u8[98304]{0}', space=vmem, size = 0x18000, scoped, tag = 'input window, operand 2, single buffered']
    #allocation10 [shape = 'u8[32768]{0}', space=vmem, size = 0x8000, scoped, tag = 'input window, operand 5, single buffered']
    #allocation11 [shape = 's32[1]{0}', space=sflag, size = 0x4, scoped, tag = 'scoped memory for tpu_custom_call.1']
    #allocation12 [shape = 'u8[4096]{0}', space=vmem, size = 0x1000, scoped, tag = 'output window, operand 0, single buffered']
    #allocation13 [shape = 'u8[4096]{0}', space=vmem, size = 0x1000, scoped, tag = 'output window, operand 1, single buffered']
    #allocation14 [shape = 's32[1]{0}', space=sflag, size = 0x4, scoped, tag = 'scoped memory for tpu_custom_call.1']
    #allocation15 [shape = 'u8[4096]{0}', space=vmem, size = 0x1000, scoped, tag = 'output window, operand 2, single buffered']
    %15 = vsyncpa [#allocation5], 0
    %s16 = scalar_lea.sflag [#allocation5], 1
    %17 = vsyncpa %s16, 0
    %18 = vsyncpa [#allocation8], 0
    %19 = vsyncpa [#allocation11], 0
    %20 = vsyncpa [#allocation6], 0
    %21 = vsyncpa [#allocation14], 0
    loop: start=0, step=1, limit=5
    $region2: #{tpu_custom_call.1} parent=1 // loop_pre_header
      _
    $region3: #{tpu_custom_call.1} parent=1 // loop_header
      %s23 = sphi 0, %s27
      %p24 = scmp.ge.s32.totalorder %s23, 5
      %s30 = sphi 0, %s42
      %s31 = sphi 0, %s38
      %s32 = sphi 0, %s30
      %s33 = sphi 0, %s31
      %s34 = sphi 0, %s32
      %s35 = sphi 0, %s33
      %s47 = sphi 0, %s49
      %s50 = sphi 0, %s47
      %s51 = sphi 0, %s50
      %s67 = sphi 0, %s51
      %s71 = sphi 0, %s71
      %s73 = sphi 0, %s71
      %s74 = sphi 0, %s73
      %s88 = sphi 0, %s74
      %s92 = sphi 0, %s92
      %s94 = sphi 0, %s92
      %s95 = sphi 0, %s94
      %s109 = sphi 0, %s95
      %s113 = sphi 0, %s113
      %s115 = sphi 0, %s113
      %s116 = sphi 0, %s115
      %s130 = sphi 0, %s116
      %s134 = sphi 0, %s134
      %s136 = sphi 0, %s134
      %s137 = sphi 0, %s136
      %s151 = sphi 0, %s137
      %s155 = sphi 0, %s155
      %s157 = sphi 0, %s155
      %s158 = sphi 0, %s157
      %s172 = sphi 0, %s158
      %s176 = sphi 0, %s176
      %s178 = sphi 0, %s176
      %s179 = sphi 0, %s178
      %s193 = sphi 0, %s179
      %s199 = sphi 0, %s201
      %s202 = sphi 0, %s199
      %s203 = sphi 0, %s202
      %s219 = sphi 0, %s203
      %s225 = sphi 0, %s227
      %s228 = sphi 0, %s225
      %s229 = sphi 0, %s228
      %s245 = sphi 0, %s229
      %s251 = sphi 0, %s253
      %s254 = sphi 0, %s251
      %s255 = sphi 0, %s254
      %s271 = sphi 0, %s255
    $region4: #{tpu_custom_call.1} parent=1 // loop_header_branch
      %26 = sbr.rel (%p24) target = $region8
    $region5: #{tpu_custom_call.1} parent=1 // loop_body
      %s28 = ssub.s32 %s23, 1
      %s29 = ssub.s32 %s23, 2
      %s36 = sadd.s32 1, %s31
      %p37 = scmp.ge.s32.totalorder %s36, 3
      %s38 = scalar_select %p37, 0, %s36
      %s39 = sadd.s32 1, %s30
      %s40 = scalar_select %p37, %s39, %s30
      %p41 = scmp.ge.s32.totalorder %s40, 1
      %s42 = scalar_select %p41, 0, %s40
      %s43 = ssub.s32 %s31, %s38
      %s44 = ssub.s32 %s30, %s42
      %s45 = sor.u32 %s43, %s44
      %p46 = scmp.eq.s32.totalorder %s45, 0
      %s48 = sadd.s32 %s47, 1
      %s49 = scalar_select %p46, %s47, %s48
      %p52 = pneg %p46
      %p53 = scmp.eq.s32.totalorder %s23, 2
      %p54 = por %p52, %p53
      %p55 = scmp.ne.s32.totalorder %s47, %s50
      %p56 = scmp.eq.s32.totalorder %s23, 0
      %p57 = por %p55, %p56
      %p58 = scmp.ne.s32.totalorder %s47, %s50
      %p59 = scmp.eq.s32.totalorder %s28, 2
      %p60 = por %p58, %p59
      %p61 = scmp.ne.s32.totalorder %s50, %s51
      %p62 = scmp.eq.s32.totalorder %s28, 0
      %p63 = por %p61, %p62
      %p64 = scmp.ne.s32.totalorder %s50, %s51
      %p65 = scmp.eq.s32.totalorder %s29, 2
      %p66 = por %p64, %p65
      %p68 = scmp.ne.s32.totalorder %s51, %s67
      %p69 = scmp.eq.s32.totalorder %s29, 0
      %p70 = por %p68, %p69
      %s72 = sadd.s32 %s71, 1
      %p75 = scmp.eq.s32.totalorder %s23, 2
      %p76 = scmp.ne.s32.totalorder %s71, %s73
      %p77 = scmp.eq.s32.totalorder %s23, 0
      %p78 = por %p76, %p77
      %p79 = scmp.ne.s32.totalorder %s71, %s73
      %p80 = scmp.eq.s32.totalorder %s28, 2
      %p81 = por %p79, %p80
      %p82 = scmp.ne.s32.totalorder %s73, %s74
      %p83 = scmp.eq.s32.totalorder %s28, 0
      %p84 = por %p82, %p83
      %p85 = scmp.ne.s32.totalorder %s73, %s74
      %p86 = scmp.eq.s32.totalorder %s29, 2
      %p87 = por %p85, %p86
      %p89 = scmp.ne.s32.totalorder %s74, %s88
      %p90 = scmp.eq.s32.totalorder %s29, 0
      %p91 = por %p89, %p90
      %s93 = sadd.s32 %s92, 1
      %p96 = scmp.eq.s32.totalorder %s23, 2
      %p97 = scmp.ne.s32.totalorder %s92, %s94
      %p98 = scmp.eq.s32.totalorder %s23, 0
      %p99 = por %p97, %p98
      %p100 = scmp.ne.s32.totalorder %s92, %s94
      %p101 = scmp.eq.s32.totalorder %s28, 2
      %p102 = por %p100, %p101
      %p103 = scmp.ne.s32.totalorder %s94, %s95
      %p104 = scmp.eq.s32.totalorder %s28, 0
      %p105 = por %p103, %p104
      %p106 = scmp.ne.s32.totalorder %s94, %s95
      %p107 = scmp.eq.s32.totalorder %s29, 2
      %p108 = por %p106, %p107
      %p110 = scmp.ne.s32.totalorder %s95, %s109
      %p111 = scmp.eq.s32.totalorder %s29, 0
      %p112 = por %p110, %p111
      %s114 = sadd.s32 %s113, 1
      %p117 = scmp.eq.s32.totalorder %s23, 2
      %p118 = scmp.ne.s32.totalorder %s113, %s115
      %p119 = scmp.eq.s32.totalorder %s23, 0
      %p120 = por %p118, %p119
      %p121 = scmp.ne.s32.totalorder %s113, %s115
      %p122 = scmp.eq.s32.totalorder %s28, 2
      %p123 = por %p121, %p122
      %p124 = scmp.ne.s32.totalorder %s115, %s116
      %p125 = scmp.eq.s32.totalorder %s28, 0
      %p126 = por %p124, %p125
      %p127 = scmp.ne.s32.totalorder %s115, %s116
      %p128 = scmp.eq.s32.totalorder %s29, 2
      %p129 = por %p127, %p128
      %p131 = scmp.ne.s32.totalorder %s116, %s130
      %p132 = scmp.eq.s32.totalorder %s29, 0
      %p133 = por %p131, %p132
      %s135 = sadd.s32 %s134, 1
      %p138 = scmp.eq.s32.totalorder %s23, 2
      %p139 = scmp.ne.s32.totalorder %s134, %s136
      %p140 = scmp.eq.s32.totalorder %s23, 0
      %p141 = por %p139, %p140
      %p142 = scmp.ne.s32.totalorder %s134, %s136
      %p143 = scmp.eq.s32.totalorder %s28, 2
      %p144 = por %p142, %p143
      %p145 = scmp.ne.s32.totalorder %s136, %s137
      %p146 = scmp.eq.s32.totalorder %s28, 0
      %p147 = por %p145, %p146
      %p148 = scmp.ne.s32.totalorder %s136, %s137
      %p149 = scmp.eq.s32.totalorder %s29, 2
      %p150 = por %p148, %p149
      %p152 = scmp.ne.s32.totalorder %s137, %s151
      %p153 = scmp.eq.s32.totalorder %s29, 0
      %p154 = por %p152, %p153
      %s156 = sadd.s32 %s155, 1
      %p159 = scmp.eq.s32.totalorder %s23, 2
      %p160 = scmp.ne.s32.totalorder %s155, %s157
      %p161 = scmp.eq.s32.totalorder %s23, 0
      %p162 = por %p160, %p161
      %p163 = scmp.ne.s32.totalorder %s155, %s157
      %p164 = scmp.eq.s32.totalorder %s28, 2
      %p165 = por %p163, %p164
      %p166 = scmp.ne.s32.totalorder %s157, %s158
      %p167 = scmp.eq.s32.totalorder %s28, 0
      %p168 = por %p166, %p167
      %p169 = scmp.ne.s32.totalorder %s157, %s158
      %p170 = scmp.eq.s32.totalorder %s29, 2
      %p171 = por %p169, %p170
      %p173 = scmp.ne.s32.totalorder %s158, %s172
      %p174 = scmp.eq.s32.totalorder %s29, 0
      %p175 = por %p173, %p174
      %s177 = sadd.s32 %s176, 1
      %p180 = scmp.eq.s32.totalorder %s23, 2
      %p181 = scmp.ne.s32.totalorder %s176, %s178
      %p182 = scmp.eq.s32.totalorder %s23, 0
      %p183 = por %p181, %p182
      %p184 = scmp.ne.s32.totalorder %s176, %s178
      %p185 = scmp.eq.s32.totalorder %s28, 2
      %p186 = por %p184, %p185
      %p187 = scmp.ne.s32.totalorder %s178, %s179
      %p188 = scmp.eq.s32.totalorder %s28, 0
      %p189 = por %p187, %p188
      %p190 = scmp.ne.s32.totalorder %s178, %s179
      %p191 = scmp.eq.s32.totalorder %s29, 2
      %p192 = por %p190, %p191
      %p194 = scmp.ne.s32.totalorder %s179, %s193
      %p195 = scmp.eq.s32.totalorder %s29, 0
      %p196 = por %p194, %p195
      %s197 = ssub.s32 %s30, %s42
      %p198 = scmp.eq.s32.totalorder %s197, 0
      %s200 = sadd.s32 %s199, 1
      %s201 = scalar_select %p198, %s199, %s200
      %p204 = pneg %p198
      %p205 = scmp.eq.s32.totalorder %s23, 2
      %p206 = por %p204, %p205
      %p207 = scmp.ne.s32.totalorder %s199, %s202
      %p208 = scmp.eq.s32.totalorder %s23, 0
      %p209 = por %p207, %p208
      %p210 = scmp.ne.s32.totalorder %s199, %s202
      %p211 = scmp.eq.s32.totalorder %s28, 2
      %p212 = por %p210, %p211
      %p213 = scmp.ne.s32.totalorder %s202, %s203
      %p214 = scmp.eq.s32.totalorder %s28, 0
      %p215 = por %p213, %p214
      %p216 = scmp.ne.s32.totalorder %s202, %s203
      %p217 = scmp.eq.s32.totalorder %s29, 2
      %p218 = por %p216, %p217
      %p220 = scmp.ne.s32.totalorder %s203, %s219
      %p221 = scmp.eq.s32.totalorder %s29, 0
      %p222 = por %p220, %p221
      %s223 = ssub.s32 %s30, %s42
      %p224 = scmp.eq.s32.totalorder %s223, 0
      %s226 = sadd.s32 %s225, 1
      %s227 = scalar_select %p224, %s225, %s226
      %p230 = pneg %p224
      %p231 = scmp.eq.s32.totalorder %s23, 2
      %p232 = por %p230, %p231
      %p233 = scmp.ne.s32.totalorder %s225, %s228
      %p234 = scmp.eq.s32.totalorder %s23, 0
      %p235 = por %p233, %p234
      %p236 = scmp.ne.s32.totalorder %s225, %s228
      %p237 = scmp.eq.s32.totalorder %s28, 2
      %p238 = por %p236, %p237
      %p239 = scmp.ne.s32.totalorder %s228, %s229
      %p240 = scmp.eq.s32.totalorder %s28, 0
      %p241 = por %p239, %p240
      %p242 = scmp.ne.s32.totalorder %s228, %s229
      %p243 = scmp.eq.s32.totalorder %s29, 2
      %p244 = por %p242, %p243
      %p246 = scmp.ne.s32.totalorder %s229, %s245
      %p247 = scmp.eq.s32.totalorder %s29, 0
      %p248 = por %p246, %p247
      %s249 = ssub.s32 %s30, %s42
      %p250 = scmp.eq.s32.totalorder %s249, 0
      %s252 = sadd.s32 %s251, 1
      %s253 = scalar_select %p250, %s251, %s252
      %p256 = pneg %p250
      %p257 = scmp.eq.s32.totalorder %s23, 2
      %p258 = por %p256, %p257
      %p259 = scmp.ne.s32.totalorder %s251, %s254
      %p260 = scmp.eq.s32.totalorder %s23, 0
      %p261 = por %p259, %p260
      %p262 = scmp.ne.s32.totalorder %s251, %s254
      %p263 = scmp.eq.s32.totalorder %s28, 2
      %p264 = por %p262, %p263
      %p265 = scmp.ne.s32.totalorder %s254, %s255
      %p266 = scmp.eq.s32.totalorder %s28, 0
      %p267 = por %p265, %p266
      %p268 = scmp.ne.s32.totalorder %s254, %s255
      %p269 = scmp.eq.s32.totalorder %s29, 2
      %p270 = por %p268, %p269
      %p272 = scmp.ne.s32.totalorder %s255, %s271
      %p273 = scmp.eq.s32.totalorder %s29, 0
      %p274 = por %p272, %p273
      %p275 = scmp.le.s32.totalorder 1, %s23
      %p276 = scmp.lt.s32.totalorder %s23, 4
      %p277 = pnand %p275, %p276
      %p278 = pneg %p277
      // Predicated region
      $region9: #{tpu_custom_call.1} parent=5 // pred_check
        _
      $region10: #{tpu_custom_call.1} parent=5 // pred_check_branch
        %280 = sbr.rel (%p277) target = $region12
      $region11: #{tpu_custom_call.1} parent=5 // pred_region
        %s281 = ssub.s32 %s23, 1
        // Predicated region
        $region13: #{tpu_custom_call.1} parent=11 // pred_check
          %p282 = pneg %p84
        $region14: #{tpu_custom_call.1} parent=11 // pred_check_branch
          %284 = sbr.rel (%p282) target = $region16
        $region15: #{tpu_custom_call.1} parent=11 // pred_region
          %s286 = ssub.s32 3072, 3072
          %287 = vsyncadd [#allocation8], %s286
          %s288 = sshll.u32 [#allocation7], 4
          %s289 = int_to_ptr.vmem [resolvable:$true] %s288
          %294 = dma.hbm_to_vmem [thread:$0]  %s1, 3072, %s289, [#allocation8], 192, 192, 12
        $region16: #{tpu_custom_call.1} parent=11 // pred_fallthru
          _
        // Predicated region
        $region17: #{tpu_custom_call.1} parent=11 // pred_check
          %p295 = pneg %p105
        $region18: #{tpu_custom_call.1} parent=11 // pred_check_branch
          %297 = sbr.rel (%p295) target = $region20
        $region19: #{tpu_custom_call.1} parent=11 // pred_region
          %s299 = ssub.s32 3072, 3072
          %300 = vsyncadd [#allocation8], %s299
          %s301 = sshll.u32 [#allocation9], 4
          %s302 = int_to_ptr.vmem [resolvable:$true] %s301
          %307 = dma.hbm_to_vmem [thread:$0]  %s2, 3072, %s302, [#allocation8], 192, 192, 12
        $region20: #{tpu_custom_call.1} parent=11 // pred_fallthru
          _
        // Predicated region
        $region21: #{tpu_custom_call.1} parent=11 // pred_check
          %p308 = pneg %p126
        $region22: #{tpu_custom_call.1} parent=11 // pred_check_branch
          %310 = sbr.rel (%p308) target = $region24
        $region23: #{tpu_custom_call.1} parent=11 // pred_region
          _
        $region24: #{tpu_custom_call.1} parent=11 // pred_fallthru
          _
        // Predicated region
        $region25: #{tpu_custom_call.1} parent=11 // pred_check
          %p311 = pneg %p147
        $region26: #{tpu_custom_call.1} parent=11 // pred_check_branch
          %313 = sbr.rel (%p311) target = $region28
        $region27: #{tpu_custom_call.1} parent=11 // pred_region
          _
        $region28: #{tpu_custom_call.1} parent=11 // pred_fallthru
          _
        // Predicated region
        $region29: #{tpu_custom_call.1} parent=11 // pred_check
          %p314 = pneg %p168
        $region30: #{tpu_custom_call.1} parent=11 // pred_check_branch
          %316 = sbr.rel (%p314) target = $region32
        $region31: #{tpu_custom_call.1} parent=11 // pred_region
          %s318 = ssub.s32 1024, 1024
          %319 = vsyncadd [#allocation11], %s318
          %s320 = sshll.u32 [#allocation10], 4
          %s321 = int_to_ptr.vmem [resolvable:$true] %s320
          %326 = dma.hbm_to_vmem [thread:$0]  %s5, 1024, %s321, [#allocation11], 64, 64, 4
        $region32: #{tpu_custom_call.1} parent=11 // pred_fallthru
          _
        // Predicated region
        $region33: #{tpu_custom_call.1} parent=11 // pred_check
          %p327 = pneg %p189
        $region34: #{tpu_custom_call.1} parent=11 // pred_check_branch
          %329 = sbr.rel (%p327) target = $region36
        $region35: #{tpu_custom_call.1} parent=11 // pred_region
          _
        $region36: #{tpu_custom_call.1} parent=11 // pred_fallthru
          _
      $region12: #{tpu_custom_call.1} parent=5 // pred_fallthru
        _
      %p330 = scmp.lt.s32.totalorder %s23, 3
      // Predicated region
      $region37: #{tpu_custom_call.1} parent=5 // pred_check
        %p331 = pneg %p330
      $region38: #{tpu_custom_call.1} parent=5 // pred_check_branch
        %333 = sbr.rel (%p331) target = $region40
      $region39: #{tpu_custom_call.1} parent=5 // pred_region
        // Predicated region
        $region41: #{tpu_custom_call.1} parent=39 // pred_check
          %p334 = pneg %p57
        $region42: #{tpu_custom_call.1} parent=39 // pred_check_branch
          %336 = sbr.rel (%p334) target = $region44
        $region43: #{tpu_custom_call.1} parent=39 // pred_region
          %s337 = sand.u32 %s47, 1
          %s338 = scalar_lea.sflag [#allocation5], %s337
          %s339 = sand.u32 %s47, 1
          %s340 = smul.addr %s339, 16
          %s341 = scalar_lea.vmem [#allocation4], %s340
          %s342 = smul.u32 4, %s31
          %s344 = ssub.s32 256, 256
          %345 = vsyncadd %s338, %s344
          %s346 = sadd.s32 %s30, %s342
          %s347 = smul.addr %s346, 64
          %s348 = scalar_lea.hbm %s0, %s347
          %s349 = sshll.u32 %s341, 4
          %s350 = int_to_ptr.vmem [resolvable:$true] %s349
          %355 = dma.hbm_to_vmem [thread:$0]  %s348, 256, %s350, %s338, 64, 64, 4
        $region44: #{tpu_custom_call.1} parent=39 // pred_fallthru
          _
      $region40: #{tpu_custom_call.1} parent=5 // pred_fallthru
        _
      %p356 = scmp.le.s32.totalorder 1, %s23
      %p357 = scmp.lt.s32.totalorder %s23, 4
      %p358 = pnand %p356, %p357
      %p359 = pneg %p358
      // Predicated region
      $region45: #{tpu_custom_call.1} parent=5 // pred_check
        _
      $region46: #{tpu_custom_call.1} parent=5 // pred_check_branch
        %361 = sbr.rel (%p358) target = $region48
      $region47: #{tpu_custom_call.1} parent=5 // pred_region
        %s362 = ssub.s32 %s23, 1
        %s363 = sand.u32 %s50, 1
        %s364 = scalar_lea.sflag [#allocation5], %s363
        %s365 = sand.u32 %s50, 1
        %s366 = smul.addr %s365, 16
        %s367 = scalar_lea.vmem [#allocation4], %s366
        // Predicated region
        $region49: #{tpu_custom_call.1} parent=47 // pred_check
          %p368 = pneg %p63
        $region50: #{tpu_custom_call.1} parent=47 // pred_check_branch
          %370 = sbr.rel (%p368) target = $region52
        $region51: #{tpu_custom_call.1} parent=47 // pred_region
          %371 = dma.done %s364, 256
        $region52: #{tpu_custom_call.1} parent=47 // pred_fallthru
          _
        // Predicated region
        $region53: #{tpu_custom_call.1} parent=47 // pred_check
          %p372 = pneg %p84
        $region54: #{tpu_custom_call.1} parent=47 // pred_check_branch
          %374 = sbr.rel (%p372) target = $region56
        $region55: #{tpu_custom_call.1} parent=47 // pred_region
          %375 = dma.done [#allocation8], 3072
        $region56: #{tpu_custom_call.1} parent=47 // pred_fallthru
          _
        // Predicated region
        $region57: #{tpu_custom_call.1} parent=47 // pred_check
          %p376 = pneg %p105
        $region58: #{tpu_custom_call.1} parent=47 // pred_check_branch
          %378 = sbr.rel (%p376) target = $region60
        $region59: #{tpu_custom_call.1} parent=47 // pred_region
          %379 = dma.done [#allocation8], 3072
        $region60: #{tpu_custom_call.1} parent=47 // pred_fallthru
          _
        // Predicated region
        $region61: #{tpu_custom_call.1} parent=47 // pred_check
          %p380 = pneg %p168
        $region62: #{tpu_custom_call.1} parent=47 // pred_check_branch
          %382 = sbr.rel (%p380) target = $region64
        $region63: #{tpu_custom_call.1} parent=47 // pred_region
          %383 = dma.done [#allocation11], 1024
        $region64: #{tpu_custom_call.1} parent=47 // pred_fallthru
          _
        %s384 = sand.u32 %s50, 1
        %s385 = scalar_lea.sflag [#allocation5], %s384
        %s386 = sand.u32 %s50, 1
        %s387 = smul.addr %s386, 16
        %s388 = scalar_lea.vmem [#allocation4], %s387
        %p389 = pneg %p63
        %p390 = pneg %p60
        %p391 = pneg %p84
        %p392 = pneg %p81
        %p393 = pneg %p105
        %p394 = pneg %p102
        %p395 = pneg %p126
        %p396 = pneg %p123
        %p397 = pneg %p147
        %p398 = pneg %p144
        %p399 = pneg %p168
        %p400 = pneg %p165
        %p401 = pneg %p189
        %p402 = pneg %p186
        %p403 = pneg %p215
        %p404 = pneg %p212
        %p405 = pneg %p241
        %p406 = pneg %p238
        %p407 = pneg %p267
        %p408 = pneg %p264
        %s409 = smul.u32 4, %s33
        %p411 = scmp.eq.s32.totalorder %s33, 0
        // Predicated region
        $region65: #{tpu_custom_call.1} parent=47 // pred_check
          %p412 = pneg %p411
        $region66: #{tpu_custom_call.1} parent=47 // pred_check_branch
          %414 = sbr.rel (%p412) target = $region68
        $region67: #{tpu_custom_call.1} parent=47 // pred_region
          %415 = vst [vmem:[#allocation3] sm:$0xff] 0.0
        $region68: #{tpu_custom_call.1} parent=47 // pred_fallthru
          _
        %v416 = vld [vmem:[%s367] sm:$0xf]
        %v417 = vld [vmem:[%s367 + $0x4] sm:$0xf]
        %v418 = vld [vmem:[%s367 + $0x8] sm:$0xf]
        %v419 = vld [vmem:[%s367 + $0xc] sm:$0xf]
        %v420 = vunpack.c.l.bf16 %v416
        %v421 = vunpack.c.l.bf16 %v417
        %v422 = vunpack.c.l.bf16 %v418
        %v423 = vunpack.c.l.bf16 %v419
        %v424 = vpack.c.bf16 %v421, %v420
        %v425 = vpack.c.bf16 %v423, %v422
        %v426 = vld [vmem:[#allocation7] sm:$0xff]
        %v427 = vld [vmem:[#allocation7 + $0x8] sm:$0xf]
        %v428 = vld [vmem:[#allocation7 + $0xc] sm:$0xff]
        %v429 = vld [vmem:[#allocation7 + $0x14] sm:$0xf]
        %v430 = vld [vmem:[#allocation7 + $0x18] sm:$0xff]
        %v431 = vld [vmem:[#allocation7 + $0x20] sm:$0xf]
        %v432 = vld [vmem:[#allocation7 + $0x24] sm:$0xff]
        %v433 = vld [vmem:[#allocation7 + $0x2c] sm:$0xf]
        %v434 = vld [vmem:[#allocation7 + $0x30] sm:$0xff]
        %v435 = vld [vmem:[#allocation7 + $0x38] sm:$0xf]
        %v436 = vld [vmem:[#allocation7 + $0x3c] sm:$0xff]
        %v437 = vld [vmem:[#allocation7 + $0x44] sm:$0xf]
        %v438 = vld [vmem:[#allocation7 + $0x48] sm:$0xff]
        %v439 = vld [vmem:[#allocation7 + $0x50] sm:$0xf]
        %v440 = vld [vmem:[#allocation7 + $0x54] sm:$0xff]
        %v441 = vld [vmem:[#allocation7 + $0x5c] sm:$0xf]
        %v442 = vld [vmem:[#allocation7 + $0x60] sm:$0xff]
        %v443 = vld [vmem:[#allocation7 + $0x68] sm:$0xf]
        %v444 = vld [vmem:[#allocation7 + $0x6c] sm:$0xff]
        %v445 = vld [vmem:[#allocation7 + $0x74] sm:$0xf]
        %v446 = vld [vmem:[#allocation7 + $0x78] sm:$0xff]
        %v447 = vld [vmem:[#allocation7 + $0x80] sm:$0xf]
        %v448 = vld [vmem:[#allocation7 + $0x84] sm:$0xff]
        %v449 = vld [vmem:[#allocation7 + $0x8c] sm:$0xf]
        %v450 = vld [vmem:[#allocation7 + $0x90] sm:$0xff]
        %v451 = vld [vmem:[#allocation7 + $0x98] sm:$0xf]
        %v452 = vld [vmem:[#allocation7 + $0x9c] sm:$0xff]
        %v453 = vld [vmem:[#allocation7 + $0xa4] sm:$0xf]
        %v454 = vld [vmem:[#allocation7 + $0xa8] sm:$0xff]
        %v455 = vld [vmem:[#allocation7 + $0xb0] sm:$0xf]
        %v456 = vld [vmem:[#allocation7 + $0xb4] sm:$0xff]
        %v457 = vld [vmem:[#allocation7 + $0xbc] sm:$0xf]
        %v458 = vld [vmem:[%s3] sm:$0x7]
        %v460 = vlaneseq
        %v461 = vshrl.u32 %v460, 7
        %v462 = vsub.s32 0, %v461
        %v463 = vrot.slane %v458, %v462
        %v464 = vlaneseq
        %v465 = vshrl.u32 %v464, 7
        %v466 = vsub.s32 1, %v465
        %v467 = vrot.slane %v458, %v466
        %v468 = vlaneseq
        %v469 = vshrl.u32 %v468, 7
        %v470 = vsub.s32 2, %v469
        %v471 = vrot.slane %v458, %v470
        %v507 = vunpack.c.l.b16 %v426
        %v508 = vunpack.c.h.b16 %v426
        %v509 = vunpack.c.l.b16 %v427
        %v510 = vunpack.c.l.b16 %v428
        %v511 = vunpack.c.h.b16 %v428
        %v512 = vunpack.c.l.b16 %v429
        %v513 = vunpack.c.l.b16 %v430
        %v514 = vunpack.c.h.b16 %v430
        %v515 = vunpack.c.l.b16 %v431
        %v516 = vunpack.c.l.b16 %v432
        %v517 = vunpack.c.h.b16 %v432
        %v518 = vunpack.c.l.b16 %v433
        %v519 = vunpack.c.l.b16 %v434
        %v520 = vunpack.c.h.b16 %v434
        %v521 = vunpack.c.l.b16 %v435
        %v522 = vunpack.c.l.b16 %v436
        %v523 = vunpack.c.h.b16 %v436
        %v524 = vunpack.c.l.b16 %v437
        %v525 = vunpack.c.l.b16 %v438
        %v526 = vunpack.c.h.b16 %v438
        %v527 = vunpack.c.l.b16 %v439
        %v528 = vunpack.c.l.b16 %v440
        %v529 = vunpack.c.h.b16 %v440
        %v530 = vunpack.c.l.b16 %v441
        %v531 = vunpack.c.l.b16 %v442
        %v532 = vunpack.c.h.b16 %v442
        %v533 = vunpack.c.l.b16 %v443
        %v534 = vunpack.c.l.b16 %v444
        %v535 = vunpack.c.h.b16 %v444
        %v536 = vunpack.c.l.b16 %v445
        %v537 = vunpack.c.l.b16 %v446
        %v538 = vunpack.c.h.b16 %v446
        %v539 = vunpack.c.l.b16 %v447
        %v540 = vunpack.c.l.b16 %v448
        %v541 = vunpack.c.h.b16 %v448
        %v542 = vunpack.c.l.b16 %v449
        %v543 = vunpack.c.l.b16 %v450
        %v544 = vunpack.c.h.b16 %v450
        %v545 = vunpack.c.l.b16 %v451
        %v546 = vunpack.c.l.b16 %v452
        %v547 = vunpack.c.h.b16 %v452
        %v548 = vunpack.c.l.b16 %v453
        %v549 = vunpack.c.l.b16 %v454
        %v550 = vunpack.c.h.b16 %v454
        %v551 = vunpack.c.l.b16 %v455
        %v552 = vunpack.c.l.b16 %v456
        %v553 = vunpack.c.h.b16 %v456
        %v554 = vunpack.c.l.b16 %v457
        %v555 = vpack.c.b16 %v510, %v507
        %v556 = vpack.c.b16 %v511, %v508
        %v557 = vpack.c.b16 %v512, %v509
        %v558 = vpack.c.b16 %v516, %v513
        %v559 = vpack.c.b16 %v517, %v514
        %v560 = vpack.c.b16 %v518, %v515
        %v561 = vpack.c.b16 %v522, %v519
        %v562 = vpack.c.b16 %v523, %v520
        %v563 = vpack.c.b16 %v524, %v521
        %v564 = vpack.c.b16 %v528, %v525
        %v565 = vpack.c.b16 %v529, %v526
        %v566 = vpack.c.b16 %v530, %v527
        %v567 = vpack.c.b16 %v534, %v531
        %v568 = vpack.c.b16 %v535, %v532
        %v569 = vpack.c.b16 %v536, %v533
        %v570 = vpack.c.b16 %v540, %v537
        %v571 = vpack.c.b16 %v541, %v538
        %v572 = vpack.c.b16 %v542, %v539
        %v573 = vpack.c.b16 %v546, %v543
        %v574 = vpack.c.b16 %v547, %v544
        %v575 = vpack.c.b16 %v548, %v545
        %v576 = vpack.c.b16 %v552, %v549
        %v577 = vpack.c.b16 %v553, %v550
        %v578 = vpack.c.b16 %v554, %v551
        %603 = vmatprep.subr.bf16.mxu0 %v577
        %604 = vmatpush1.bf16.msra.mxu0 %v576
        %605 = vmatprep.subr.bf16.mxu0 %v574
        %606 = vmatpush1.bf16.msra.mxu0 %v573
        %607 = vmatprep.subr.bf16.mxu0 %v571
        %608 = vmatpush1.bf16.msra.mxu0 %v570
        %609 = vmatprep.subr.bf16.mxu0 %v568
        %610 = vmatpush1.bf16.msra.mxu0 %v567
        %611 = vmatprep.subr.bf16.mxu0 %v565
        %612 = vmatpush1.bf16.msra.mxu0 %v564
        %613 = vmatprep.subr.bf16.mxu0 %v562
        %614 = vmatpush1.bf16.msra.mxu0 %v561
        %615 = vmatprep.subr.bf16.mxu0 %v559
        %616 = vmatpush1.bf16.msra.mxu0 %v558
        %617 = vmatprep.subr.bf16.mxu0 %v556
        %618 = vmatpush1.bf16.msra.mxu0 %v555
        %619 = vmatprep.subr.bf16.mxu0 0
        %620 = vmatpush2.bf16.msra.mxu0 0
        %621 = vmatprep.subr.bf16.mxu0 0
        %622 = vmatpush2.bf16.msra.mxu0 0
        %623 = vmatprep.subr.bf16.mxu0 0
        %624 = vmatpush2.bf16.msra.mxu0 0
        %625 = vmatprep.subr.bf16.mxu0 0
        %626 = vmatpush2.bf16.msra.mxu0 0
        %627 = vmatprep.subr.bf16.mxu0 0
        %628 = vmatpush2.bf16.msra.mxu0 0
        %629 = vmatprep.subr.bf16.mxu0 0
        %630 = vmatpush2.bf16.msra.mxu0 0
        %631 = vmatprep.subr.bf16.mxu0 0
        %632 = vmatpush2.bf16.msra.mxu0 0
        %633 = vmatprep.subr.bf16.mxu0 0
        %634 = vmatpush2.bf16.msra.mxu0 0
        %635 = vmatprep.mubr.bf16.mxu0 0
        %636 = vmatmul.mubr.bf16.gmra.mxu0 %v424
        %v637 = vpop.f32.mrf.mxu0
        %v638 = vadd.f32 %v463, %v637
        %v639 = vpop.f32.mrf.mxu0
        %v640 = vadd.f32 %v467, %v639
        %v641 = vpop.f32.mrf.mxu0
        %v642 = vadd.f32 %v463, %v641
        %v643 = vpop.f32.mrf.mxu0
        %v644 = vadd.f32 %v467, %v643
        %645 = vmatprep.mubr.bf16.mxu0 0
        %646 = vmatmul.mubr.bf16.gmra.mxu0 %v425
        %v647 = vpop.f32.mrf.mxu0
        %v648 = vadd.f32 %v463, %v647
        %v649 = vpop.f32.mrf.mxu0
        %v650 = vadd.f32 %v467, %v649
        %v651 = vpop.f32.mrf.mxu0
        %v652 = vadd.f32 %v463, %v651
        %v653 = vpop.f32.mrf.mxu0
        %v654 = vadd.f32 %v467, %v653
        %655 = vdwg.mxu0
        %656 = vmatprep.subr.bf16.mxu0 0
        %657 = vmatpush1.bf16.msra.mxu0 %v578
        %658 = vmatprep.subr.bf16.mxu0 0
        %659 = vmatpush1.bf16.msra.mxu0 %v575
        %660 = vmatprep.subr.bf16.mxu0 0
        %661 = vmatpush1.bf16.msra.mxu0 %v572
        %662 = vmatprep.subr.bf16.mxu0 0
        %663 = vmatpush1.bf16.msra.mxu0 %v569
        %664 = vmatprep.subr.bf16.mxu0 0
        %665 = vmatpush1.bf16.msra.mxu0 %v566
        %666 = vmatprep.subr.bf16.mxu0 0
        %667 = vmatpush1.bf16.msra.mxu0 %v563
        %668 = vmatprep.subr.bf16.mxu0 0
        %669 = vmatpush1.bf16.msra.mxu0 %v560
        %670 = vmatprep.subr.bf16.mxu0 0
        %671 = vmatpush1.bf16.msra.mxu0 %v557
        %672 = vmatprep.subr.bf16.mxu0 0
        %673 = vmatpush2.bf16.msra.mxu0 0
        %674 = vmatprep.subr.bf16.mxu0 0
        %675 = vmatpush2.bf16.msra.mxu0 0
        %676 = vmatprep.subr.bf16.mxu0 0
        %677 = vmatpush2.bf16.msra.mxu0 0
        %678 = vmatprep.subr.bf16.mxu0 0
        %679 = vmatpush2.bf16.msra.mxu0 0
        %680 = vmatprep.subr.bf16.mxu0 0
        %681 = vmatpush2.bf16.msra.mxu0 0
        %682 = vmatprep.subr.bf16.mxu0 0
        %683 = vmatpush2.bf16.msra.mxu0 0
        %684 = vmatprep.subr.bf16.mxu0 0
        %685 = vmatpush2.bf16.msra.mxu0 0
        %686 = vmatprep.subr.bf16.mxu0 0
        %687 = vmatpush2.bf16.msra.mxu0 0
        %688 = vmatprep.mubr.bf16.mxu0 0
        %689 = vmatmul.mubr.bf16.gmra.mxu0 %v424
        %v690 = vpop.f32.mrf.mxu0
        %v691 = vadd.f32 %v471, %v690
        %v692 = vpop.f32.mrf.mxu0
        %v693 = vpop.f32.mrf.mxu0
        %v694 = vadd.f32 %v471, %v693
        %v695 = vpop.f32.mrf.mxu0
        %696 = vmatprep.mubr.bf16.mxu0 0
        %697 = vmatmul.mubr.bf16.gmra.mxu0 %v425
        %v698 = vpop.f32.mrf.mxu0
        %v699 = vadd.f32 %v471, %v698
        %v700 = vpop.f32.mrf.mxu0
        %v701 = vpop.f32.mrf.mxu0
        %v702 = vadd.f32 %v471, %v701
        %v703 = vpop.f32.mrf.mxu0
        %704 = vdwg.mxu0
        %705 = vst [vmem:[#allocation2] sm:$0xff] %v638
        %706 = vst [vmem:[#allocation2 + $0x8] sm:$0xff] %v640
        %707 = vst [vmem:[#allocation2 + $0x10] sm:$0xff] %v691
        %708 = vst [vmem:[#allocation2 + $0x18] sm:$0xff] %v642
        %709 = vst [vmem:[#allocation2 + $0x20] sm:$0xff] %v644
        %710 = vst [vmem:[#allocation2 + $0x28] sm:$0xff] %v694
        %711 = vst [vmem:[#allocation2 + $0x30] sm:$0xff] %v648
        %712 = vst [vmem:[#allocation2 + $0x38] sm:$0xff] %v650
        %713 = vst [vmem:[#allocation2 + $0x40] sm:$0xff] %v699
        %714 = vst [vmem:[#allocation2 + $0x48] sm:$0xff] %v652
        %715 = vst [vmem:[#allocation2 + $0x50] sm:$0xff] %v654
        %716 = vst [vmem:[#allocation2 + $0x58] sm:$0xff] %v702
        %v717 = vld [vmem:[#allocation9] sm:$0xff]
        %v718 = vld [vmem:[#allocation9 + $0x8] sm:$0xf]
        %v719 = vld [vmem:[#allocation9 + $0xc] sm:$0xff]
        %v720 = vld [vmem:[#allocation9 + $0x14] sm:$0xf]
        %v721 = vld [vmem:[#allocation9 + $0x18] sm:$0xff]
        %v722 = vld [vmem:[#allocation9 + $0x20] sm:$0xf]
        %v723 = vld [vmem:[#allocation9 + $0x24] sm:$0xff]
        %v724 = vld [vmem:[#allocation9 + $0x2c] sm:$0xf]
        %v725 = vld [vmem:[#allocation9 + $0x30] sm:$0xff]
        %v726 = vld [vmem:[#allocation9 + $0x38] sm:$0xf]
        %v727 = vld [vmem:[#allocation9 + $0x3c] sm:$0xff]
        %v728 = vld [vmem:[#allocation9 + $0x44] sm:$0xf]
        %v729 = vld [vmem:[#allocation9 + $0x48] sm:$0xff]
        %v730 = vld [vmem:[#allocation9 + $0x50] sm:$0xf]
        %v731 = vld [vmem:[#allocation9 + $0x54] sm:$0xff]
        %v732 = vld [vmem:[#allocation9 + $0x5c] sm:$0xf]
        %v733 = vld [vmem:[#allocation9 + $0x60] sm:$0xff]
        %v734 = vld [vmem:[#allocation9 + $0x68] sm:$0xf]
        %v735 = vld [vmem:[#allocation9 + $0x6c] sm:$0xff]
        %v736 = vld [vmem:[#allocation9 + $0x74] sm:$0xf]
        %v737 = vld [vmem:[#allocation9 + $0x78] sm:$0xff]
        %v738 = vld [vmem:[#allocation9 + $0x80] sm:$0xf]
        %v739 = vld [vmem:[#allocation9 + $0x84] sm:$0xff]
        %v740 = vld [vmem:[#allocation9 + $0x8c] sm:$0xf]
        %v741 = vld [vmem:[#allocation9 + $0x90] sm:$0xff]
        %v742 = vld [vmem:[#allocation9 + $0x98] sm:$0xf]
        %v743 = vld [vmem:[#allocation9 + $0x9c] sm:$0xff]
        %v744 = vld [vmem:[#allocation9 + $0xa4] sm:$0xf]
        %v745 = vld [vmem:[#allocation9 + $0xa8] sm:$0xff]
        %v746 = vld [vmem:[#allocation9 + $0xb0] sm:$0xf]
        %v747 = vld [vmem:[#allocation9 + $0xb4] sm:$0xff]
        %v748 = vld [vmem:[#allocation9 + $0xbc] sm:$0xf]
        %v749 = vld [vmem:[%s4] sm:$0x1]
        %v751 = vlaneseq
        %v752 = vshrl.u32 %v751, 7
        %v753 = vsub.s32 0, %v752
        %v754 = vrot.slane %v749, %v753
        %v756 = vld [vmem:[#allocation3] sm:$0xff]
        %v757 = vld [vmem:[#allocation2] sm:$0xff]
        %v758 = vld [vmem:[#allocation2 + $0x8] sm:$0xff]
        %v759 = vld [vmem:[#allocation2 + $0x10] sm:$0xff]
        %v760 = vpack.c.bf16 %v756, %v756
        %v793 = vunpack.c.l.b16 %v717
        %v794 = vunpack.c.h.b16 %v717
        %v795 = vunpack.c.l.b16 %v718
        %v796 = vunpack.c.l.b16 %v719
        %v797 = vunpack.c.h.b16 %v719
        %v798 = vunpack.c.l.b16 %v720
        %v799 = vunpack.c.l.b16 %v721
        %v800 = vunpack.c.h.b16 %v721
        %v801 = vunpack.c.l.b16 %v722
        %v802 = vunpack.c.l.b16 %v723
        %v803 = vunpack.c.h.b16 %v723
        %v804 = vunpack.c.l.b16 %v724
        %v805 = vunpack.c.l.b16 %v725
        %v806 = vunpack.c.h.b16 %v725
        %v807 = vunpack.c.l.b16 %v726
        %v808 = vunpack.c.l.b16 %v727
        %v809 = vunpack.c.h.b16 %v727
        %v810 = vunpack.c.l.b16 %v728
        %v811 = vunpack.c.l.b16 %v729
        %v812 = vunpack.c.h.b16 %v729
        %v813 = vunpack.c.l.b16 %v730
        %v814 = vunpack.c.l.b16 %v731
        %v815 = vunpack.c.h.b16 %v731
        %v816 = vunpack.c.l.b16 %v732
        %v817 = vunpack.c.l.b16 %v733
        %v818 = vunpack.c.h.b16 %v733
        %v819 = vunpack.c.l.b16 %v734
        %v820 = vunpack.c.l.b16 %v735
        %v821 = vunpack.c.h.b16 %v735
        %v822 = vunpack.c.l.b16 %v736
        %v823 = vunpack.c.l.b16 %v737
        %v824 = vunpack.c.h.b16 %v737
        %v825 = vunpack.c.l.b16 %v738
        %v826 = vunpack.c.l.b16 %v739
        %v827 = vunpack.c.h.b16 %v739
        %v828 = vunpack.c.l.b16 %v740
        %v829 = vunpack.c.l.b16 %v741
        %v830 = vunpack.c.h.b16 %v741
        %v831 = vunpack.c.l.b16 %v742
        %v832 = vunpack.c.l.b16 %v743
        %v833 = vunpack.c.h.b16 %v743
        %v834 = vunpack.c.l.b16 %v744
        %v835 = vunpack.c.l.b16 %v745
        %v836 = vunpack.c.h.b16 %v745
        %v837 = vunpack.c.l.b16 %v746
        %v838 = vunpack.c.l.b16 %v747
        %v839 = vunpack.c.h.b16 %v747
        %v840 = vunpack.c.l.b16 %v748
        %v841 = vpack.c.b16 %v796, %v793
        %v842 = vpack.c.b16 %v797, %v794
        %v843 = vpack.c.b16 %v798, %v795
        %v844 = vpack.c.b16 %v802, %v799
        %v845 = vpack.c.b16 %v803, %v800
        %v846 = vpack.c.b16 %v804, %v801
        %v847 = vpack.c.b16 %v808, %v805
        %v848 = vpack.c.b16 %v809, %v806
        %v849 = vpack.c.b16 %v810, %v807
        %v850 = vpack.c.b16 %v814, %v811
        %v851 = vpack.c.b16 %v815, %v812
        %v852 = vpack.c.b16 %v816, %v813
        %v853 = vpack.c.b16 %v820, %v817
        %v854 = vpack.c.b16 %v821, %v818
        %v855 = vpack.c.b16 %v822, %v819
        %v856 = vpack.c.b16 %v826, %v823
        %v857 = vpack.c.b16 %v827, %v824
        %v858 = vpack.c.b16 %v828, %v825
        %v859 = vpack.c.b16 %v832, %v829
        %v860 = vpack.c.b16 %v833, %v830
        %v861 = vpack.c.b16 %v834, %v831
        %v862 = vpack.c.b16 %v838, %v835
        %v863 = vpack.c.b16 %v839, %v836
        %v864 = vpack.c.b16 %v840, %v837
        %889 = vmatprep.subr.bf16.mxu0 %v863
        %890 = vmatpush1.bf16.msra.mxu0 %v862
        %891 = vmatprep.subr.bf16.mxu0 %v860
        %892 = vmatpush1.bf16.msra.mxu0 %v859
        %893 = vmatprep.subr.bf16.mxu0 %v857
        %894 = vmatpush1.bf16.msra.mxu0 %v856
        %895 = vmatprep.subr.bf16.mxu0 %v854
        %896 = vmatpush1.bf16.msra.mxu0 %v853
        %897 = vmatprep.subr.bf16.mxu0 %v851
        %898 = vmatpush1.bf16.msra.mxu0 %v850
        %899 = vmatprep.subr.bf16.mxu0 %v848
        %900 = vmatpush1.bf16.msra.mxu0 %v847
        %901 = vmatprep.subr.bf16.mxu0 %v845
        %902 = vmatpush1.bf16.msra.mxu0 %v844
        %903 = vmatprep.subr.bf16.mxu0 %v842
        %904 = vmatpush1.bf16.msra.mxu0 %v841
        %905 = vmatprep.subr.bf16.mxu0 0
        %906 = vmatpush2.bf16.msra.mxu0 0
        %907 = vmatprep.subr.bf16.mxu0 0
        %908 = vmatpush2.bf16.msra.mxu0 0
        %909 = vmatprep.subr.bf16.mxu0 0
        %910 = vmatpush2.bf16.msra.mxu0 0
        %911 = vmatprep.subr.bf16.mxu0 0
        %912 = vmatpush2.bf16.msra.mxu0 0
        %913 = vmatprep.subr.bf16.mxu0 0
        %914 = vmatpush2.bf16.msra.mxu0 0
        %915 = vmatprep.subr.bf16.mxu0 0
        %916 = vmatpush2.bf16.msra.mxu0 0
        %917 = vmatprep.subr.bf16.mxu0 0
        %918 = vmatpush2.bf16.msra.mxu0 0
        %919 = vmatprep.subr.bf16.mxu0 0
        %920 = vmatpush2.bf16.msra.mxu0 0
        %921 = vmatprep.mubr.bf16.mxu0 0
        %922 = vmatmul.mubr.bf16.gmra.mxu0 %v760
        %v923 = vpop.f32.mrf.mxu0
        %v924 = vadd.f32 0.0, %v923
        %v925 = vpop.f32.mrf.mxu0
        %v926 = vadd.f32 0.0, %v925
        %v927 = vpop.f32.mrf.mxu0
        %v928 = vpop.f32.mrf.mxu0
        %929 = vdwg.mxu0
        %930 = vmatprep.subr.bf16.mxu0 0
        %931 = vmatpush1.bf16.msra.mxu0 %v864
        %932 = vmatprep.subr.bf16.mxu0 0
        %933 = vmatpush1.bf16.msra.mxu0 %v861
        %934 = vmatprep.subr.bf16.mxu0 0
        %935 = vmatpush1.bf16.msra.mxu0 %v858
        %936 = vmatprep.subr.bf16.mxu0 0
        %937 = vmatpush1.bf16.msra.mxu0 %v855
        %938 = vmatprep.subr.bf16.mxu0 0
        %939 = vmatpush1.bf16.msra.mxu0 %v852
        %940 = vmatprep.subr.bf16.mxu0 0
        %941 = vmatpush1.bf16.msra.mxu0 %v849
        %942 = vmatprep.subr.bf16.mxu0 0
        %943 = vmatpush1.bf16.msra.mxu0 %v846
        %944 = vmatprep.subr.bf16.mxu0 0
        %945 = vmatpush1.bf16.msra.mxu0 %v843
        %946 = vmatprep.subr.bf16.mxu0 0
        %947 = vmatpush2.bf16.msra.mxu0 0
        %948 = vmatprep.subr.bf16.mxu0 0
        %949 = vmatpush2.bf16.msra.mxu0 0
        %950 = vmatprep.subr.bf16.mxu0 0
        %951 = vmatpush2.bf16.msra.mxu0 0
        %952 = vmatprep.subr.bf16.mxu0 0
        %953 = vmatpush2.bf16.msra.mxu0 0
        %954 = vmatprep.subr.bf16.mxu0 0
        %955 = vmatpush2.bf16.msra.mxu0 0
        %956 = vmatprep.subr.bf16.mxu0 0
        %957 = vmatpush2.bf16.msra.mxu0 0
        %958 = vmatprep.subr.bf16.mxu0 0
        %959 = vmatpush2.bf16.msra.mxu0 0
        %960 = vmatprep.subr.bf16.mxu0 0
        %961 = vmatpush2.bf16.msra.mxu0 0
        %962 = vmatprep.mubr.bf16.mxu0 0
        %963 = vmatmul.mubr.bf16.gmra.mxu0 %v760
        %v964 = vpop.f32.mrf.mxu0
        %v965 = vadd.f32 0.0, %v964
        %v966 = vpop.f32.mrf.mxu0
        %v967 = vpop.f32.mrf.mxu0
        %v968 = vpop.f32.mrf.mxu0
        %969 = vdwg.mxu0
        %v970 = vadd.f32 %v757, %v924
        %v971 = vmul.f32 %v970, 0.5
        %v972 = vtanh.pop %v971
        %v973 = vadd.f32 %v972, 1.0
        %v974 = vmul.f32 %v973, 0.5
        %v975 = vadd.f32 %v758, %v926
        %v976 = vmul.f32 %v975, 0.5
        %v977 = vtanh.pop %v976
        %v978 = vadd.f32 %v977, 1.0
        %v979 = vmul.f32 %v978, 0.5
        %v980 = vadd.f32 %v965, %v754
        %v981 = vmul.f32 %v974, %v980
        %v982 = vadd.f32 %v759, %v981
        %v983 = vtanh.pop %v982
        %v984 = vsub.f32 1.0, %v979
        %v985 = vmul.f32 %v984, %v983
        %v986 = vmul.f32 %v979, %v756
        %v987 = vadd.f32 %v985, %v986
        %s988 = smul.u32 %s33, 4
        %p989 = scmp.lt.s32.totalorder %s988, 9
        %s990 = scalar_select %p989, 1, 0
        %v991 = vstv %s990
        %vm992 = vcmp.eq.s32.totalorder %v991, 1
        %v993 = vsel %vm992, %v987, %v756
        %s994 = scalar_lea.vmem [#allocation2], 24
        %v995 = vld [vmem:[%s994] sm:$0xff]
        %v996 = vld [vmem:[%s994 + $0x8] sm:$0xff]
        %v997 = vld [vmem:[%s994 + $0x10] sm:$0xff]
        %v998 = vpack.c.bf16 %v993, %v993
        %999 = vmatprep.subr.bf16.mxu0 %v863
        %1000 = vmatpush1.bf16.msra.mxu0 %v862
        %1001 = vmatprep.subr.bf16.mxu0 %v860
        %1002 = vmatpush1.bf16.msra.mxu0 %v859
        %1003 = vmatprep.subr.bf16.mxu0 %v857
        %1004 = vmatpush1.bf16.msra.mxu0 %v856
        %1005 = vmatprep.subr.bf16.mxu0 %v854
        %1006 = vmatpush1.bf16.msra.mxu0 %v853
        %1007 = vmatprep.subr.bf16.mxu0 %v851
        %1008 = vmatpush1.bf16.msra.mxu0 %v850
        %1009 = vmatprep.subr.bf16.mxu0 %v848
        %1010 = vmatpush1.bf16.msra.mxu0 %v847
        %1011 = vmatprep.subr.bf16.mxu0 %v845
        %1012 = vmatpush1.bf16.msra.mxu0 %v844
        %1013 = vmatprep.subr.bf16.mxu0 %v842
        %1014 = vmatpush1.bf16.msra.mxu0 %v841
        %1015 = vmatprep.subr.bf16.mxu0 0
        %1016 = vmatpush2.bf16.msra.mxu0 0
        %1017 = vmatprep.subr.bf16.mxu0 0
        %1018 = vmatpush2.bf16.msra.mxu0 0
        %1019 = vmatprep.subr.bf16.mxu0 0
        %1020 = vmatpush2.bf16.msra.mxu0 0
        %1021 = vmatprep.subr.bf16.mxu0 0
        %1022 = vmatpush2.bf16.msra.mxu0 0
        %1023 = vmatprep.subr.bf16.mxu0 0
        %1024 = vmatpush2.bf16.msra.mxu0 0
        %1025 = vmatprep.subr.bf16.mxu0 0
        %1026 = vmatpush2.bf16.msra.mxu0 0
        %1027 = vmatprep.subr.bf16.mxu0 0
        %1028 = vmatpush2.bf16.msra.mxu0 0
        %1029 = vmatprep.subr.bf16.mxu0 0
        %1030 = vmatpush2.bf16.msra.mxu0 0
        %1031 = vmatprep.mubr.bf16.mxu0 0
        %1032 = vmatmul.mubr.bf16.gmra.mxu0 %v998
        %v1033 = vpop.f32.mrf.mxu0
        %v1034 = vadd.f32 0.0, %v1033
        %v1035 = vpop.f32.mrf.mxu0
        %v1036 = vadd.f32 0.0, %v1035
        %v1037 = vpop.f32.mrf.mxu0
        %v1038 = vpop.f32.mrf.mxu0
        %1039 = vdwg.mxu0
        %1040 = vmatprep.subr.bf16.mxu0 0
        %1041 = vmatpush1.bf16.msra.mxu0 %v864
        %1042 = vmatprep.subr.bf16.mxu0 0
        %1043 = vmatpush1.bf16.msra.mxu0 %v861
        %1044 = vmatprep.subr.bf16.mxu0 0
        %1045 = vmatpush1.bf16.msra.mxu0 %v858
        %1046 = vmatprep.subr.bf16.mxu0 0
        %1047 = vmatpush1.bf16.msra.mxu0 %v855
        %1048 = vmatprep.subr.bf16.mxu0 0
        %1049 = vmatpush1.bf16.msra.mxu0 %v852
        %1050 = vmatprep.subr.bf16.mxu0 0
        %1051 = vmatpush1.bf16.msra.mxu0 %v849
        %1052 = vmatprep.subr.bf16.mxu0 0
        %1053 = vmatpush1.bf16.msra.mxu0 %v846
        %1054 = vmatprep.subr.bf16.mxu0 0
        %1055 = vmatpush1.bf16.msra.mxu0 %v843
        %1056 = vmatprep.subr.bf16.mxu0 0
        %1057 = vmatpush2.bf16.msra.mxu0 0
        %1058 = vmatprep.subr.bf16.mxu0 0
        %1059 = vmatpush2.bf16.msra.mxu0 0
        %1060 = vmatprep.subr.bf16.mxu0 0
        %1061 = vmatpush2.bf16.msra.mxu0 0
        %1062 = vmatprep.subr.bf16.mxu0 0
        %1063 = vmatpush2.bf16.msra.mxu0 0
        %1064 = vmatprep.subr.bf16.mxu0 0
        %1065 = vmatpush2.bf16.msra.mxu0 0
        %1066 = vmatprep.subr.bf16.mxu0 0
        %1067 = vmatpush2.bf16.msra.mxu0 0
        %1068 = vmatprep.subr.bf16.mxu0 0
        %1069 = vmatpush2.bf16.msra.mxu0 0
        %1070 = vmatprep.subr.bf16.mxu0 0
        %1071 = vmatpush2.bf16.msra.mxu0 0
        %1072 = vmatprep.mubr.bf16.mxu0 0
        %1073 = vmatmul.mubr.bf16.gmra.mxu0 %v998
        %v1074 = vpop.f32.mrf.mxu0
        %v1075 = vadd.f32 0.0, %v1074
        %v1076 = vpop.f32.mrf.mxu0
        %v1077 = vpop.f32.mrf.mxu0
        %v1078 = vpop.f32.mrf.mxu0
        %1079 = vdwg.mxu0
        %v1080 = vadd.f32 %v995, %v1034
        %v1081 = vmul.f32 %v1080, 0.5
        %v1082 = vtanh.pop %v1081
        %v1083 = vadd.f32 %v1082, 1.0
        %v1084 = vmul.f32 %v1083, 0.5
        %v1085 = vadd.f32 %v996, %v1036
        %v1086 = vmul.f32 %v1085, 0.5
        %v1087 = vtanh.pop %v1086
        %v1088 = vadd.f32 %v1087, 1.0
        %v1089 = vmul.f32 %v1088, 0.5
        %v1090 = vadd.f32 %v1075, %v754
        %v1091 = vmul.f32 %v1084, %v1090
        %v1092 = vadd.f32 %v997, %v1091
        %v1093 = vtanh.pop %v1092
        %v1094 = vsub.f32 1.0, %v1089
        %v1095 = vmul.f32 %v1094, %v1093
        %v1096 = vmul.f32 %v1089, %v993
        %v1097 = vadd.f32 %v1095, %v1096
        %s1098 = sadd.s32 %s988, 1
        %p1099 = scmp.lt.s32.totalorder %s1098, 9
        %s1100 = scalar_select %p1099, 1, 0
        %v1101 = vstv %s1100
        %vm1102 = vcmp.eq.s32.totalorder %v1101, 1
        %v1103 = vsel %vm1102, %v1097, %v993
        %s1104 = scalar_lea.vmem [#allocation2], 48
        %v1105 = vld [vmem:[%s1104] sm:$0xff]
        %v1106 = vld [vmem:[%s1104 + $0x8] sm:$0xff]
        %v1107 = vld [vmem:[%s1104 + $0x10] sm:$0xff]
        %v1108 = vpack.c.bf16 %v1103, %v1103
        %1109 = vmatprep.subr.bf16.mxu0 %v863
        %1110 = vmatpush1.bf16.msra.mxu0 %v862
        %1111 = vmatprep.subr.bf16.mxu0 %v860
        %1112 = vmatpush1.bf16.msra.mxu0 %v859
        %1113 = vmatprep.subr.bf16.mxu0 %v857
        %1114 = vmatpush1.bf16.msra.mxu0 %v856
        %1115 = vmatprep.subr.bf16.mxu0 %v854
        %1116 = vmatpush1.bf16.msra.mxu0 %v853
        %1117 = vmatprep.subr.bf16.mxu0 %v851
        %1118 = vmatpush1.bf16.msra.mxu0 %v850
        %1119 = vmatprep.subr.bf16.mxu0 %v848
        %1120 = vmatpush1.bf16.msra.mxu0 %v847
        %1121 = vmatprep.subr.bf16.mxu0 %v845
        %1122 = vmatpush1.bf16.msra.mxu0 %v844
        %1123 = vmatprep.subr.bf16.mxu0 %v842
        %1124 = vmatpush1.bf16.msra.mxu0 %v841
        %1125 = vmatprep.subr.bf16.mxu0 0
        %1126 = vmatpush2.bf16.msra.mxu0 0
        %1127 = vmatprep.subr.bf16.mxu0 0
        %1128 = vmatpush2.bf16.msra.mxu0 0
        %1129 = vmatprep.subr.bf16.mxu0 0
        %1130 = vmatpush2.bf16.msra.mxu0 0
        %1131 = vmatprep.subr.bf16.mxu0 0
        %1132 = vmatpush2.bf16.msra.mxu0 0
        %1133 = vmatprep.subr.bf16.mxu0 0
        %1134 = vmatpush2.bf16.msra.mxu0 0
        %1135 = vmatprep.subr.bf16.mxu0 0
        %1136 = vmatpush2.bf16.msra.mxu0 0
        %1137 = vmatprep.subr.bf16.mxu0 0
        %1138 = vmatpush2.bf16.msra.mxu0 0
        %1139 = vmatprep.subr.bf16.mxu0 0
        %1140 = vmatpush2.bf16.msra.mxu0 0
        %1141 = vmatprep.mubr.bf16.mxu0 0
        %1142 = vmatmul.mubr.bf16.gmra.mxu0 %v1108
        %v1143 = vpop.f32.mrf.mxu0
        %v1144 = vadd.f32 0.0, %v1143
        %v1145 = vpop.f32.mrf.mxu0
        %v1146 = vadd.f32 0.0, %v1145
        %v1147 = vpop.f32.mrf.mxu0
        %v1148 = vpop.f32.mrf.mxu0
        %1149 = vdwg.mxu0
        %1150 = vmatprep.subr.bf16.mxu0 0
        %1151 = vmatpush1.bf16.msra.mxu0 %v864
        %1152 = vmatprep.subr.bf16.mxu0 0
        %1153 = vmatpush1.bf16.msra.mxu0 %v861
        %1154 = vmatprep.subr.bf16.mxu0 0
        %1155 = vmatpush1.bf16.msra.mxu0 %v858
        %1156 = vmatprep.subr.bf16.mxu0 0
        %1157 = vmatpush1.bf16.msra.mxu0 %v855
        %1158 = vmatprep.subr.bf16.mxu0 0
        %1159 = vmatpush1.bf16.msra.mxu0 %v852
        %1160 = vmatprep.subr.bf16.mxu0 0
        %1161 = vmatpush1.bf16.msra.mxu0 %v849
        %1162 = vmatprep.subr.bf16.mxu0 0
        %1163 = vmatpush1.bf16.msra.mxu0 %v846
        %1164 = vmatprep.subr.bf16.mxu0 0
        %1165 = vmatpush1.bf16.msra.mxu0 %v843
        %1166 = vmatprep.subr.bf16.mxu0 0
        %1167 = vmatpush2.bf16.msra.mxu0 0
        %1168 = vmatprep.subr.bf16.mxu0 0
        %1169 = vmatpush2.bf16.msra.mxu0 0
        %1170 = vmatprep.subr.bf16.mxu0 0
        %1171 = vmatpush2.bf16.msra.mxu0 0
        %1172 = vmatprep.subr.bf16.mxu0 0
        %1173 = vmatpush2.bf16.msra.mxu0 0
        %1174 = vmatprep.subr.bf16.mxu0 0
        %1175 = vmatpush2.bf16.msra.mxu0 0
        %1176 = vmatprep.subr.bf16.mxu0 0
        %1177 = vmatpush2.bf16.msra.mxu0 0
        %1178 = vmatprep.subr.bf16.mxu0 0
        %1179 = vmatpush2.bf16.msra.mxu0 0
        %1180 = vmatprep.subr.bf16.mxu0 0
        %1181 = vmatpush2.bf16.msra.mxu0 0
        %1182 = vmatprep.mubr.bf16.mxu0 0
        %1183 = vmatmul.mubr.bf16.gmra.mxu0 %v1108
        %v1184 = vpop.f32.mrf.mxu0
        %v1185 = vadd.f32 0.0, %v1184
        %v1186 = vpop.f32.mrf.mxu0
        %v1187 = vpop.f32.mrf.mxu0
        %v1188 = vpop.f32.mrf.mxu0
        %1189 = vdwg.mxu0
        %v1190 = vadd.f32 %v1105, %v1144
        %v1191 = vmul.f32 %v1190, 0.5
        %v1192 = vtanh.pop %v1191
        %v1193 = vadd.f32 %v1192, 1.0
        %v1194 = vmul.f32 %v1193, 0.5
        %v1195 = vadd.f32 %v1106, %v1146
        %v1196 = vmul.f32 %v1195, 0.5
        %v1197 = vtanh.pop %v1196
        %v1198 = vadd.f32 %v1197, 1.0
        %v1199 = vmul.f32 %v1198, 0.5
        %v1200 = vadd.f32 %v1185, %v754
        %v1201 = vmul.f32 %v1194, %v1200
        %v1202 = vadd.f32 %v1107, %v1201
        %v1203 = vtanh.pop %v1202
        %v1204 = vsub.f32 1.0, %v1199
        %v1205 = vmul.f32 %v1204, %v1203
        %v1206 = vmul.f32 %v1199, %v1103
        %v1207 = vadd.f32 %v1205, %v1206
        %s1208 = sadd.s32 %s988, 2
        %p1209 = scmp.lt.s32.totalorder %s1208, 9
        %s1210 = scalar_select %p1209, 1, 0
        %v1211 = vstv %s1210
        %vm1212 = vcmp.eq.s32.totalorder %v1211, 1
        %v1213 = vsel %vm1212, %v1207, %v1103
        %s1214 = scalar_lea.vmem [#allocation2], 72
        %v1215 = vld [vmem:[%s1214] sm:$0xff]
        %v1216 = vld [vmem:[%s1214 + $0x8] sm:$0xff]
        %v1217 = vld [vmem:[%s1214 + $0x10] sm:$0xff]
        %v1218 = vpack.c.bf16 %v1213, %v1213
        %1219 = vmatprep.subr.bf16.mxu0 %v863
        %1220 = vmatpush1.bf16.msra.mxu0 %v862
        %1221 = vmatprep.subr.bf16.mxu0 %v860
        %1222 = vmatpush1.bf16.msra.mxu0 %v859
        %1223 = vmatprep.subr.bf16.mxu0 %v857
        %1224 = vmatpush1.bf16.msra.mxu0 %v856
        %1225 = vmatprep.subr.bf16.mxu0 %v854
        %1226 = vmatpush1.bf16.msra.mxu0 %v853
        %1227 = vmatprep.subr.bf16.mxu0 %v851
        %1228 = vmatpush1.bf16.msra.mxu0 %v850
        %1229 = vmatprep.subr.bf16.mxu0 %v848
        %1230 = vmatpush1.bf16.msra.mxu0 %v847
        %1231 = vmatprep.subr.bf16.mxu0 %v845
        %1232 = vmatpush1.bf16.msra.mxu0 %v844
        %1233 = vmatprep.subr.bf16.mxu0 %v842
        %1234 = vmatpush1.bf16.msra.mxu0 %v841
        %1235 = vmatprep.subr.bf16.mxu0 0
        %1236 = vmatpush2.bf16.msra.mxu0 0
        %1237 = vmatprep.subr.bf16.mxu0 0
        %1238 = vmatpush2.bf16.msra.mxu0 0
        %1239 = vmatprep.subr.bf16.mxu0 0
        %1240 = vmatpush2.bf16.msra.mxu0 0
        %1241 = vmatprep.subr.bf16.mxu0 0
        %1242 = vmatpush2.bf16.msra.mxu0 0
        %1243 = vmatprep.subr.bf16.mxu0 0
        %1244 = vmatpush2.bf16.msra.mxu0 0
        %1245 = vmatprep.subr.bf16.mxu0 0
        %1246 = vmatpush2.bf16.msra.mxu0 0
        %1247 = vmatprep.subr.bf16.mxu0 0
        %1248 = vmatpush2.bf16.msra.mxu0 0
        %1249 = vmatprep.subr.bf16.mxu0 0
        %1250 = vmatpush2.bf16.msra.mxu0 0
        %1251 = vmatprep.mubr.bf16.mxu0 0
        %1252 = vmatmul.mubr.bf16.gmra.mxu0 %v1218
        %v1253 = vpop.f32.mrf.mxu0
        %v1254 = vadd.f32 0.0, %v1253
        %v1255 = vpop.f32.mrf.mxu0
        %v1256 = vadd.f32 0.0, %v1255
        %v1257 = vpop.f32.mrf.mxu0
        %v1258 = vpop.f32.mrf.mxu0
        %1259 = vdwg.mxu0
        %1260 = vmatprep.subr.bf16.mxu0 0
        %1261 = vmatpush1.bf16.msra.mxu0 %v864
        %1262 = vmatprep.subr.bf16.mxu0 0
        %1263 = vmatpush1.bf16.msra.mxu0 %v861
        %1264 = vmatprep.subr.bf16.mxu0 0
        %1265 = vmatpush1.bf16.msra.mxu0 %v858
        %1266 = vmatprep.subr.bf16.mxu0 0
        %1267 = vmatpush1.bf16.msra.mxu0 %v855
        %1268 = vmatprep.subr.bf16.mxu0 0
        %1269 = vmatpush1.bf16.msra.mxu0 %v852
        %1270 = vmatprep.subr.bf16.mxu0 0
        %1271 = vmatpush1.bf16.msra.mxu0 %v849
        %1272 = vmatprep.subr.bf16.mxu0 0
        %1273 = vmatpush1.bf16.msra.mxu0 %v846
        %1274 = vmatprep.subr.bf16.mxu0 0
        %1275 = vmatpush1.bf16.msra.mxu0 %v843
        %1276 = vmatprep.subr.bf16.mxu0 0
        %1277 = vmatpush2.bf16.msra.mxu0 0
        %1278 = vmatprep.subr.bf16.mxu0 0
        %1279 = vmatpush2.bf16.msra.mxu0 0
        %1280 = vmatprep.subr.bf16.mxu0 0
        %1281 = vmatpush2.bf16.msra.mxu0 0
        %1282 = vmatprep.subr.bf16.mxu0 0
        %1283 = vmatpush2.bf16.msra.mxu0 0
        %1284 = vmatprep.subr.bf16.mxu0 0
        %1285 = vmatpush2.bf16.msra.mxu0 0
        %1286 = vmatprep.subr.bf16.mxu0 0
        %1287 = vmatpush2.bf16.msra.mxu0 0
        %1288 = vmatprep.subr.bf16.mxu0 0
        %1289 = vmatpush2.bf16.msra.mxu0 0
        %1290 = vmatprep.subr.bf16.mxu0 0
        %1291 = vmatpush2.bf16.msra.mxu0 0
        %1292 = vmatprep.mubr.bf16.mxu0 0
        %1293 = vmatmul.mubr.bf16.gmra.mxu0 %v1218
        %v1294 = vpop.f32.mrf.mxu0
        %v1295 = vadd.f32 0.0, %v1294
        %v1296 = vpop.f32.mrf.mxu0
        %v1297 = vpop.f32.mrf.mxu0
        %v1298 = vpop.f32.mrf.mxu0
        %1299 = vdwg.mxu0
        %v1300 = vadd.f32 %v1215, %v1254
        %v1301 = vmul.f32 %v1300, 0.5
        %v1302 = vtanh.pop %v1301
        %v1303 = vadd.f32 %v1302, 1.0
        %v1304 = vmul.f32 %v1303, 0.5
        %v1305 = vadd.f32 %v1216, %v1256
        %v1306 = vmul.f32 %v1305, 0.5
        %v1307 = vtanh.pop %v1306
        %v1308 = vadd.f32 %v1307, 1.0
        %v1309 = vmul.f32 %v1308, 0.5
        %v1310 = vadd.f32 %v1295, %v754
        %v1311 = vmul.f32 %v1304, %v1310
        %v1312 = vadd.f32 %v1217, %v1311
        %v1313 = vtanh.pop %v1312
        %v1314 = vsub.f32 1.0, %v1309
        %v1315 = vmul.f32 %v1314, %v1313
        %v1316 = vmul.f32 %v1309, %v1213
        %v1317 = vadd.f32 %v1315, %v1316
        %s1318 = sadd.s32 %s988, 3
        %p1319 = scmp.lt.s32.totalorder %s1318, 9
        %s1320 = scalar_select %p1319, 1, 0
        %v1321 = vstv %s1320
        %vm1322 = vcmp.eq.s32.totalorder %v1321, 1
        %v1323 = vsel %vm1322, %v1317, %v1213
        %1324 = vst [vmem:[#allocation3] sm:$0xff] %v1323
        %p1325 = scmp.eq.s32.totalorder %s33, 2
        // Predicated region
        $region69: #{tpu_custom_call.1} parent=47 // pred_check
          %p1326 = pneg %p1325
        $region70: #{tpu_custom_call.1} parent=47 // pred_check_branch
          %1328 = sbr.rel (%p1326) target = $region72
        $region71: #{tpu_custom_call.1} parent=47 // pred_region
          %1329 = vst [vmem:[#allocation15] sm:$0xff] %v1323
          %v1330 = vpack.c.bf16 %v1323, %v1323
          %v1331 = vld [vmem:[#allocation10] sm:$0xf]
          %v1332 = vld [vmem:[#allocation10 + $0x4] sm:$0xf]
          %v1333 = vld [vmem:[#allocation10 + $0x8] sm:$0xf]
          %v1334 = vld [vmem:[#allocation10 + $0xc] sm:$0xf]
          %v1335 = vld [vmem:[#allocation10 + $0x10] sm:$0xf]
          %v1336 = vld [vmem:[#allocation10 + $0x14] sm:$0xf]
          %v1337 = vld [vmem:[#allocation10 + $0x18] sm:$0xf]
          %v1338 = vld [vmem:[#allocation10 + $0x1c] sm:$0xf]
          %v1339 = vld [vmem:[#allocation10 + $0x20] sm:$0xf]
          %v1340 = vld [vmem:[#allocation10 + $0x24] sm:$0xf]
          %v1341 = vld [vmem:[#allocation10 + $0x28] sm:$0xf]
          %v1342 = vld [vmem:[#allocation10 + $0x2c] sm:$0xf]
          %v1343 = vld [vmem:[#allocation10 + $0x30] sm:$0xf]
          %v1344 = vld [vmem:[#allocation10 + $0x34] sm:$0xf]
          %v1345 = vld [vmem:[#allocation10 + $0x38] sm:$0xf]
          %v1346 = vld [vmem:[#allocation10 + $0x3c] sm:$0xf]
          %v1347 = vld [vmem:[%s6] sm:$0x1]
          %v1349 = vlaneseq
          %v1350 = vshrl.u32 %v1349, 7
          %v1351 = vsub.s32 0, %v1350
          %v1352 = vrot.slane %v1347, %v1351
          %v1370 = vunpack.c.l.b16 %v1331
          %v1371 = vunpack.c.l.b16 %v1332
          %v1372 = vunpack.c.l.b16 %v1333
          %v1373 = vunpack.c.l.b16 %v1334
          %v1374 = vunpack.c.l.b16 %v1335
          %v1375 = vunpack.c.l.b16 %v1336
          %v1376 = vunpack.c.l.b16 %v1337
          %v1377 = vunpack.c.l.b16 %v1338
          %v1378 = vunpack.c.l.b16 %v1339
          %v1379 = vunpack.c.l.b16 %v1340
          %v1380 = vunpack.c.l.b16 %v1341
          %v1381 = vunpack.c.l.b16 %v1342
          %v1382 = vunpack.c.l.b16 %v1343
          %v1383 = vunpack.c.l.b16 %v1344
          %v1384 = vunpack.c.l.b16 %v1345
          %v1385 = vunpack.c.l.b16 %v1346
          %v1386 = vpack.c.b16 %v1371, %v1370
          %v1387 = vpack.c.b16 %v1373, %v1372
          %v1388 = vpack.c.b16 %v1375, %v1374
          %v1389 = vpack.c.b16 %v1377, %v1376
          %v1390 = vpack.c.b16 %v1379, %v1378
          %v1391 = vpack.c.b16 %v1381, %v1380
          %v1392 = vpack.c.b16 %v1383, %v1382
          %v1393 = vpack.c.b16 %v1385, %v1384
          %1402 = vmatprep.subr.bf16.mxu0 0
          %1403 = vmatpush1.bf16.msra.mxu0 %v1393
          %1404 = vmatprep.subr.bf16.mxu0 0
          %1405 = vmatpush1.bf16.msra.mxu0 %v1392
          %1406 = vmatprep.subr.bf16.mxu0 0
          %1407 = vmatpush1.bf16.msra.mxu0 %v1391
          %1408 = vmatprep.subr.bf16.mxu0 0
          %1409 = vmatpush1.bf16.msra.mxu0 %v1390
          %1410 = vmatprep.subr.bf16.mxu0 0
          %1411 = vmatpush1.bf16.msra.mxu0 %v1389
          %1412 = vmatprep.subr.bf16.mxu0 0
          %1413 = vmatpush1.bf16.msra.mxu0 %v1388
          %1414 = vmatprep.subr.bf16.mxu0 0
          %1415 = vmatpush1.bf16.msra.mxu0 %v1387
          %1416 = vmatprep.subr.bf16.mxu0 0
          %1417 = vmatpush1.bf16.msra.mxu0 %v1386
          %1418 = vmatprep.subr.bf16.mxu0 0
          %1419 = vmatpush2.bf16.msra.mxu0 0
          %1420 = vmatprep.subr.bf16.mxu0 0
          %1421 = vmatpush2.bf16.msra.mxu0 0
          %1422 = vmatprep.subr.bf16.mxu0 0
          %1423 = vmatpush2.bf16.msra.mxu0 0
          %1424 = vmatprep.subr.bf16.mxu0 0
          %1425 = vmatpush2.bf16.msra.mxu0 0
          %1426 = vmatprep.subr.bf16.mxu0 0
          %1427 = vmatpush2.bf16.msra.mxu0 0
          %1428 = vmatprep.subr.bf16.mxu0 0
          %1429 = vmatpush2.bf16.msra.mxu0 0
          %1430 = vmatprep.subr.bf16.mxu0 0
          %1431 = vmatpush2.bf16.msra.mxu0 0
          %1432 = vmatprep.subr.bf16.mxu0 0
          %1433 = vmatpush2.bf16.msra.mxu0 0
          %1434 = vmatprep.mubr.bf16.mxu0 0
          %1435 = vmatmul.mubr.bf16.gmra.mxu0 %v1330
          %v1436 = vpop.f32.mrf.mxu0
          %v1437 = vadd.f32 %v1352, %v1436
          %v1438 = vpop.f32.mrf.mxu0
          %v1439 = vpop.f32.mrf.mxu0
          %v1440 = vpop.f32.mrf.mxu0
          %1441 = vdwg.mxu0
          %1442 = vst [vmem:[#allocation13] sm:$0xff] %v1437
          %v1443 = vlaneseq
          %v1444 = vand.u32 %v1443, 127
          %vm1445 = vcmp.lt.s32.totalorder %v1444, 4
          %v1446 = vsel %vm1445, %v1437, -1e+30
          %1447 = vmax.xlane.f32.xlu0 %v1446
          %v1448 = vpop.xlane.xlu0 %1447
          %v1449 = vsub.f32 %v1446, %v1448
          %v1450 = vmul.f32 %v1449, 1.442695
          %v1451 = vpow.pop %v1450
          %1452 = vadd.xlane.f32.xlu0 %v1451
          %v1453 = vpop.xlane.xlu0 %1452
          %v1454 = vrcp.pop %v1453
          %v1455 = vmul.f32 %v1451, %v1454
          %1456 = vst [vmem:[#allocation12] sm:$0xff] %v1455
        $region72: #{tpu_custom_call.1} parent=47 // pred_fallthru
          _
        // Predicated region
        $region73: #{tpu_custom_call.1} parent=47 // pred_check
          %p1457 = pneg %p212
        $region74: #{tpu_custom_call.1} parent=47 // pred_check_branch
          %1459 = sbr.rel (%p1457) target = $region76
        $region75: #{tpu_custom_call.1} parent=47 // pred_region
          %s1461 = ssub.s32 128, 128
          %1462 = vsyncadd [#allocation6], %s1461
          %s1463 = smul.addr %s32, 128
          %s1464 = scalar_lea.hbm %s7, %s1463
          %s1466 = sshll.u32 [#allocation12], 4
          %s1467 = int_to_ptr.vmem [resolvable:$true] %s1466
          %1469 = dma.vmem_to_hbm [thread:$0]  %s1467, 128, %s1464, [#allocation6]
        $region76: #{tpu_custom_call.1} parent=47 // pred_fallthru
          _
        // Predicated region
        $region77: #{tpu_custom_call.1} parent=47 // pred_check
          %p1470 = pneg %p238
        $region78: #{tpu_custom_call.1} parent=47 // pred_check_branch
          %1472 = sbr.rel (%p1470) target = $region80
        $region79: #{tpu_custom_call.1} parent=47 // pred_region
          %s1474 = ssub.s32 128, 128
          %1475 = vsyncadd [#allocation14], %s1474
          %s1476 = smul.addr %s32, 128
          %s1477 = scalar_lea.hbm %s8, %s1476
          %s1479 = sshll.u32 [#allocation13], 4
          %s1480 = int_to_ptr.vmem [resolvable:$true] %s1479
          %1482 = dma.vmem_to_hbm [thread:$0]  %s1480, 128, %s1477, [#allocation14]
        $region80: #{tpu_custom_call.1} parent=47 // pred_fallthru
          _
        // Predicated region
        $region81: #{tpu_custom_call.1} parent=47 // pred_check
          %p1483 = pneg %p264
        $region82: #{tpu_custom_call.1} parent=47 // pred_check_branch
          %1485 = sbr.rel (%p1483) target = $region84
        $region83: #{tpu_custom_call.1} parent=47 // pred_region
          %s1487 = ssub.s32 128, 128
          %1488 = vsyncadd [#allocation14], %s1487
          %s1489 = smul.addr %s32, 128
          %s1490 = scalar_lea.hbm %s9, %s1489
          %s1492 = sshll.u32 [#allocation15], 4
          %s1493 = int_to_ptr.vmem [resolvable:$true] %s1492
          %1495 = dma.vmem_to_hbm [thread:$0]  %s1493, 128, %s1490, [#allocation14]
        $region84: #{tpu_custom_call.1} parent=47 // pred_fallthru
          _
        // Predicated region
        $region85: #{tpu_custom_call.1} parent=47 // pred_check
          %p1496 = pneg %p212
        $region86: #{tpu_custom_call.1} parent=47 // pred_check_branch
          %1498 = sbr.rel (%p1496) target = $region88
        $region87: #{tpu_custom_call.1} parent=47 // pred_region
          %1499 = dma.done [#allocation6], 128
        $region88: #{tpu_custom_call.1} parent=47 // pred_fallthru
          _
        // Predicated region
        $region89: #{tpu_custom_call.1} parent=47 // pred_check
          %p1500 = pneg %p238
        $region90: #{tpu_custom_call.1} parent=47 // pred_check_branch
          %1502 = sbr.rel (%p1500) target = $region92
        $region91: #{tpu_custom_call.1} parent=47 // pred_region
          %1503 = dma.done [#allocation14], 128
        $region92: #{tpu_custom_call.1} parent=47 // pred_fallthru
          _
        // Predicated region
        $region93: #{tpu_custom_call.1} parent=47 // pred_check
          %p1504 = pneg %p264
        $region94: #{tpu_custom_call.1} parent=47 // pred_check_branch
          %1506 = sbr.rel (%p1504) target = $region96
        $region95: #{tpu_custom_call.1} parent=47 // pred_region
          %1507 = dma.done [#allocation14], 128
        $region96: #{tpu_custom_call.1} parent=47 // pred_fallthru
          _
      $region48: #{tpu_custom_call.1} parent=5 // pred_fallthru
        _
      %p1508 = scmp.le.s32.totalorder 2, %s23
      // Predicated region
      $region97: #{tpu_custom_call.1} parent=5 // pred_check
        %p1509 = pneg %p1508
      $region98: #{tpu_custom_call.1} parent=5 // pred_check_branch
        %1511 = sbr.rel (%p1509) target = $region100
      $region99: #{tpu_custom_call.1} parent=5 // pred_region
        %s1512 = ssub.s32 %s23, 2
      $region100: #{tpu_custom_call.1} parent=5 // pred_fallthru
        _
    $region6: #{tpu_custom_call.1} parent=1 // loop_footer
      %s27 = sadd.s32 1, %s23
    $region7: #{tpu_custom_call.1} parent=1 // loop_footer_branch
      %22 = sbr.rel target = $region3
    $region8: #{tpu_custom_call.1} parent=1 // loop_exit
      _
    %1513 = vsyncpa [#allocation5], 1
    %s1514 = scalar_lea.sflag [#allocation5], 1
    %1515 = vsyncpa %s1514, 1
    %1516 = vsyncpa [#allocation8], 1
    %1517 = vsyncpa [#allocation11], 1
    %1518 = vsyncpa [#allocation6], 1
    %s1519 = scalar_lea.sflag [#allocation6], 1
    %1520 = vsyncpa %s1519, 1
    %1521 = vsyncpa [#allocation14], 1

</llo_original>
